<compile_context>
chip_gen: v6e
topology: v6e:2x2x1
jax: 0.10.0
libtpu: 0.0.40
codegen_flags: <defaults>
</compile_context>

<pallas_src>
import numpy as np

import jax
import jax.numpy as jnp
from jax.experimental import pallas as pl
from jax.experimental.pallas import tpu as pltpu


# ----------------------------- Pallas call A ---------------------------------
def _stage1_kernel(w_ref, b_ref, col_ref, o_ref):
    # w_ref: (Cout, K) bf16, b_ref: (Cout, 1) f32, col_ref: (K, tn) bf16
    acc = jnp.dot(w_ref[...], col_ref[...], preferred_element_type=jnp.float32)
    acc = acc + b_ref[...]
    o_ref[...] = jnp.maximum(acc, 0.0).astype(o_ref.dtype)


def stage1_conv(col1, w1, b1):
    """Stage-1 conv+bias+relu as relu(W^T @ col^T + b).

    col1: (M, K) f32 im2col rows; w1: (K, Cout); b1: (Cout,).
    Returns Y1^T of shape (Cout, M) in bf16 (lane-dense along M).
    """
    M, K = col1.shape
    Cout = w1.shape[1]
    col_t = col1.T.astype(jnp.bfloat16)                 # (K, M)
    w_t = w1.T.astype(jnp.bfloat16)                     # (Cout, K)
    b_col = b1.reshape(Cout, 1).astype(jnp.float32)

    tn = M
    for cand in (512, 256, 128):
        if M % cand == 0:
            tn = cand
            break

    return pl.pallas_call(
        _stage1_kernel,
        out_shape=jax.ShapeDtypeStruct((Cout, M), jnp.bfloat16),
        grid=(M // tn,),
        in_specs=[
            pl.BlockSpec((Cout, K), lambda j: (0, 0)),
            pl.BlockSpec((Cout, 1), lambda j: (0, 0)),
            pl.BlockSpec((K, tn), lambda j: (0, j)),
        ],
        out_specs=pl.BlockSpec((Cout, tn), lambda j: (0, j)),
        compiler_params=pltpu.CompilerParams(
            dimension_semantics=("parallel",)),
    )(w_t, b_col, col_t)


# ----------------------------- Pallas call B ---------------------------------
def _stages2to5_kernel(col2_ref, w2_ref, b2_ref,
                       g3_ref, w3_ref, b3_ref,
                       g4_ref, w4_ref, b4_ref,
                       g5_ref, w5_ref, b5_ref,
                       o2_ref, o3_ref, o4_ref, o5_ref):
    # ---- stage 2: wrapper-provided im2col, fused matmul + bias + relu ----
    acc2 = jnp.dot(col2_ref[0], w2_ref[...], preferred_element_type=jnp.float32)
    y2 = jnp.maximum(acc2 + b2_ref[...], 0.0)           # (M2, C2) f32
    o2_ref[0] = y2
    x = y2.astype(jnp.bfloat16)

    # ---- stages 3..5: in-kernel im2col via constant 0/1 gather matmuls ----
    # gathered = G[t] @ X selects the 3x3/stride-2 tap rows (zero rows encode
    # the conv padding); everything stays VMEM-resident between stages.
    def conv_stage(x_bf16, g_ref, w_ref, b_ref, o_ref):
        m_out = g_ref.shape[1]
        cout = w_ref.shape[2]
        acc = jnp.zeros((m_out, cout), jnp.float32)
        for t in range(9):                               # static unroll, 3x3 taps
            gathered = jnp.dot(g_ref[t], x_bf16,
                               preferred_element_type=jnp.float32)
            acc = acc + jnp.dot(gathered.astype(jnp.bfloat16), w_ref[t],
                                preferred_element_type=jnp.float32)
        y = jnp.maximum(acc + b_ref[...], 0.0)
        o_ref[0] = y
        return y.astype(jnp.bfloat16)

    x = conv_stage(x, g3_ref, w3_ref, b3_ref, o3_ref)
    x = conv_stage(x, g4_ref, w4_ref, b4_ref, o4_ref)
    conv_stage(x, g5_ref, w5_ref, b5_ref, o5_ref)


def stages2to5_fused(col2, ws, bs, gs, out_dims):
    """Fused stages 2..5.  col2: (B, M2, 9*C1) bf16.  Returns 4 f32 features."""
    B, M2, K2 = col2.shape
    w2, w3, w4, w5 = ws
    b2, b3, b4, b5 = bs
    g3, g4, g5 = gs

    def full(a):
        return pl.BlockSpec(a.shape, lambda b: (0,) * a.ndim)

    in_specs = [
        pl.BlockSpec((1, M2, K2), lambda b: (b, 0, 0)),
        full(w2), full(b2),
        full(g3), full(w3), full(b3),
        full(g4), full(w4), full(b4),
        full(g5), full(w5), full(b5),
    ]
    out_specs = tuple(
        pl.BlockSpec((1, m, c), lambda b: (b, 0, 0)) for (m, c) in out_dims)
    out_shape = tuple(
        jax.ShapeDtypeStruct((B, m, c), jnp.float32) for (m, c) in out_dims)

    return pl.pallas_call(
        _stages2to5_kernel,
        out_shape=out_shape,
        grid=(B,),
        in_specs=in_specs,
        out_specs=out_specs,
        compiler_params=pltpu.CompilerParams(
            dimension_semantics=("parallel",)),
    )(col2, w2, b2, g3, w3, b3, g4, w4, b4, g5, w5, b5)


# ------------------------------ conv glue -------------------------------------
def _im2col_3x3_s2(x_nhwc):
    """3x3 / stride-2 / pad-1 patch extraction: (B,H,W,C) -> (B, Ho*Wo, 9*C)."""
    B, H, W, C = x_nhwc.shape
    Ho, Wo = H // 2, W // 2
    xp = jnp.pad(x_nhwc, ((0, 0), (1, 1), (1, 1), (0, 0)))
    cols = []
    for kh in range(3):
        for kw in range(3):
            patch = jax.lax.slice(
                xp, (0, kh, kw, 0),
                (B, kh + 2 * (Ho - 1) + 1, kw + 2 * (Wo - 1) + 1, C),
                (1, 2, 2, 1))
            cols.append(patch)
    col = jnp.concatenate(cols, axis=-1)     # (B, Ho, Wo, 9*C), order (kh, kw, cin)
    return col.reshape(B, Ho * Wo, 9 * C)


def _gather_mats_3x3_s2(H, W):
    """Constant 0/1 matrices G[t] (Ho*Wo, H*W) implementing im2col tap t."""
    Ho, Wo = H // 2, W // 2
    G = np.zeros((9, Ho * Wo, H * W), np.float32)
    for kh in range(3):
        for kw in range(3):
            t = kh * 3 + kw
            for ho in range(Ho):
                ih = 2 * ho + kh - 1
                if ih < 0 or ih >= H:
                    continue
                for wo in range(Wo):
                    iw = 2 * wo + kw - 1
                    if iw < 0 or iw >= W:
                        continue
                    G[t, ho * Wo + wo, ih * W + iw] = 1.0
    return jnp.asarray(G, jnp.bfloat16)


# ------------------------------ encoder ---------------------------------------
# Synthetic stand-in for get_encoder(..., depth=5): out_channels per stage.
OUT_CHANNELS = (3, 8, 16, 32, 64, 128)


def init_encoder_params(key):
    params = []
    cin = OUT_CHANNELS[0]
    for cout in OUT_CHANNELS[1:]:
        kw_key, kb_key, key = jax.random.split(key, 3)
        fan_in = 3 * 3 * cin
        w = jax.random.normal(kw_key, (3, 3, cin, cout), jnp.float32) * (
            1.0 / jnp.sqrt(fan_in))
        b = 0.01 * jax.random.normal(kb_key, (cout,), jnp.float32)
        params.append((w, b))
        cin = cout
    return params


@jax.jit
def cnn_encoder_forward(x_nchw, params):
    """Mirror of CNN_Encoder.forward: stages 2..5 as (B, H_s*W_s, C_s) f32."""
    x = jnp.transpose(x_nchw, (0, 2, 3, 1)).astype(jnp.float32)   # NCHW -> NHWC
    B, H, W, _ = x.shape
    assert H % 32 == 0 and W % 32 == 0, "spatial dims must survive 5 halvings"
    (w1, b1), (w2, b2), (w3, b3), (w4, b4), (w5, b5) = params
    c1, c2, c3, c4, c5 = (w1.shape[-1], w2.shape[-1], w3.shape[-1],
                          w4.shape[-1], w5.shape[-1])

    # ---------------- stage 1 (Pallas call A) ---------------------------------
    col1 = _im2col_3x3_s2(x)                               # (B, M1, 9*Cin)
    M1 = col1.shape[1]
    y1t = stage1_conv(col1.reshape(B * M1, -1), w1.reshape(-1, c1), b1)
    y1 = y1t.T.reshape(B, H // 2, W // 2, c1)              # bf16 NHWC

    # ---------------- stages 2..5 (Pallas call B, fused) ----------------------
    col2 = _im2col_3x3_s2(y1).astype(jnp.bfloat16)         # (B, M2, 9*c1)
    g3 = _gather_mats_3x3_s2(H // 4, W // 4)
    g4 = _gather_mats_3x3_s2(H // 8, W // 8)
    g5 = _gather_mats_3x3_s2(H // 16, W // 16)

    out_dims = (((H // 4) * (W // 4), c2),
                ((H // 8) * (W // 8), c3),
                ((H // 16) * (W // 16), c4),
                ((H // 32) * (W // 32), c5))
    outs = stages2to5_fused(
        col2,
        ws=(w2.reshape(-1, c2).astype(jnp.bfloat16),
            w3.reshape(9, c2, c3).astype(jnp.bfloat16),
            w4.reshape(9, c3, c4).astype(jnp.bfloat16),
            w5.reshape(9, c4, c5).astype(jnp.bfloat16)),
        bs=(b2.reshape(1, c2).astype(jnp.float32),
            b3.reshape(1, c3).astype(jnp.float32),
            b4.reshape(1, c4).astype(jnp.float32),
            b5.reshape(1, c5).astype(jnp.float32)),
        gs=(g3, g4, g5),
        out_dims=out_dims)
    # == NCHW flatten(2).transpose(-1, -2) of each stage's feature map.
    return list(outs)


# ------------------------------ reference -------------------------------------
def _forward_ref(x_nchw, params):
    """XLA reference mirroring the kernel's bf16 quantization of inputs/weights
    and bf16 chaining of intermediates (accumulation stays f32)."""
    x = jnp.transpose(x_nchw, (0, 2, 3, 1))
    h = x.astype(jnp.bfloat16).astype(jnp.float32)
    feats = []
    for (w, b) in params:
        wq = w.astype(jnp.bfloat16).astype(jnp.float32)
        y = jax.lax.conv_general_dilated(
            h, wq, window_strides=(2, 2), padding=((1, 1), (1, 1)),
            dimension_numbers=("NHWC", "HWIO", "NHWC"))
        y = jnp.maximum(y + b, 0.0)
        feats.append(y)
        h = y.astype(jnp.bfloat16).astype(jnp.float32)
    outs = []
    for m in feats[1:]:   # stages 2..5
        Bs, Hs, Ws, Cs = m.shape
        outs.append(m.reshape(Bs, Hs * Ws, Cs))
    return outs


# --------------------------------- main ---------------------------------------
if __name__ == "__main__":
    key = jax.random.PRNGKey(0)
    x = jax.random.normal(key, (2, 3, 64, 64), jnp.float32)  # NCHW, in_channels=3
    params = init_encoder_params(jax.random.PRNGKey(42))

    outs = cnn_encoder_forward(x, params)
    outs = [jax.block_until_ready(o) for o in outs]

    refs = _forward_ref(x, params)
    expected = [(2, 16 * 16, 16), (2, 8 * 8, 32), (2, 4 * 4, 64), (2, 2 * 2, 128)]
    assert len(outs) == 4
    for o, r, s in zip(outs, refs, expected):
        assert o.shape == s, (o.shape, s)
        err = float(jnp.max(jnp.abs(o - r.astype(jnp.float32))))
        assert jnp.allclose(o, r, atol=2e-2, rtol=2e-2), err

    print("KERNEL_OK")
</pallas_src>

<mosaic_0001>
module attributes {stable_mosaic.version = 11 : i64} {
  func.func @_stage1_kernel(%arg0: i32, %arg1: memref<8x27xbf16, #tpu.memory_space<vmem>>, %arg2: memref<8x1xf32, #tpu.memory_space<vmem>>, %arg3: memref<27x512xbf16, #tpu.memory_space<vmem>>, %arg4: memref<8x512xbf16, #tpu.memory_space<vmem>>) attributes {dimension_semantics = [#tpu.dimension_semantics<parallel>], iteration_bounds = array<i64: 4>, scalar_prefetch = 0 : i64, scratch_operands = 0 : i64, tpu.core_type = #tpu.core_type<tc>, window_params = [{pipeline_mode = #tpu.pipeline_mode<synchronous>, transform_indices = @transform_0, window_bounds = array<i64: 8, 27>}, {pipeline_mode = #tpu.pipeline_mode<synchronous>, transform_indices = @transform_1, window_bounds = array<i64: 8, 1>}, {transform_indices = @transform_2, window_bounds = array<i64: 27, 512>}, {transform_indices = @transform_3, window_bounds = array<i64: 8, 512>}]} {
    %c0 = arith.constant 0 : index
    %c0_0 = arith.constant 0 : index
    %0 = vector.load %arg1[%c0, %c0_0] : memref<8x27xbf16, #tpu.memory_space<vmem>>, vector<8x27xbf16>
    %c0_1 = arith.constant 0 : index
    %c0_2 = arith.constant 0 : index
    %1 = vector.load %arg3[%c0_1, %c0_2] : memref<27x512xbf16, #tpu.memory_space<vmem>>, vector<27x512xbf16>
    %cst = arith.constant dense<0.000000e+00> : vector<8x512xf32>
    %2 = tpu.matmul %0, %1, %cst {dimension_numbers = #tpu.dot_dimension_numbers<[1], [0], [0], [1], [0, 0, 1, 1], [], []>} : vector<8x27xbf16>, vector<27x512xbf16>, vector<8x512xf32> -> vector<8x512xf32>
    %c0_3 = arith.constant 0 : index
    %c0_4 = arith.constant 0 : index
    %3 = vector.load %arg2[%c0_3, %c0_4] : memref<8x1xf32, #tpu.memory_space<vmem>>, vector<8x1xf32>
    %4 = vector.broadcast %3 : vector<8x1xf32> to vector<8x512xf32>
    %5 = arith.addf %2, %4 : vector<8x512xf32>
    %cst_5 = arith.constant 0.000000e+00 : f32
    %6 = vector.broadcast %cst_5 : f32 to vector<8x512xf32>
    %7 = arith.maximumf %5, %6 : vector<8x512xf32>
    %8 = arith.truncf %7 : vector<8x512xf32> to vector<8x512xbf16>
    %c0_6 = arith.constant 0 : index
    %c0_7 = arith.constant 0 : index
    %9 = vector.load %arg4[%c0_6, %c0_7] : memref<8x512xbf16, #tpu.memory_space<vmem>>, vector<8x512xbf16>
    tpu.vector_store %arg4[%c0_6, %c0_7], %8 {strides = array<i32>} : memref<8x512xbf16, #tpu.memory_space<vmem>>, vector<8x512xbf16>,
    return
  }
  func.func @transform_0(%arg0: i32) -> (i32, i32) {
    %c0_i32 = arith.constant 0 : i32
    %c0_i32_0 = arith.constant 0 : i32
    %c0_i32_1 = arith.constant 0 : i32
    return %c0_i32, %c0_i32_0 : i32, i32
  }
  func.func @transform_1(%arg0: i32) -> (i32, i32) {
    %c0_i32 = arith.constant 0 : i32
    %c0_i32_0 = arith.constant 0 : i32
    %c0_i32_1 = arith.constant 0 : i32
    return %c0_i32, %c0_i32_0 : i32, i32
  }
  func.func @transform_2(%arg0: i32) -> (i32, i32) {
    %c0_i32 = arith.constant 0 : i32
    %c0_i32_0 = arith.constant 0 : i32
    return %c0_i32, %arg0 : i32, i32
  }
  func.func @transform_3(%arg0: i32) -> (i32, i32) {
    %c0_i32 = arith.constant 0 : i32
    %c0_i32_0 = arith.constant 0 : i32
    return %c0_i32, %arg0 : i32, i32
  }
}

module attributes {stable_mosaic.version = 11 : i64} {
  func.func @_stages2to5_kernel(%arg0: i32, %arg1: memref<1x256x72xbf16, #tpu.memory_space<vmem>>, %arg2: memref<72x16xbf16, #tpu.memory_space<vmem>>, %arg3: memref<1x16xf32, #tpu.memory_space<vmem>>, %arg4: memref<9x64x256xbf16, #tpu.memory_space<vmem>>, %arg5: memref<9x16x32xbf16, #tpu.memory_space<vmem>>, %arg6: memref<1x32xf32, #tpu.memory_space<vmem>>, %arg7: memref<9x16x64xbf16, #tpu.memory_space<vmem>>, %arg8: memref<9x32x64xbf16, #tpu.memory_space<vmem>>, %arg9: memref<1x64xf32, #tpu.memory_space<vmem>>, %arg10: memref<9x4x16xbf16, #tpu.memory_space<vmem>>, %arg11: memref<9x64x128xbf16, #tpu.memory_space<vmem>>, %arg12: memref<1x128xf32, #tpu.memory_space<vmem>>, %arg13: memref<1x256x16xf32, #tpu.memory_space<vmem>>, %arg14: memref<1x64x32xf32, #tpu.memory_space<vmem>>, %arg15: memref<1x16x64xf32, #tpu.memory_space<vmem>>, %arg16: memref<1x4x128xf32, #tpu.memory_space<vmem>>) attributes {dimension_semantics = [#tpu.dimension_semantics<parallel>], iteration_bounds = array<i64: 2>, scalar_prefetch = 0 : i64, scratch_operands = 0 : i64, tpu.core_type = #tpu.core_type<tc>, window_params = [{transform_indices = @transform_0, window_bounds = array<i64: 1, 256, 72>}, {pipeline_mode = #tpu.pipeline_mode<synchronous>, transform_indices = @transform_1, window_bounds = array<i64: 72, 16>}, {pipeline_mode = #tpu.pipeline_mode<synchronous>, transform_indices = @transform_2, window_bounds = array<i64: 1, 16>}, {pipeline_mode = #tpu.pipeline_mode<synchronous>, transform_indices = @transform_3, window_bounds = array<i64: 9, 64, 256>}, {pipeline_mode = #tpu.pipeline_mode<synchronous>, transform_indices = @transform_4, window_bounds = array<i64: 9, 16, 32>}, {pipeline_mode = #tpu.pipeline_mode<synchronous>, transform_indices = @transform_5, window_bounds = array<i64: 1, 32>}, {pipeline_mode = #tpu.pipeline_mode<synchronous>, transform_indices = @transform_6, window_bounds = array<i64: 9, 16, 64>}, {pipeline_mode = #tpu.pipeline_mode<synchronous>, transform_indices = @transform_7, window_bounds = array<i64: 9, 32, 64>}, {pipeline_mode = #tpu.pipeline_mode<synchronous>, transform_indices = @transform_8, window_bounds = array<i64: 1, 64>}, {pipeline_mode = #tpu.pipeline_mode<synchronous>, transform_indices = @transform_9, window_bounds = array<i64: 9, 4, 16>}, {pipeline_mode = #tpu.pipeline_mode<synchronous>, transform_indices = @transform_10, window_bounds = array<i64: 9, 64, 128>}, {pipeline_mode = #tpu.pipeline_mode<synchronous>, transform_indices = @transform_11, window_bounds = array<i64: 1, 128>}, {transform_indices = @transform_12, window_bounds = array<i64: 1, 256, 16>}, {transform_indices = @transform_13, window_bounds = array<i64: 1, 64, 32>}, {transform_indices = @transform_14, window_bounds = array<i64: 1, 16, 64>}, {transform_indices = @transform_15, window_bounds = array<i64: 1, 4, 128>}]} {
    %c0 = arith.constant 0 : index
    %c0_0 = arith.constant 0 : index
    %c0_1 = arith.constant 0 : index
    %0 = vector.load %arg1[%c0, %c0_0, %c0_1] : memref<1x256x72xbf16, #tpu.memory_space<vmem>>, vector<1x256x72xbf16>
    %1 = vector.shape_cast %0 : vector<1x256x72xbf16> to vector<256x72xbf16>
    %c0_2 = arith.constant 0 : index
    %c0_3 = arith.constant 0 : index
    %2 = vector.load %arg2[%c0_2, %c0_3] : memref<72x16xbf16, #tpu.memory_space<vmem>>, vector<72x16xbf16>
    %cst = arith.constant dense<0.000000e+00> : vector<256x16xf32>
    %3 = tpu.matmul %1, %2, %cst {dimension_numbers = #tpu.dot_dimension_numbers<[1], [0], [0], [1], [0, 0, 1, 1], [], []>} : vector<256x72xbf16>, vector<72x16xbf16>, vector<256x16xf32> -> vector<256x16xf32>
    %c0_4 = arith.constant 0 : index
    %c0_5 = arith.constant 0 : index
    %4 = vector.load %arg3[%c0_4, %c0_5] : memref<1x16xf32, #tpu.memory_space<vmem>>, vector<1x16xf32>
    %5 = vector.broadcast %4 : vector<1x16xf32> to vector<256x16xf32>
    %6 = arith.addf %3, %5 : vector<256x16xf32>
    %cst_6 = arith.constant 0.000000e+00 : f32
    %7 = vector.broadcast %cst_6 : f32 to vector<256x16xf32>
    %8 = arith.maximumf %6, %7 : vector<256x16xf32>
    %c0_7 = arith.constant 0 : index
    %c0_8 = arith.constant 0 : index
    %c0_9 = arith.constant 0 : index
    %9 = vector.load %arg13[%c0_7, %c0_8, %c0_9] : memref<1x256x16xf32, #tpu.memory_space<vmem>>, vector<1x256x16xf32>
    %10 = vector.shape_cast %9 : vector<1x256x16xf32> to vector<256x16xf32>
    %11 = vector.shape_cast %8 : vector<256x16xf32> to vector<1x256x16xf32>
    tpu.vector_store %arg13[%c0_7, %c0_8, %c0_9], %11 {strides = array<i32>} : memref<1x256x16xf32, #tpu.memory_space<vmem>>, vector<1x256x16xf32>,
    %12 = arith.truncf %8 : vector<256x16xf32> to vector<256x16xbf16>
    %cst_10 = arith.constant 0.000000e+00 : f32
    %13 = vector.broadcast %cst_10 : f32 to vector<64x32xf32>
    %c0_11 = arith.constant 0 : index
    %c0_12 = arith.constant 0 : index
    %c0_13 = arith.constant 0 : index
    %14 = vector.load %arg4[%c0_11, %c0_12, %c0_13] : memref<9x64x256xbf16, #tpu.memory_space<vmem>>, vector<1x64x256xbf16>
    %15 = vector.shape_cast %14 : vector<1x64x256xbf16> to vector<64x256xbf16>
    %cst_14 = arith.constant dense<0.000000e+00> : vector<64x16xf32>
    %16 = tpu.matmul %15, %12, %cst_14 {dimension_numbers = #tpu.dot_dimension_numbers<[1], [0], [0], [1], [0, 0, 1, 1], [], []>} : vector<64x256xbf16>, vector<256x16xbf16>, vector<64x16xf32> -> vector<64x16xf32>
    %17 = arith.truncf %16 : vector<64x16xf32> to vector<64x16xbf16>
    %c0_15 = arith.constant 0 : index
    %c0_16 = arith.constant 0 : index
    %c0_17 = arith.constant 0 : index
    %18 = vector.load %arg5[%c0_15, %c0_16, %c0_17] : memref<9x16x32xbf16, #tpu.memory_space<vmem>>, vector<1x16x32xbf16>
    %19 = vector.shape_cast %18 : vector<1x16x32xbf16> to vector<16x32xbf16>
    %cst_18 = arith.constant dense<0.000000e+00> : vector<64x32xf32>
    %20 = tpu.matmul %17, %19, %cst_18 {dimension_numbers = #tpu.dot_dimension_numbers<[1], [0], [0], [1], [0, 0, 1, 1], [], []>} : vector<64x16xbf16>, vector<16x32xbf16>, vector<64x32xf32> -> vector<64x32xf32>
    %21 = arith.addf %13, %20 : vector<64x32xf32>
    %c1 = arith.constant 1 : index
    %c0_19 = arith.constant 0 : index
    %c0_20 = arith.constant 0 : index
    %22 = vector.load %arg4[%c1, %c0_19, %c0_20] : memref<9x64x256xbf16, #tpu.memory_space<vmem>>, vector<1x64x256xbf16>
    %23 = vector.shape_cast %22 : vector<1x64x256xbf16> to vector<64x256xbf16>
    %cst_21 = arith.constant dense<0.000000e+00> : vector<64x16xf32>
    %24 = tpu.matmul %23, %12, %cst_21 {dimension_numbers = #tpu.dot_dimension_numbers<[1], [0], [0], [1], [0, 0, 1, 1], [], []>} : vector<64x256xbf16>, vector<256x16xbf16>, vector<64x16xf32> -> vector<64x16xf32>
    %25 = arith.truncf %24 : vector<64x16xf32> to vector<64x16xbf16>
    %c1_22 = arith.constant 1 : index
    %c0_23 = arith.constant 0 : index
    %c0_24 = arith.constant 0 : index
    %26 = vector.load %arg5[%c1_22, %c0_23, %c0_24] : memref<9x16x32xbf16, #tpu.memory_space<vmem>>, vector<1x16x32xbf16>
    %27 = vector.shape_cast %26 : vector<1x16x32xbf16> to vector<16x32xbf16>
    %cst_25 = arith.constant dense<0.000000e+00> : vector<64x32xf32>
    %28 = tpu.matmul %25, %27, %cst_25 {dimension_numbers = #tpu.dot_dimension_numbers<[1], [0], [0], [1], [0, 0, 1, 1], [], []>} : vector<64x16xbf16>, vector<16x32xbf16>, vector<64x32xf32> -> vector<64x32xf32>
    %29 = arith.addf %21, %28 : vector<64x32xf32>
    %c2 = arith.constant 2 : index
    %c0_26 = arith.constant 0 : index
    %c0_27 = arith.constant 0 : index
    %30 = vector.load %arg4[%c2, %c0_26, %c0_27] : memref<9x64x256xbf16, #tpu.memory_space<vmem>>, vector<1x64x256xbf16>
    %31 = vector.shape_cast %30 : vector<1x64x256xbf16> to vector<64x256xbf16>
    %cst_28 = arith.constant dense<0.000000e+00> : vector<64x16xf32>
    %32 = tpu.matmul %31, %12, %cst_28 {dimension_numbers = #tpu.dot_dimension_numbers<[1], [0], [0], [1], [0, 0, 1, 1], [], []>} : vector<64x256xbf16>, vector<256x16xbf16>, vector<64x16xf32> -> vector<64x16xf32>
    %33 = arith.truncf %32 : vector<64x16xf32> to vector<64x16xbf16>
    %c2_29 = arith.constant 2 : index
    %c0_30 = arith.constant 0 : index
    %c0_31 = arith.constant 0 : index
    %34 = vector.load %arg5[%c2_29, %c0_30, %c0_31] : memref<9x16x32xbf16, #tpu.memory_space<vmem>>, vector<1x16x32xbf16>
    %35 = vector.shape_cast %34 : vector<1x16x32xbf16> to vector<16x32xbf16>
    %cst_32 = arith.constant dense<0.000000e+00> : vector<64x32xf32>
    %36 = tpu.matmul %33, %35, %cst_32 {dimension_numbers = #tpu.dot_dimension_numbers<[1], [0], [0], [1], [0, 0, 1, 1], [], []>} : vector<64x16xbf16>, vector<16x32xbf16>, vector<64x32xf32> -> vector<64x32xf32>
    %37 = arith.addf %29, %36 : vector<64x32xf32>
    %c3 = arith.constant 3 : index
    %c0_33 = arith.constant 0 : index
    %c0_34 = arith.constant 0 : index
    %38 = vector.load %arg4[%c3, %c0_33, %c0_34] : memref<9x64x256xbf16, #tpu.memory_space<vmem>>, vector<1x64x256xbf16>
    %39 = vector.shape_cast %38 : vector<1x64x256xbf16> to vector<64x256xbf16>
    %cst_35 = arith.constant dense<0.000000e+00> : vector<64x16xf32>
    %40 = tpu.matmul %39, %12, %cst_35 {dimension_numbers = #tpu.dot_dimension_numbers<[1], [0], [0], [1], [0, 0, 1, 1], [], []>} : vector<64x256xbf16>, vector<256x16xbf16>, vector<64x16xf32> -> vector<64x16xf32>
    %41 = arith.truncf %40 : vector<64x16xf32> to vector<64x16xbf16>
    %c3_36 = arith.constant 3 : index
    %c0_37 = arith.constant 0 : index
    %c0_38 = arith.constant 0 : index
    %42 = vector.load %arg5[%c3_36, %c0_37, %c0_38] : memref<9x16x32xbf16, #tpu.memory_space<vmem>>, vector<1x16x32xbf16>
    %43 = vector.shape_cast %42 : vector<1x16x32xbf16> to vector<16x32xbf16>
    %cst_39 = arith.constant dense<0.000000e+00> : vector<64x32xf32>
    %44 = tpu.matmul %41, %43, %cst_39 {dimension_numbers = #tpu.dot_dimension_numbers<[1], [0], [0], [1], [0, 0, 1, 1], [], []>} : vector<64x16xbf16>, vector<16x32xbf16>, vector<64x32xf32> -> vector<64x32xf32>
    %45 = arith.addf %37, %44 : vector<64x32xf32>
    %c4 = arith.constant 4 : index
    %c0_40 = arith.constant 0 : index
    %c0_41 = arith.constant 0 : index
    %46 = vector.load %arg4[%c4, %c0_40, %c0_41] : memref<9x64x256xbf16, #tpu.memory_space<vmem>>, vector<1x64x256xbf16>
    %47 = vector.shape_cast %46 : vector<1x64x256xbf16> to vector<64x256xbf16>
    %cst_42 = arith.constant dense<0.000000e+00> : vector<64x16xf32>
    %48 = tpu.matmul %47, %12, %cst_42 {dimension_numbers = #tpu.dot_dimension_numbers<[1], [0], [0], [1], [0, 0, 1, 1], [], []>} : vector<64x256xbf16>, vector<256x16xbf16>, vector<64x16xf32> -> vector<64x16xf32>
    %49 = arith.truncf %48 : vector<64x16xf32> to vector<64x16xbf16>
    %c4_43 = arith.constant 4 : index
    %c0_44 = arith.constant 0 : index
    %c0_45 = arith.constant 0 : index
    %50 = vector.load %arg5[%c4_43, %c0_44, %c0_45] : memref<9x16x32xbf16, #tpu.memory_space<vmem>>, vector<1x16x32xbf16>
    %51 = vector.shape_cast %50 : vector<1x16x32xbf16> to vector<16x32xbf16>
    %cst_46 = arith.constant dense<0.000000e+00> : vector<64x32xf32>
    %52 = tpu.matmul %49, %51, %cst_46 {dimension_numbers = #tpu.dot_dimension_numbers<[1], [0], [0], [1], [0, 0, 1, 1], [], []>} : vector<64x16xbf16>, vector<16x32xbf16>, vector<64x32xf32> -> vector<64x32xf32>
    %53 = arith.addf %45, %52 : vector<64x32xf32>
    %c5 = arith.constant 5 : index
    %c0_47 = arith.constant 0 : index
    %c0_48 = arith.constant 0 : index
    %54 = vector.load %arg4[%c5, %c0_47, %c0_48] : memref<9x64x256xbf16, #tpu.memory_space<vmem>>, vector<1x64x256xbf16>
    %55 = vector.shape_cast %54 : vector<1x64x256xbf16> to vector<64x256xbf16>
    %cst_49 = arith.constant dense<0.000000e+00> : vector<64x16xf32>
    %56 = tpu.matmul %55, %12, %cst_49 {dimension_numbers = #tpu.dot_dimension_numbers<[1], [0], [0], [1], [0, 0, 1, 1], [], []>} : vector<64x256xbf16>, vector<256x16xbf16>, vector<64x16xf32> -> vector<64x16xf32>
    %57 = arith.truncf %56 : vector<64x16xf32> to vector<64x16xbf16>
    %c5_50 = arith.constant 5 : index
    %c0_51 = arith.constant 0 : index
    %c0_52 = arith.constant 0 : index
    %58 = vector.load %arg5[%c5_50, %c0_51, %c0_52] : memref<9x16x32xbf16, #tpu.memory_space<vmem>>, vector<1x16x32xbf16>
    %59 = vector.shape_cast %58 : vector<1x16x32xbf16> to vector<16x32xbf16>
    %cst_53 = arith.constant dense<0.000000e+00> : vector<64x32xf32>
    %60 = tpu.matmul %57, %59, %cst_53 {dimension_numbers = #tpu.dot_dimension_numbers<[1], [0], [0], [1], [0, 0, 1, 1], [], []>} : vector<64x16xbf16>, vector<16x32xbf16>, vector<64x32xf32> -> vector<64x32xf32>
    %61 = arith.addf %53, %60 : vector<64x32xf32>
    %c6 = arith.constant 6 : index
    %c0_54 = arith.constant 0 : index
    %c0_55 = arith.constant 0 : index
    %62 = vector.load %arg4[%c6, %c0_54, %c0_55] : memref<9x64x256xbf16, #tpu.memory_space<vmem>>, vector<1x64x256xbf16>
    %63 = vector.shape_cast %62 : vector<1x64x256xbf16> to vector<64x256xbf16>
    %cst_56 = arith.constant dense<0.000000e+00> : vector<64x16xf32>
    %64 = tpu.matmul %63, %12, %cst_56 {dimension_numbers = #tpu.dot_dimension_numbers<[1], [0], [0], [1], [0, 0, 1, 1], [], []>} : vector<64x256xbf16>, vector<256x16xbf16>, vector<64x16xf32> -> vector<64x16xf32>
    %65 = arith.truncf %64 : vector<64x16xf32> to vector<64x16xbf16>
    %c6_57 = arith.constant 6 : index
    %c0_58 = arith.constant 0 : index
    %c0_59 = arith.constant 0 : index
    %66 = vector.load %arg5[%c6_57, %c0_58, %c0_59] : memref<9x16x32xbf16, #tpu.memory_space<vmem>>, vector<1x16x32xbf16>
    %67 = vector.shape_cast %66 : vector<1x16x32xbf16> to vector<16x32xbf16>
    %cst_60 = arith.constant dense<0.000000e+00> : vector<64x32xf32>
    %68 = tpu.matmul %65, %67, %cst_60 {dimension_numbers = #tpu.dot_dimension_numbers<[1], [0], [0], [1], [0, 0, 1, 1], [], []>} : vector<64x16xbf16>, vector<16x32xbf16>, vector<64x32xf32> -> vector<64x32xf32>
    %69 = arith.addf %61, %68 : vector<64x32xf32>
    %c7 = arith.constant 7 : index
    %c0_61 = arith.constant 0 : index
    %c0_62 = arith.constant 0 : index
    %70 = vector.load %arg4[%c7, %c0_61, %c0_62] : memref<9x64x256xbf16, #tpu.memory_space<vmem>>, vector<1x64x256xbf16>
    %71 = vector.shape_cast %70 : vector<1x64x256xbf16> to vector<64x256xbf16>
    %cst_63 = arith.constant dense<0.000000e+00> : vector<64x16xf32>
    %72 = tpu.matmul %71, %12, %cst_63 {dimension_numbers = #tpu.dot_dimension_numbers<[1], [0], [0], [1], [0, 0, 1, 1], [], []>} : vector<64x256xbf16>, vector<256x16xbf16>, vector<64x16xf32> -> vector<64x16xf32>
    %73 = arith.truncf %72 : vector<64x16xf32> to vector<64x16xbf16>
    %c7_64 = arith.constant 7 : index
    %c0_65 = arith.constant 0 : index
    %c0_66 = arith.constant 0 : index
    %74 = vector.load %arg5[%c7_64, %c0_65, %c0_66] : memref<9x16x32xbf16, #tpu.memory_space<vmem>>, vector<1x16x32xbf16>
    %75 = vector.shape_cast %74 : vector<1x16x32xbf16> to vector<16x32xbf16>
    %cst_67 = arith.constant dense<0.000000e+00> : vector<64x32xf32>
    %76 = tpu.matmul %73, %75, %cst_67 {dimension_numbers = #tpu.dot_dimension_numbers<[1], [0], [0], [1], [0, 0, 1, 1], [], []>} : vector<64x16xbf16>, vector<16x32xbf16>, vector<64x32xf32> -> vector<64x32xf32>
    %77 = arith.addf %69, %76 : vector<64x32xf32>
    %c8 = arith.constant 8 : index
    %c0_68 = arith.constant 0 : index
    %c0_69 = arith.constant 0 : index
    %78 = vector.load %arg4[%c8, %c0_68, %c0_69] : memref<9x64x256xbf16, #tpu.memory_space<vmem>>, vector<1x64x256xbf16>
    %79 = vector.shape_cast %78 : vector<1x64x256xbf16> to vector<64x256xbf16>
    %cst_70 = arith.constant dense<0.000000e+00> : vector<64x16xf32>
    %80 = tpu.matmul %79, %12, %cst_70 {dimension_numbers = #tpu.dot_dimension_numbers<[1], [0], [0], [1], [0, 0, 1, 1], [], []>} : vector<64x256xbf16>, vector<256x16xbf16>, vector<64x16xf32> -> vector<64x16xf32>
    %81 = arith.truncf %80 : vector<64x16xf32> to vector<64x16xbf16>
    %c8_71 = arith.constant 8 : index
    %c0_72 = arith.constant 0 : index
    %c0_73 = arith.constant 0 : index
    %82 = vector.load %arg5[%c8_71, %c0_72, %c0_73] : memref<9x16x32xbf16, #tpu.memory_space<vmem>>, vector<1x16x32xbf16>
    %83 = vector.shape_cast %82 : vector<1x16x32xbf16> to vector<16x32xbf16>
    %cst_74 = arith.constant dense<0.000000e+00> : vector<64x32xf32>
    %84 = tpu.matmul %81, %83, %cst_74 {dimension_numbers = #tpu.dot_dimension_numbers<[1], [0], [0], [1], [0, 0, 1, 1], [], []>} : vector<64x16xbf16>, vector<16x32xbf16>, vector<64x32xf32> -> vector<64x32xf32>
    %85 = arith.addf %77, %84 : vector<64x32xf32>
    %c0_75 = arith.constant 0 : index
    %c0_76 = arith.constant 0 : index
    %86 = vector.load %arg6[%c0_75, %c0_76] : memref<1x32xf32, #tpu.memory_space<vmem>>, vector<1x32xf32>
    %87 = vector.broadcast %86 : vector<1x32xf32> to vector<64x32xf32>
    %88 = arith.addf %85, %87 : vector<64x32xf32>
    %cst_77 = arith.constant 0.000000e+00 : f32
    %89 = vector.broadcast %cst_77 : f32 to vector<64x32xf32>
    %90 = arith.maximumf %88, %89 : vector<64x32xf32>
    %c0_78 = arith.constant 0 : index
    %c0_79 = arith.constant 0 : index
    %c0_80 = arith.constant 0 : index
    %91 = vector.load %arg14[%c0_78, %c0_79, %c0_80] : memref<1x64x32xf32, #tpu.memory_space<vmem>>, vector<1x64x32xf32>
    %92 = vector.shape_cast %91 : vector<1x64x32xf32> to vector<64x32xf32>
    %93 = vector.shape_cast %90 : vector<64x32xf32> to vector<1x64x32xf32>
    tpu.vector_store %arg14[%c0_78, %c0_79, %c0_80], %93 {strides = array<i32>} : memref<1x64x32xf32, #tpu.memory_space<vmem>>, vector<1x64x32xf32>,
    %94 = arith.truncf %90 : vector<64x32xf32> to vector<64x32xbf16>
    %cst_81 = arith.constant 0.000000e+00 : f32
    %95 = vector.broadcast %cst_81 : f32 to vector<16x64xf32>
    %c0_82 = arith.constant 0 : index
    %c0_83 = arith.constant 0 : index
    %c0_84 = arith.constant 0 : index
    %96 = vector.load %arg7[%c0_82, %c0_83, %c0_84] : memref<9x16x64xbf16, #tpu.memory_space<vmem>>, vector<1x16x64xbf16>
    %97 = vector.shape_cast %96 : vector<1x16x64xbf16> to vector<16x64xbf16>
    %cst_85 = arith.constant dense<0.000000e+00> : vector<16x32xf32>
    %98 = tpu.matmul %97, %94, %cst_85 {dimension_numbers = #tpu.dot_dimension_numbers<[1], [0], [0], [1], [0, 0, 1, 1], [], []>} : vector<16x64xbf16>, vector<64x32xbf16>, vector<16x32xf32> -> vector<16x32xf32>
    %99 = arith.truncf %98 : vector<16x32xf32> to vector<16x32xbf16>
    %c0_86 = arith.constant 0 : index
    %c0_87 = arith.constant 0 : index
    %c0_88 = arith.constant 0 : index
    %100 = vector.load %arg8[%c0_86, %c0_87, %c0_88] : memref<9x32x64xbf16, #tpu.memory_space<vmem>>, vector<1x32x64xbf16>
    %101 = vector.shape_cast %100 : vector<1x32x64xbf16> to vector<32x64xbf16>
    %cst_89 = arith.constant dense<0.000000e+00> : vector<16x64xf32>
    %102 = tpu.matmul %99, %101, %cst_89 {dimension_numbers = #tpu.dot_dimension_numbers<[1], [0], [0], [1], [0, 0, 1, 1], [], []>} : vector<16x32xbf16>, vector<32x64xbf16>, vector<16x64xf32> -> vector<16x64xf32>
    %103 = arith.addf %95, %102 : vector<16x64xf32>
    %c1_90 = arith.constant 1 : index
    %c0_91 = arith.constant 0 : index
    %c0_92 = arith.constant 0 : index
    %104 = vector.load %arg7[%c1_90, %c0_91, %c0_92] : memref<9x16x64xbf16, #tpu.memory_space<vmem>>, vector<1x16x64xbf16>
    %105 = vector.shape_cast %104 : vector<1x16x64xbf16> to vector<16x64xbf16>
    %cst_93 = arith.constant dense<0.000000e+00> : vector<16x32xf32>
    %106 = tpu.matmul %105, %94, %cst_93 {dimension_numbers = #tpu.dot_dimension_numbers<[1], [0], [0], [1], [0, 0, 1, 1], [], []>} : vector<16x64xbf16>, vector<64x32xbf16>, vector<16x32xf32> -> vector<16x32xf32>
    %107 = arith.truncf %106 : vector<16x32xf32> to vector<16x32xbf16>
    %c1_94 = arith.constant 1 : index
    %c0_95 = arith.constant 0 : index
    %c0_96 = arith.constant 0 : index
    %108 = vector.load %arg8[%c1_94, %c0_95, %c0_96] : memref<9x32x64xbf16, #tpu.memory_space<vmem>>, vector<1x32x64xbf16>
    %109 = vector.shape_cast %108 : vector<1x32x64xbf16> to vector<32x64xbf16>
    %cst_97 = arith.constant dense<0.000000e+00> : vector<16x64xf32>
    %110 = tpu.matmul %107, %109, %cst_97 {dimension_numbers = #tpu.dot_dimension_numbers<[1], [0], [0], [1], [0, 0, 1, 1], [], []>} : vector<16x32xbf16>, vector<32x64xbf16>, vector<16x64xf32> -> vector<16x64xf32>
    %111 = arith.addf %103, %110 : vector<16x64xf32>
    %c2_98 = arith.constant 2 : index
    %c0_99 = arith.constant 0 : index
    %c0_100 = arith.constant 0 : index
    %112 = vector.load %arg7[%c2_98, %c0_99, %c0_100] : memref<9x16x64xbf16, #tpu.memory_space<vmem>>, vector<1x16x64xbf16>
    %113 = vector.shape_cast %112 : vector<1x16x64xbf16> to vector<16x64xbf16>
    %cst_101 = arith.constant dense<0.000000e+00> : vector<16x32xf32>
    %114 = tpu.matmul %113, %94, %cst_101 {dimension_numbers = #tpu.dot_dimension_numbers<[1], [0], [0], [1], [0, 0, 1, 1], [], []>} : vector<16x64xbf16>, vector<64x32xbf16>, vector<16x32xf32> -> vector<16x32xf32>
    %115 = arith.truncf %114 : vector<16x32xf32> to vector<16x32xbf16>
    %c2_102 = arith.constant 2 : index
    %c0_103 = arith.constant 0 : index
    %c0_104 = arith.constant 0 : index
    %116 = vector.load %arg8[%c2_102, %c0_103, %c0_104] : memref<9x32x64xbf16, #tpu.memory_space<vmem>>, vector<1x32x64xbf16>
    %117 = vector.shape_cast %116 : vector<1x32x64xbf16> to vector<32x64xbf16>
    %cst_105 = arith.constant dense<0.000000e+00> : vector<16x64xf32>
    %118 = tpu.matmul %115, %117, %cst_105 {dimension_numbers = #tpu.dot_dimension_numbers<[1], [0], [0], [1], [0, 0, 1, 1], [], []>} : vector<16x32xbf16>, vector<32x64xbf16>, vector<16x64xf32> -> vector<16x64xf32>
    %119 = arith.addf %111, %118 : vector<16x64xf32>
    %c3_106 = arith.constant 3 : index
    %c0_107 = arith.constant 0 : index
    %c0_108 = arith.constant 0 : index
    %120 = vector.load %arg7[%c3_106, %c0_107, %c0_108] : memref<9x16x64xbf16, #tpu.memory_space<vmem>>, vector<1x16x64xbf16>
    %121 = vector.shape_cast %120 : vector<1x16x64xbf16> to vector<16x64xbf16>
    %cst_109 = arith.constant dense<0.000000e+00> : vector<16x32xf32>
    %122 = tpu.matmul %121, %94, %cst_109 {dimension_numbers = #tpu.dot_dimension_numbers<[1], [0], [0], [1], [0, 0, 1, 1], [], []>} : vector<16x64xbf16>, vector<64x32xbf16>, vector<16x32xf32> -> vector<16x32xf32>
    %123 = arith.truncf %122 : vector<16x32xf32> to vector<16x32xbf16>
    %c3_110 = arith.constant 3 : index
    %c0_111 = arith.constant 0 : index
    %c0_112 = arith.constant 0 : index
    %124 = vector.load %arg8[%c3_110, %c0_111, %c0_112] : memref<9x32x64xbf16, #tpu.memory_space<vmem>>, vector<1x32x64xbf16>
    %125 = vector.shape_cast %124 : vector<1x32x64xbf16> to vector<32x64xbf16>
    %cst_113 = arith.constant dense<0.000000e+00> : vector<16x64xf32>
    %126 = tpu.matmul %123, %125, %cst_113 {dimension_numbers = #tpu.dot_dimension_numbers<[1], [0], [0], [1], [0, 0, 1, 1], [], []>} : vector<16x32xbf16>, vector<32x64xbf16>, vector<16x64xf32> -> vector<16x64xf32>
    %127 = arith.addf %119, %126 : vector<16x64xf32>
    %c4_114 = arith.constant 4 : index
    %c0_115 = arith.constant 0 : index
    %c0_116 = arith.constant 0 : index
    %128 = vector.load %arg7[%c4_114, %c0_115, %c0_116] : memref<9x16x64xbf16, #tpu.memory_space<vmem>>, vector<1x16x64xbf16>
    %129 = vector.shape_cast %128 : vector<1x16x64xbf16> to vector<16x64xbf16>
    %cst_117 = arith.constant dense<0.000000e+00> : vector<16x32xf32>
    %130 = tpu.matmul %129, %94, %cst_117 {dimension_numbers = #tpu.dot_dimension_numbers<[1], [0], [0], [1], [0, 0, 1, 1], [], []>} : vector<16x64xbf16>, vector<64x32xbf16>, vector<16x32xf32> -> vector<16x32xf32>
    %131 = arith.truncf %130 : vector<16x32xf32> to vector<16x32xbf16>
    %c4_118 = arith.constant 4 : index
    %c0_119 = arith.constant 0 : index
    %c0_120 = arith.constant 0 : index
    %132 = vector.load %arg8[%c4_118, %c0_119, %c0_120] : memref<9x32x64xbf16, #tpu.memory_space<vmem>>, vector<1x32x64xbf16>
    %133 = vector.shape_cast %132 : vector<1x32x64xbf16> to vector<32x64xbf16>
    %cst_121 = arith.constant dense<0.000000e+00> : vector<16x64xf32>
    %134 = tpu.matmul %131, %133, %cst_121 {dimension_numbers = #tpu.dot_dimension_numbers<[1], [0], [0], [1], [0, 0, 1, 1], [], []>} : vector<16x32xbf16>, vector<32x64xbf16>, vector<16x64xf32> -> vector<16x64xf32>
    %135 = arith.addf %127, %134 : vector<16x64xf32>
    %c5_122 = arith.constant 5 : index
    %c0_123 = arith.constant 0 : index
    %c0_124 = arith.constant 0 : index
    %136 = vector.load %arg7[%c5_122, %c0_123, %c0_124] : memref<9x16x64xbf16, #tpu.memory_space<vmem>>, vector<1x16x64xbf16>
    %137 = vector.shape_cast %136 : vector<1x16x64xbf16> to vector<16x64xbf16>
    %cst_125 = arith.constant dense<0.000000e+00> : vector<16x32xf32>
    %138 = tpu.matmul %137, %94, %cst_125 {dimension_numbers = #tpu.dot_dimension_numbers<[1], [0], [0], [1], [0, 0, 1, 1], [], []>} : vector<16x64xbf16>, vector<64x32xbf16>, vector<16x32xf32> -> vector<16x32xf32>
    %139 = arith.truncf %138 : vector<16x32xf32> to vector<16x32xbf16>
    %c5_126 = arith.constant 5 : index
    %c0_127 = arith.constant 0 : index
    %c0_128 = arith.constant 0 : index
    %140 = vector.load %arg8[%c5_126, %c0_127, %c0_128] : memref<9x32x64xbf16, #tpu.memory_space<vmem>>, vector<1x32x64xbf16>
    %141 = vector.shape_cast %140 : vector<1x32x64xbf16> to vector<32x64xbf16>
    %cst_129 = arith.constant dense<0.000000e+00> : vector<16x64xf32>
    %142 = tpu.matmul %139, %141, %cst_129 {dimension_numbers = #tpu.dot_dimension_numbers<[1], [0], [0], [1], [0, 0, 1, 1], [], []>} : vector<16x32xbf16>, vector<32x64xbf16>, vector<16x64xf32> -> vector<16x64xf32>
    %143 = arith.addf %135, %142 : vector<16x64xf32>
    %c6_130 = arith.constant 6 : index
    %c0_131 = arith.constant 0 : index
    %c0_132 = arith.constant 0 : index
    %144 = vector.load %arg7[%c6_130, %c0_131, %c0_132] : memref<9x16x64xbf16, #tpu.memory_space<vmem>>, vector<1x16x64xbf16>
    %145 = vector.shape_cast %144 : vector<1x16x64xbf16> to vector<16x64xbf16>
    %cst_133 = arith.constant dense<0.000000e+00> : vector<16x32xf32>
    %146 = tpu.matmul %145, %94, %cst_133 {dimension_numbers = #tpu.dot_dimension_numbers<[1], [0], [0], [1], [0, 0, 1, 1], [], []>} : vector<16x64xbf16>, vector<64x32xbf16>, vector<16x32xf32> -> vector<16x32xf32>
    %147 = arith.truncf %146 : vector<16x32xf32> to vector<16x32xbf16>
    %c6_134 = arith.constant 6 : index
    %c0_135 = arith.constant 0 : index
    %c0_136 = arith.constant 0 : index
    %148 = vector.load %arg8[%c6_134, %c0_135, %c0_136] : memref<9x32x64xbf16, #tpu.memory_space<vmem>>, vector<1x32x64xbf16>
    %149 = vector.shape_cast %148 : vector<1x32x64xbf16> to vector<32x64xbf16>
    %cst_137 = arith.constant dense<0.000000e+00> : vector<16x64xf32>
    %150 = tpu.matmul %147, %149, %cst_137 {dimension_numbers = #tpu.dot_dimension_numbers<[1], [0], [0], [1], [0, 0, 1, 1], [], []>} : vector<16x32xbf16>, vector<32x64xbf16>, vector<16x64xf32> -> vector<16x64xf32>
    %151 = arith.addf %143, %150 : vector<16x64xf32>
    %c7_138 = arith.constant 7 : index
    %c0_139 = arith.constant 0 : index
    %c0_140 = arith.constant 0 : index
    %152 = vector.load %arg7[%c7_138, %c0_139, %c0_140] : memref<9x16x64xbf16, #tpu.memory_space<vmem>>, vector<1x16x64xbf16>
    %153 = vector.shape_cast %152 : vector<1x16x64xbf16> to vector<16x64xbf16>
    %cst_141 = arith.constant dense<0.000000e+00> : vector<16x32xf32>
    %154 = tpu.matmul %153, %94, %cst_141 {dimension_numbers = #tpu.dot_dimension_numbers<[1], [0], [0], [1], [0, 0, 1, 1], [], []>} : vector<16x64xbf16>, vector<64x32xbf16>, vector<16x32xf32> -> vector<16x32xf32>
    %155 = arith.truncf %154 : vector<16x32xf32> to vector<16x32xbf16>
    %c7_142 = arith.constant 7 : index
    %c0_143 = arith.constant 0 : index
    %c0_144 = arith.constant 0 : index
    %156 = vector.load %arg8[%c7_142, %c0_143, %c0_144] : memref<9x32x64xbf16, #tpu.memory_space<vmem>>, vector<1x32x64xbf16>
    %157 = vector.shape_cast %156 : vector<1x32x64xbf16> to vector<32x64xbf16>
    %cst_145 = arith.constant dense<0.000000e+00> : vector<16x64xf32>
    %158 = tpu.matmul %155, %157, %cst_145 {dimension_numbers = #tpu.dot_dimension_numbers<[1], [0], [0], [1], [0, 0, 1, 1], [], []>} : vector<16x32xbf16>, vector<32x64xbf16>, vector<16x64xf32> -> vector<16x64xf32>
    %159 = arith.addf %151, %158 : vector<16x64xf32>
    %c8_146 = arith.constant 8 : index
    %c0_147 = arith.constant 0 : index
    %c0_148 = arith.constant 0 : index
    %160 = vector.load %arg7[%c8_146, %c0_147, %c0_148] : memref<9x16x64xbf16, #tpu.memory_space<vmem>>, vector<1x16x64xbf16>
    %161 = vector.shape_cast %160 : vector<1x16x64xbf16> to vector<16x64xbf16>
    %cst_149 = arith.constant dense<0.000000e+00> : vector<16x32xf32>
    %162 = tpu.matmul %161, %94, %cst_149 {dimension_numbers = #tpu.dot_dimension_numbers<[1], [0], [0], [1], [0, 0, 1, 1], [], []>} : vector<16x64xbf16>, vector<64x32xbf16>, vector<16x32xf32> -> vector<16x32xf32>
    %163 = arith.truncf %162 : vector<16x32xf32> to vector<16x32xbf16>
    %c8_150 = arith.constant 8 : index
    %c0_151 = arith.constant 0 : index
    %c0_152 = arith.constant 0 : index
    %164 = vector.load %arg8[%c8_150, %c0_151, %c0_152] : memref<9x32x64xbf16, #tpu.memory_space<vmem>>, vector<1x32x64xbf16>
    %165 = vector.shape_cast %164 : vector<1x32x64xbf16> to vector<32x64xbf16>
    %cst_153 = arith.constant dense<0.000000e+00> : vector<16x64xf32>
    %166 = tpu.matmul %163, %165, %cst_153 {dimension_numbers = #tpu.dot_dimension_numbers<[1], [0], [0], [1], [0, 0, 1, 1], [], []>} : vector<16x32xbf16>, vector<32x64xbf16>, vector<16x64xf32> -> vector<16x64xf32>
    %167 = arith.addf %159, %166 : vector<16x64xf32>
    %c0_154 = arith.constant 0 : index
    %c0_155 = arith.constant 0 : index
    %168 = vector.load %arg9[%c0_154, %c0_155] : memref<1x64xf32, #tpu.memory_space<vmem>>, vector<1x64xf32>
    %169 = vector.broadcast %168 : vector<1x64xf32> to vector<16x64xf32>
    %170 = arith.addf %167, %169 : vector<16x64xf32>
    %cst_156 = arith.constant 0.000000e+00 : f32
    %171 = vector.broadcast %cst_156 : f32 to vector<16x64xf32>
    %172 = arith.maximumf %170, %171 : vector<16x64xf32>
    %c0_157 = arith.constant 0 : index
    %c0_158 = arith.constant 0 : index
    %c0_159 = arith.constant 0 : index
    %173 = vector.load %arg15[%c0_157, %c0_158, %c0_159] : memref<1x16x64xf32, #tpu.memory_space<vmem>>, vector<1x16x64xf32>
    %174 = vector.shape_cast %173 : vector<1x16x64xf32> to vector<16x64xf32>
    %175 = vector.shape_cast %172 : vector<16x64xf32> to vector<1x16x64xf32>
    tpu.vector_store %arg15[%c0_157, %c0_158, %c0_159], %175 {strides = array<i32>} : memref<1x16x64xf32, #tpu.memory_space<vmem>>, vector<1x16x64xf32>,
    %176 = arith.truncf %172 : vector<16x64xf32> to vector<16x64xbf16>
    %cst_160 = arith.constant 0.000000e+00 : f32
    %177 = vector.broadcast %cst_160 : f32 to vector<4x128xf32>
    %c0_161 = arith.constant 0 : index
    %c0_162 = arith.constant 0 : index
    %c0_163 = arith.constant 0 : index
    %178 = vector.load %arg10[%c0_161, %c0_162, %c0_163] : memref<9x4x16xbf16, #tpu.memory_space<vmem>>, vector<1x4x16xbf16>
    %179 = vector.shape_cast %178 : vector<1x4x16xbf16> to vector<4x16xbf16>
    %cst_164 = arith.constant dense<0.000000e+00> : vector<4x64xf32>
    %180 = tpu.matmul %179, %176, %cst_164 {dimension_numbers = #tpu.dot_dimension_numbers<[1], [0], [0], [1], [0, 0, 1, 1], [], []>} : vector<4x16xbf16>, vector<16x64xbf16>, vector<4x64xf32> -> vector<4x64xf32>
    %181 = arith.truncf %180 : vector<4x64xf32> to vector<4x64xbf16>
    %c0_165 = arith.constant 0 : index
    %c0_166 = arith.constant 0 : index
    %c0_167 = arith.constant 0 : index
    %182 = vector.load %arg11[%c0_165, %c0_166, %c0_167] : memref<9x64x128xbf16, #tpu.memory_space<vmem>>, vector<1x64x128xbf16>
    %183 = vector.shape_cast %182 : vector<1x64x128xbf16> to vector<64x128xbf16>
    %cst_168 = arith.constant dense<0.000000e+00> : vector<4x128xf32>
    %184 = tpu.matmul %181, %183, %cst_168 {dimension_numbers = #tpu.dot_dimension_numbers<[1], [0], [0], [1], [0, 0, 1, 1], [], []>} : vector<4x64xbf16>, vector<64x128xbf16>, vector<4x128xf32> -> vector<4x128xf32>
    %185 = arith.addf %177, %184 : vector<4x128xf32>
    %c1_169 = arith.constant 1 : index
    %c0_170 = arith.constant 0 : index
    %c0_171 = arith.constant 0 : index
    %186 = vector.load %arg10[%c1_169, %c0_170, %c0_171] : memref<9x4x16xbf16, #tpu.memory_space<vmem>>, vector<1x4x16xbf16>
    %187 = vector.shape_cast %186 : vector<1x4x16xbf16> to vector<4x16xbf16>
    %cst_172 = arith.constant dense<0.000000e+00> : vector<4x64xf32>
    %188 = tpu.matmul %187, %176, %cst_172 {dimension_numbers = #tpu.dot_dimension_numbers<[1], [0], [0], [1], [0, 0, 1, 1], [], []>} : vector<4x16xbf16>, vector<16x64xbf16>, vector<4x64xf32> -> vector<4x64xf32>
    %189 = arith.truncf %188 : vector<4x64xf32> to vector<4x64xbf16>
    %c1_173 = arith.constant 1 : index
    %c0_174 = arith.constant 0 : index
    %c0_175 = arith.constant 0 : index
    %190 = vector.load %arg11[%c1_173, %c0_174, %c0_175] : memref<9x64x128xbf16, #tpu.memory_space<vmem>>, vector<1x64x128xbf16>
    %191 = vector.shape_cast %190 : vector<1x64x128xbf16> to vector<64x128xbf16>
    %cst_176 = arith.constant dense<0.000000e+00> : vector<4x128xf32>
    %192 = tpu.matmul %189, %191, %cst_176 {dimension_numbers = #tpu.dot_dimension_numbers<[1], [0], [0], [1], [0, 0, 1, 1], [], []>} : vector<4x64xbf16>, vector<64x128xbf16>, vector<4x128xf32> -> vector<4x128xf32>
    %193 = arith.addf %185, %192 : vector<4x128xf32>
    %c2_177 = arith.constant 2 : index
    %c0_178 = arith.constant 0 : index
    %c0_179 = arith.constant 0 : index
    %194 = vector.load %arg10[%c2_177, %c0_178, %c0_179] : memref<9x4x16xbf16, #tpu.memory_space<vmem>>, vector<1x4x16xbf16>
    %195 = vector.shape_cast %194 : vector<1x4x16xbf16> to vector<4x16xbf16>
    %cst_180 = arith.constant dense<0.000000e+00> : vector<4x64xf32>
    %196 = tpu.matmul %195, %176, %cst_180 {dimension_numbers = #tpu.dot_dimension_numbers<[1], [0], [0], [1], [0, 0, 1, 1], [], []>} : vector<4x16xbf16>, vector<16x64xbf16>, vector<4x64xf32> -> vector<4x64xf32>
    %197 = arith.truncf %196 : vector<4x64xf32> to vector<4x64xbf16>
    %c2_181 = arith.constant 2 : index
    %c0_182 = arith.constant 0 : index
    %c0_183 = arith.constant 0 : index
    %198 = vector.load %arg11[%c2_181, %c0_182, %c0_183] : memref<9x64x128xbf16, #tpu.memory_space<vmem>>, vector<1x64x128xbf16>
    %199 = vector.shape_cast %198 : vector<1x64x128xbf16> to vector<64x128xbf16>
    %cst_184 = arith.constant dense<0.000000e+00> : vector<4x128xf32>
    %200 = tpu.matmul %197, %199, %cst_184 {dimension_numbers = #tpu.dot_dimension_numbers<[1], [0], [0], [1], [0, 0, 1, 1], [], []>} : vector<4x64xbf16>, vector<64x128xbf16>, vector<4x128xf32> -> vector<4x128xf32>
    %201 = arith.addf %193, %200 : vector<4x128xf32>
    %c3_185 = arith.constant 3 : index
    %c0_186 = arith.constant 0 : index
    %c0_187 = arith.constant 0 : index
    %202 = vector.load %arg10[%c3_185, %c0_186, %c0_187] : memref<9x4x16xbf16, #tpu.memory_space<vmem>>, vector<1x4x16xbf16>
    %203 = vector.shape_cast %202 : vector<1x4x16xbf16> to vector<4x16xbf16>
    %cst_188 = arith.constant dense<0.000000e+00> : vector<4x64xf32>
    %204 = tpu.matmul %203, %176, %cst_188 {dimension_numbers = #tpu.dot_dimension_numbers<[1], [0], [0], [1], [0, 0, 1, 1], [], []>} : vector<4x16xbf16>, vector<16x64xbf16>, vector<4x64xf32> -> vector<4x64xf32>
    %205 = arith.truncf %204 : vector<4x64xf32> to vector<4x64xbf16>
    %c3_189 = arith.constant 3 : index
    %c0_190 = arith.constant 0 : index
    %c0_191 = arith.constant 0 : index
    %206 = vector.load %arg11[%c3_189, %c0_190, %c0_191] : memref<9x64x128xbf16, #tpu.memory_space<vmem>>, vector<1x64x128xbf16>
    %207 = vector.shape_cast %206 : vector<1x64x128xbf16> to vector<64x128xbf16>
    %cst_192 = arith.constant dense<0.000000e+00> : vector<4x128xf32>
    %208 = tpu.matmul %205, %207, %cst_192 {dimension_numbers = #tpu.dot_dimension_numbers<[1], [0], [0], [1], [0, 0, 1, 1], [], []>} : vector<4x64xbf16>, vector<64x128xbf16>, vector<4x128xf32> -> vector<4x128xf32>
    %209 = arith.addf %201, %208 : vector<4x128xf32>
    %c4_193 = arith.constant 4 : index
    %c0_194 = arith.constant 0 : index
    %c0_195 = arith.constant 0 : index
    %210 = vector.load %arg10[%c4_193, %c0_194, %c0_195] : memref<9x4x16xbf16, #tpu.memory_space<vmem>>, vector<1x4x16xbf16>
    %211 = vector.shape_cast %210 : vector<1x4x16xbf16> to vector<4x16xbf16>
    %cst_196 = arith.constant dense<0.000000e+00> : vector<4x64xf32>
    %212 = tpu.matmul %211, %176, %cst_196 {dimension_numbers = #tpu.dot_dimension_numbers<[1], [0], [0], [1], [0, 0, 1, 1], [], []>} : vector<4x16xbf16>, vector<16x64xbf16>, vector<4x64xf32> -> vector<4x64xf32>
    %213 = arith.truncf %212 : vector<4x64xf32> to vector<4x64xbf16>
    %c4_197 = arith.constant 4 : index
    %c0_198 = arith.constant 0 : index
    %c0_199 = arith.constant 0 : index
    %214 = vector.load %arg11[%c4_197, %c0_198, %c0_199] : memref<9x64x128xbf16, #tpu.memory_space<vmem>>, vector<1x64x128xbf16>
    %215 = vector.shape_cast %214 : vector<1x64x128xbf16> to vector<64x128xbf16>
    %cst_200 = arith.constant dense<0.000000e+00> : vector<4x128xf32>
    %216 = tpu.matmul %213, %215, %cst_200 {dimension_numbers = #tpu.dot_dimension_numbers<[1], [0], [0], [1], [0, 0, 1, 1], [], []>} : vector<4x64xbf16>, vector<64x128xbf16>, vector<4x128xf32> -> vector<4x128xf32>
    %217 = arith.addf %209, %216 : vector<4x128xf32>
    %c5_201 = arith.constant 5 : index
    %c0_202 = arith.constant 0 : index
    %c0_203 = arith.constant 0 : index
    %218 = vector.load %arg10[%c5_201, %c0_202, %c0_203] : memref<9x4x16xbf16, #tpu.memory_space<vmem>>, vector<1x4x16xbf16>
    %219 = vector.shape_cast %218 : vector<1x4x16xbf16> to vector<4x16xbf16>
    %cst_204 = arith.constant dense<0.000000e+00> : vector<4x64xf32>
    %220 = tpu.matmul %219, %176, %cst_204 {dimension_numbers = #tpu.dot_dimension_numbers<[1], [0], [0], [1], [0, 0, 1, 1], [], []>} : vector<4x16xbf16>, vector<16x64xbf16>, vector<4x64xf32> -> vector<4x64xf32>
    %221 = arith.truncf %220 : vector<4x64xf32> to vector<4x64xbf16>
    %c5_205 = arith.constant 5 : index
    %c0_206 = arith.constant 0 : index
    %c0_207 = arith.constant 0 : index
    %222 = vector.load %arg11[%c5_205, %c0_206, %c0_207] : memref<9x64x128xbf16, #tpu.memory_space<vmem>>, vector<1x64x128xbf16>
    %223 = vector.shape_cast %222 : vector<1x64x128xbf16> to vector<64x128xbf16>
    %cst_208 = arith.constant dense<0.000000e+00> : vector<4x128xf32>
    %224 = tpu.matmul %221, %223, %cst_208 {dimension_numbers = #tpu.dot_dimension_numbers<[1], [0], [0], [1], [0, 0, 1, 1], [], []>} : vector<4x64xbf16>, vector<64x128xbf16>, vector<4x128xf32> -> vector<4x128xf32>
    %225 = arith.addf %217, %224 : vector<4x128xf32>
    %c6_209 = arith.constant 6 : index
    %c0_210 = arith.constant 0 : index
    %c0_211 = arith.constant 0 : index
    %226 = vector.load %arg10[%c6_209, %c0_210, %c0_211] : memref<9x4x16xbf16, #tpu.memory_space<vmem>>, vector<1x4x16xbf16>
    %227 = vector.shape_cast %226 : vector<1x4x16xbf16> to vector<4x16xbf16>
    %cst_212 = arith.constant dense<0.000000e+00> : vector<4x64xf32>
    %228 = tpu.matmul %227, %176, %cst_212 {dimension_numbers = #tpu.dot_dimension_numbers<[1], [0], [0], [1], [0, 0, 1, 1], [], []>} : vector<4x16xbf16>, vector<16x64xbf16>, vector<4x64xf32> -> vector<4x64xf32>
    %229 = arith.truncf %228 : vector<4x64xf32> to vector<4x64xbf16>
    %c6_213 = arith.constant 6 : index
    %c0_214 = arith.constant 0 : index
    %c0_215 = arith.constant 0 : index
    %230 = vector.load %arg11[%c6_213, %c0_214, %c0_215] : memref<9x64x128xbf16, #tpu.memory_space<vmem>>, vector<1x64x128xbf16>
    %231 = vector.shape_cast %230 : vector<1x64x128xbf16> to vector<64x128xbf16>
    %cst_216 = arith.constant dense<0.000000e+00> : vector<4x128xf32>
    %232 = tpu.matmul %229, %231, %cst_216 {dimension_numbers = #tpu.dot_dimension_numbers<[1], [0], [0], [1], [0, 0, 1, 1], [], []>} : vector<4x64xbf16>, vector<64x128xbf16>, vector<4x128xf32> -> vector<4x128xf32>
    %233 = arith.addf %225, %232 : vector<4x128xf32>
    %c7_217 = arith.constant 7 : index
    %c0_218 = arith.constant 0 : index
    %c0_219 = arith.constant 0 : index
    %234 = vector.load %arg10[%c7_217, %c0_218, %c0_219] : memref<9x4x16xbf16, #tpu.memory_space<vmem>>, vector<1x4x16xbf16>
    %235 = vector.shape_cast %234 : vector<1x4x16xbf16> to vector<4x16xbf16>
    %cst_220 = arith.constant dense<0.000000e+00> : vector<4x64xf32>
    %236 = tpu.matmul %235, %176, %cst_220 {dimension_numbers = #tpu.dot_dimension_numbers<[1], [0], [0], [1], [0, 0, 1, 1], [], []>} : vector<4x16xbf16>, vector<16x64xbf16>, vector<4x64xf32> -> vector<4x64xf32>
    %237 = arith.truncf %236 : vector<4x64xf32> to vector<4x64xbf16>
    %c7_221 = arith.constant 7 : index
    %c0_222 = arith.constant 0 : index
    %c0_223 = arith.constant 0 : index
    %238 = vector.load %arg11[%c7_221, %c0_222, %c0_223] : memref<9x64x128xbf16, #tpu.memory_space<vmem>>, vector<1x64x128xbf16>
    %239 = vector.shape_cast %238 : vector<1x64x128xbf16> to vector<64x128xbf16>
    %cst_224 = arith.constant dense<0.000000e+00> : vector<4x128xf32>
    %240 = tpu.matmul %237, %239, %cst_224 {dimension_numbers = #tpu.dot_dimension_numbers<[1], [0], [0], [1], [0, 0, 1, 1], [], []>} : vector<4x64xbf16>, vector<64x128xbf16>, vector<4x128xf32> -> vector<4x128xf32>
    %241 = arith.addf %233, %240 : vector<4x128xf32>
    %c8_225 = arith.constant 8 : index
    %c0_226 = arith.constant 0 : index
    %c0_227 = arith.constant 0 : index
    %242 = vector.load %arg10[%c8_225, %c0_226, %c0_227] : memref<9x4x16xbf16, #tpu.memory_space<vmem>>, vector<1x4x16xbf16>
    %243 = vector.shape_cast %242 : vector<1x4x16xbf16> to vector<4x16xbf16>
    %cst_228 = arith.constant dense<0.000000e+00> : vector<4x64xf32>
    %244 = tpu.matmul %243, %176, %cst_228 {dimension_numbers = #tpu.dot_dimension_numbers<[1], [0], [0], [1], [0, 0, 1, 1], [], []>} : vector<4x16xbf16>, vector<16x64xbf16>, vector<4x64xf32> -> vector<4x64xf32>
    %245 = arith.truncf %244 : vector<4x64xf32> to vector<4x64xbf16>
    %c8_229 = arith.constant 8 : index
    %c0_230 = arith.constant 0 : index
    %c0_231 = arith.constant 0 : index
    %246 = vector.load %arg11[%c8_229, %c0_230, %c0_231] : memref<9x64x128xbf16, #tpu.memory_space<vmem>>, vector<1x64x128xbf16>
    %247 = vector.shape_cast %246 : vector<1x64x128xbf16> to vector<64x128xbf16>
    %cst_232 = arith.constant dense<0.000000e+00> : vector<4x128xf32>
    %248 = tpu.matmul %245, %247, %cst_232 {dimension_numbers = #tpu.dot_dimension_numbers<[1], [0], [0], [1], [0, 0, 1, 1], [], []>} : vector<4x64xbf16>, vector<64x128xbf16>, vector<4x128xf32> -> vector<4x128xf32>
    %249 = arith.addf %241, %248 : vector<4x128xf32>
    %c0_233 = arith.constant 0 : index
    %c0_234 = arith.constant 0 : index
    %250 = vector.load %arg12[%c0_233, %c0_234] : memref<1x128xf32, #tpu.memory_space<vmem>>, vector<1x128xf32>
    %251 = vector.broadcast %250 : vector<1x128xf32> to vector<4x128xf32>
    %252 = arith.addf %249, %251 : vector<4x128xf32>
    %cst_235 = arith.constant 0.000000e+00 : f32
    %253 = vector.broadcast %cst_235 : f32 to vector<4x128xf32>
    %254 = arith.maximumf %252, %253 : vector<4x128xf32>
    %c0_236 = arith.constant 0 : index
    %c0_237 = arith.constant 0 : index
    %c0_238 = arith.constant 0 : index
    %255 = vector.load %arg16[%c0_236, %c0_237, %c0_238] : memref<1x4x128xf32, #tpu.memory_space<vmem>>, vector<1x4x128xf32>
    %256 = vector.shape_cast %255 : vector<1x4x128xf32> to vector<4x128xf32>
    %257 = vector.shape_cast %254 : vector<4x128xf32> to vector<1x4x128xf32>
    tpu.vector_store %arg16[%c0_236, %c0_237, %c0_238], %257 {strides = array<i32>} : memref<1x4x128xf32, #tpu.memory_space<vmem>>, vector<1x4x128xf32>,
    return
  }
  func.func @transform_0(%arg0: i32) -> (i32, i32, i32) {
    %c0_i32 = arith.constant 0 : i32
    %c0_i32_0 = arith.constant 0 : i32
    %c0_i32_1 = arith.constant 0 : i32
    return %arg0, %c0_i32, %c0_i32_0 : i32, i32, i32
  }
  func.func @transform_1(%arg0: i32) -> (i32, i32) {
    %c0_i32 = arith.constant 0 : i32
    %c0_i32_0 = arith.constant 0 : i32
    %c0_i32_1 = arith.constant 0 : i32
    return %c0_i32, %c0_i32_0 : i32, i32
  }
  func.func @transform_2(%arg0: i32) -> (i32, i32) {
    %c0_i32 = arith.constant 0 : i32
    %c0_i32_0 = arith.constant 0 : i32
    %c0_i32_1 = arith.constant 0 : i32
    return %c0_i32, %c0_i32_0 : i32, i32
  }
  func.func @transform_3(%arg0: i32) -> (i32, i32, i32) {
    %c0_i32 = arith.constant 0 : i32
    %c0_i32_0 = arith.constant 0 : i32
    %c0_i32_1 = arith.constant 0 : i32
    %c0_i32_2 = arith.constant 0 : i32
    return %c0_i32, %c0_i32_0, %c0_i32_1 : i32, i32, i32
  }
  func.func @transform_4(%arg0: i32) -> (i32, i32, i32) {
    %c0_i32 = arith.constant 0 : i32
    %c0_i32_0 = arith.constant 0 : i32
    %c0_i32_1 = arith.constant 0 : i32
    %c0_i32_2 = arith.constant 0 : i32
    return %c0_i32, %c0_i32_0, %c0_i32_1 : i32, i32, i32
  }
  func.func @transform_5(%arg0: i32) -> (i32, i32) {
    %c0_i32 = arith.constant 0 : i32
    %c0_i32_0 = arith.constant 0 : i32
    %c0_i32_1 = arith.constant 0 : i32
    return %c0_i32, %c0_i32_0 : i32, i32
  }
  func.func @transform_6(%arg0: i32) -> (i32, i32, i32) {
    %c0_i32 = arith.constant 0 : i32
    %c0_i32_0 = arith.constant 0 : i32
    %c0_i32_1 = arith.constant 0 : i32
    %c0_i32_2 = arith.constant 0 : i32
    return %c0_i32, %c0_i32_0, %c0_i32_1 : i32, i32, i32
  }
  func.func @transform_7(%arg0: i32) -> (i32, i32, i32) {
    %c0_i32 = arith.constant 0 : i32
    %c0_i32_0 = arith.constant 0 : i32
    %c0_i32_1 = arith.constant 0 : i32
    %c0_i32_2 = arith.constant 0 : i32
    return %c0_i32, %c0_i32_0, %c0_i32_1 : i32, i32, i32
  }
  func.func @transform_8(%arg0: i32) -> (i32, i32) {
    %c0_i32 = arith.constant 0 : i32
    %c0_i32_0 = arith.constant 0 : i32
    %c0_i32_1 = arith.constant 0 : i32
    return %c0_i32, %c0_i32_0 : i32, i32
  }
  func.func @transform_9(%arg0: i32) -> (i32, i32, i32) {
    %c0_i32 = arith.constant 0 : i32
    %c0_i32_0 = arith.constant 0 : i32
    %c0_i32_1 = arith.constant 0 : i32
    %c0_i32_2 = arith.constant 0 : i32
    return %c0_i32, %c0_i32_0, %c0_i32_1 : i32, i32, i32
  }
  func.func @transform_10(%arg0: i32) -> (i32, i32, i32) {
    %c0_i32 = arith.constant 0 : i32
    %c0_i32_0 = arith.constant 0 : i32
    %c0_i32_1 = arith.constant 0 : i32
    %c0_i32_2 = arith.constant 0 : i32
    return %c0_i32, %c0_i32_0, %c0_i32_1 : i32, i32, i32
  }
  func.func @transform_11(%arg0: i32) -> (i32, i32) {
    %c0_i32 = arith.constant 0 : i32
    %c0_i32_0 = arith.constant 0 : i32
    %c0_i32_1 = arith.constant 0 : i32
    return %c0_i32, %c0_i32_0 : i32, i32
  }
  func.func @transform_12(%arg0: i32) -> (i32, i32, i32) {
    %c0_i32 = arith.constant 0 : i32
    %c0_i32_0 = arith.constant 0 : i32
    %c0_i32_1 = arith.constant 0 : i32
    return %arg0, %c0_i32, %c0_i32_0 : i32, i32, i32
  }
  func.func @transform_13(%arg0: i32) -> (i32, i32, i32) {
    %c0_i32 = arith.constant 0 : i32
    %c0_i32_0 = arith.constant 0 : i32
    %c0_i32_1 = arith.constant 0 : i32
    return %arg0, %c0_i32, %c0_i32_0 : i32, i32, i32
  }
  func.func @transform_14(%arg0: i32) -> (i32, i32, i32) {
    %c0_i32 = arith.constant 0 : i32
    %c0_i32_0 = arith.constant 0 : i32
    %c0_i32_1 = arith.constant 0 : i32
    return %arg0, %c0_i32, %c0_i32_0 : i32, i32, i32
  }
  func.func @transform_15(%arg0: i32) -> (i32, i32, i32) {
    %c0_i32 = arith.constant 0 : i32
    %c0_i32_0 = arith.constant 0 : i32
    %c0_i32_1 = arith.constant 0 : i32
    return %arg0, %c0_i32, %c0_i32_0 : i32, i32, i32
  }
}

</mosaic_0001>

<llo_original>
// kernel: cnn_encoder_forward.2
$region0: #{cnn_encoder_forward.2}
  #allocation0 [shape = 'u32[]', space=smem, size = 0x4, offset = 0x4, fixed_abs, tag = 'smem constant byte address 0x4 - core index']
  #allocation1 [shape = 'u32[144,128]{1,0:T(1,128)}', space=vmem, size = 0x12000, scoped, tag = 'internal scratch']
  %s0 = inlined_call_operand.vmem [shape: bf16[8,27], index: 0, kind: input, shape index: {}]
  %s1 = inlined_call_operand.vmem [shape: f32[8,1], index: 1, kind: input, shape index: {}]
  %s2 = inlined_call_operand.vmem [shape: bf16[27,2048], index: 2, kind: input, shape index: {}]
  %s3 = inlined_call_operand.vmem [shape: bf16[8,2048], index: 3, kind: output, shape index: {}]
  %s4 = sld [smem:[#allocation0]]
  $region68: #{cnn_encoder_forward.2} parent=0
    _
  %s6 = ssub.s32 1, %s4
  %s7 = scalar_select 0, %s6, %s4
  $region1: #{cnn_encoder_forward.2} parent=0
    #allocation2 [shape = 'u8[65536]{0}', space=vmem, size = 0x10000, scoped, tag = 'input window, operand 2']
    loop: start=0, step=1, limit=6
    $region2: #{cnn_encoder_forward.2} parent=1 // loop_pre_header
      _
    $region3: #{cnn_encoder_forward.2} parent=1 // loop_header
      %s9 = sphi 0, %s13
      %p10 = scmp.ge.s32.totalorder %s9, 6
      %s17 = sphi 0, %s17
      %s19 = sphi 0, %s17
      %s20 = sphi 0, %s19
      %s34 = sphi 0, %s20
      %s38 = sphi 0, %s38
      %s40 = sphi 0, %s38
      %s41 = sphi 0, %s40
      %s55 = sphi 0, %s41
      %s61 = sphi 0, %s63
      %s64 = sphi 0, %s61
      %s65 = sphi 0, %s64
      %s81 = sphi 0, %s65
      %s87 = sphi 0, %s89
      %s90 = sphi 0, %s87
      %s91 = sphi 0, %s90
      %s107 = sphi 0, %s91
    $region4: #{cnn_encoder_forward.2} parent=1 // loop_header_branch
      %12 = sbr.rel (%p10) target = $region8
    $region5: #{cnn_encoder_forward.2} parent=1 // loop_body
      %s14 = ssub.s32 %s9, 1
      %s15 = ssub.s32 %s9, 2
      %s16 = sadd.s32 %s9, 1
      %s18 = sadd.s32 %s17, 1
      %p21 = scmp.eq.s32.totalorder %s9, 3
      %p22 = scmp.ne.s32.totalorder %s17, %s19
      %p23 = scmp.eq.s32.totalorder %s9, 0
      %p24 = por %p22, %p23
      %p25 = scmp.ne.s32.totalorder %s17, %s19
      %p26 = scmp.eq.s32.totalorder %s14, 3
      %p27 = por %p25, %p26
      %p28 = scmp.ne.s32.totalorder %s19, %s20
      %p29 = scmp.eq.s32.totalorder %s14, 0
      %p30 = por %p28, %p29
      %p31 = scmp.ne.s32.totalorder %s19, %s20
      %p32 = scmp.eq.s32.totalorder %s15, 3
      %p33 = por %p31, %p32
      %p35 = scmp.ne.s32.totalorder %s20, %s34
      %p36 = scmp.eq.s32.totalorder %s15, 0
      %p37 = por %p35, %p36
      %s39 = sadd.s32 %s38, 1
      %p42 = scmp.eq.s32.totalorder %s9, 3
      %p43 = scmp.ne.s32.totalorder %s38, %s40
      %p44 = scmp.eq.s32.totalorder %s9, 0
      %p45 = por %p43, %p44
      %p46 = scmp.ne.s32.totalorder %s38, %s40
      %p47 = scmp.eq.s32.totalorder %s14, 3
      %p48 = por %p46, %p47
      %p49 = scmp.ne.s32.totalorder %s40, %s41
      %p50 = scmp.eq.s32.totalorder %s14, 0
      %p51 = por %p49, %p50
      %p52 = scmp.ne.s32.totalorder %s40, %s41
      %p53 = scmp.eq.s32.totalorder %s15, 3
      %p54 = por %p52, %p53
      %p56 = scmp.ne.s32.totalorder %s41, %s55
      %p57 = scmp.eq.s32.totalorder %s15, 0
      %p58 = por %p56, %p57
      %s59 = ssub.s32 %s9, %s16
      %p60 = scmp.eq.s32.totalorder %s59, 0
      %s62 = sadd.s32 %s61, 1
      %s63 = scalar_select %p60, %s61, %s62
      %p66 = pneg %p60
      %p67 = scmp.eq.s32.totalorder %s9, 3
      %p68 = por %p66, %p67
      %p69 = scmp.ne.s32.totalorder %s61, %s64
      %p70 = scmp.eq.s32.totalorder %s9, 0
      %p71 = por %p69, %p70
      %p72 = scmp.ne.s32.totalorder %s61, %s64
      %p73 = scmp.eq.s32.totalorder %s14, 3
      %p74 = por %p72, %p73
      %p75 = scmp.ne.s32.totalorder %s64, %s65
      %p76 = scmp.eq.s32.totalorder %s14, 0
      %p77 = por %p75, %p76
      %p78 = scmp.ne.s32.totalorder %s64, %s65
      %p79 = scmp.eq.s32.totalorder %s15, 3
      %p80 = por %p78, %p79
      %p82 = scmp.ne.s32.totalorder %s65, %s81
      %p83 = scmp.eq.s32.totalorder %s15, 0
      %p84 = por %p82, %p83
      %s85 = ssub.s32 %s9, %s16
      %p86 = scmp.eq.s32.totalorder %s85, 0
      %s88 = sadd.s32 %s87, 1
      %s89 = scalar_select %p86, %s87, %s88
      %p92 = pneg %p86
      %p93 = scmp.eq.s32.totalorder %s9, 3
      %p94 = por %p92, %p93
      %p95 = scmp.ne.s32.totalorder %s87, %s90
      %p96 = scmp.eq.s32.totalorder %s9, 0
      %p97 = por %p95, %p96
      %p98 = scmp.ne.s32.totalorder %s87, %s90
      %p99 = scmp.eq.s32.totalorder %s14, 3
      %p100 = por %p98, %p99
      %p101 = scmp.ne.s32.totalorder %s90, %s91
      %p102 = scmp.eq.s32.totalorder %s14, 0
      %p103 = por %p101, %p102
      %p104 = scmp.ne.s32.totalorder %s90, %s91
      %p105 = scmp.eq.s32.totalorder %s15, 3
      %p106 = por %p104, %p105
      %p108 = scmp.ne.s32.totalorder %s91, %s107
      %p109 = scmp.eq.s32.totalorder %s15, 0
      %p110 = por %p108, %p109
      %p111 = scmp.le.s32.totalorder 1, %s9
      %p112 = scmp.lt.s32.totalorder %s9, 5
      %p113 = pnand %p111, %p112
      %p114 = pneg %p113
      // Predicated region
      $region9: #{cnn_encoder_forward.2} parent=5 // pred_check
        _
      $region10: #{cnn_encoder_forward.2} parent=5 // pred_check_branch
        %116 = sbr.rel (%p113) target = $region12
      $region11: #{cnn_encoder_forward.2} parent=5 // pred_region
        %s117 = ssub.s32 %s9, 1
        // Predicated region
        $region13: #{cnn_encoder_forward.2} parent=11 // pred_check
          %p118 = pneg %p30
        $region14: #{cnn_encoder_forward.2} parent=11 // pred_check_branch
          %120 = sbr.rel (%p118) target = $region16
        $region15: #{cnn_encoder_forward.2} parent=11 // pred_region
          _
        $region16: #{cnn_encoder_forward.2} parent=11 // pred_fallthru
          _
        // Predicated region
        $region17: #{cnn_encoder_forward.2} parent=11 // pred_check
          %p121 = pneg %p51
        $region18: #{cnn_encoder_forward.2} parent=11 // pred_check_branch
          %123 = sbr.rel (%p121) target = $region20
        $region19: #{cnn_encoder_forward.2} parent=11 // pred_region
          _
        $region20: #{cnn_encoder_forward.2} parent=11 // pred_fallthru
          _
      $region12: #{cnn_encoder_forward.2} parent=5 // pred_fallthru
        _
      %p124 = scmp.lt.s32.totalorder %s9, 4
      // Predicated region
      $region21: #{cnn_encoder_forward.2} parent=5 // pred_check
        %p125 = pneg %p124
      $region22: #{cnn_encoder_forward.2} parent=5 // pred_check_branch
        %127 = sbr.rel (%p125) target = $region24
      $region23: #{cnn_encoder_forward.2} parent=5 // pred_region
        // Predicated region
        $region25: #{cnn_encoder_forward.2} parent=23 // pred_check
          %p128 = pneg %p71
        $region26: #{cnn_encoder_forward.2} parent=23 // pred_check_branch
          %130 = sbr.rel (%p128) target = $region28
        $region27: #{cnn_encoder_forward.2} parent=23 // pred_region
          %s131 = sand.u32 %s61, 1
          %s132 = sand.u32 %s61, 1
          %s133 = smul.addr %s132, 64
          %s134 = scalar_lea.vmem [#allocation2], %s133
          %s135 = smul.u32 4, %s9
          %s136 = smul.addr %s135, 4
          %s137 = scalar_lea.vmem %s2, %s136
          // Predicated region
          $region29: #{cnn_encoder_forward.2} parent=27 // pred_check
            _
          $region30: #{cnn_encoder_forward.2} parent=27 // pred_check_branch
            %139 = sbr.rel (0) target = $region32
          $region31: #{cnn_encoder_forward.2} parent=27 // pred_region
            // Predicated region
            $region33: #{cnn_encoder_forward.2} parent=31 // pred_check
              _
            $region34: #{cnn_encoder_forward.2} parent=31 // pred_check_branch
              %141 = sbr.rel (0) target = $region36
            $region35: #{cnn_encoder_forward.2} parent=31 // pred_region
              loop: start=0, step=1, limit=1
              $region37: #{cnn_encoder_forward.2} parent=35 // loop_pre_header
                _
              $region38: #{cnn_encoder_forward.2} parent=35 // loop_header
                %s143 = sphi 0, %s147
                %p144 = scmp.ge.s32.totalorder %s143, 1
                %s148 = sphi %s137, %s137
                %s149 = sphi %s134, %s134
              $region39: #{cnn_encoder_forward.2} parent=35 // loop_header_branch
                %146 = sbr.rel (%p144) target = $region43
              $region40: #{cnn_encoder_forward.2} parent=35 // loop_body
                %v150 = vld [vmem:[%s148] sm:$0xff]
                %151 = vst [vmem:[%s149] sm:$0xff] %v150
                %v152 = vld [vmem:[%s148 + $0x8] sm:$0xff]
                %153 = vst [vmem:[%s149 + $0x8] sm:$0xff] %v152
                %v154 = vld [vmem:[%s148 + $0x40] sm:$0xff]
                %155 = vst [vmem:[%s149 + $0x10] sm:$0xff] %v154
                %v156 = vld [vmem:[%s148 + $0x48] sm:$0xff]
                %157 = vst [vmem:[%s149 + $0x18] sm:$0xff] %v156
                %v158 = vld [vmem:[%s148 + $0x80] sm:$0xff]
                %159 = vst [vmem:[%s149 + $0x20] sm:$0xff] %v158
                %v160 = vld [vmem:[%s148 + $0x88] sm:$0xff]
                %161 = vst [vmem:[%s149 + $0x28] sm:$0xff] %v160
                %v162 = vld [vmem:[%s148 + $0xc0] sm:$0xff]
                %163 = vst [vmem:[%s149 + $0x30] sm:$0xff] %v162
                %v164 = vld [vmem:[%s148 + $0xc8] sm:$0xff]
                %165 = vst [vmem:[%s149 + $0x38] sm:$0xff] %v164
              $region41: #{cnn_encoder_forward.2} parent=35 // loop_footer
                %s147 = sadd.s32 1, %s143
              $region42: #{cnn_encoder_forward.2} parent=35 // loop_footer_branch
                %142 = sbr.rel target = $region38
              $region43: #{cnn_encoder_forward.2} parent=35 // loop_exit
                _
            $region36: #{cnn_encoder_forward.2} parent=31 // pred_fallthru
              _
            // Predicated region
            $region44: #{cnn_encoder_forward.2} parent=31 // pred_check
              _
            $region45: #{cnn_encoder_forward.2} parent=31 // pred_check_branch
              %167 = sbr.rel target = $region47
            $region46: #{cnn_encoder_forward.2} parent=31 // pred_region
              _
            $region47: #{cnn_encoder_forward.2} parent=31 // pred_fallthru
              _
          $region32: #{cnn_encoder_forward.2} parent=27 // pred_fallthru
            _
          %168 = vnop
        $region28: #{cnn_encoder_forward.2} parent=23 // pred_fallthru
          _
      $region24: #{cnn_encoder_forward.2} parent=5 // pred_fallthru
        _
      %p169 = scmp.le.s32.totalorder 1, %s9
      %p170 = scmp.lt.s32.totalorder %s9, 5
      %p171 = pnand %p169, %p170
      %p172 = pneg %p171
      // Predicated region
      $region48: #{cnn_encoder_forward.2} parent=5 // pred_check
        _
      $region49: #{cnn_encoder_forward.2} parent=5 // pred_check_branch
        %174 = sbr.rel (%p171) target = $region51
      $region50: #{cnn_encoder_forward.2} parent=5 // pred_region
        %s175 = ssub.s32 %s9, 1
        %s176 = sand.u32 %s64, 1
        %s177 = sand.u32 %s64, 1
        %s178 = smul.addr %s177, 64
        %s179 = scalar_lea.vmem [#allocation2], %s178
        // Predicated region
        $region52: #{cnn_encoder_forward.2} parent=50 // pred_check
          %p180 = pneg %p77
        $region53: #{cnn_encoder_forward.2} parent=50 // pred_check_branch
          %182 = sbr.rel (%p180) target = $region55
        $region54: #{cnn_encoder_forward.2} parent=50 // pred_region
          _
        $region55: #{cnn_encoder_forward.2} parent=50 // pred_fallthru
          _
        %p183 = pneg %p30
        %p184 = pneg %p27
        %p185 = pneg %p51
        %p186 = pneg %p48
        %s187 = sand.u32 %s64, 1
        %s188 = sand.u32 %s64, 1
        %s189 = smul.addr %s188, 64
        %s190 = scalar_lea.vmem [#allocation2], %s189
        %p191 = pneg %p77
        %p192 = pneg %p74
        %p193 = pneg %p103
        %p194 = pneg %p100
        %s195 = smul.u32 4, %s14
        %p196 = scmp.lt.s32.totalorder %s195, 15
        %s197 = scalar_select %p196, %s195, 15
        %s198 = smul.addr %s197, 4
        %s199 = scalar_lea.vmem %s3, %s198
        %s200 = smul.u32 4, %s14
        %s201 = smul.u32 4, %s14
        %p202 = scmp.lt.s32.totalorder %s201, 15
        %s203 = scalar_select %p202, %s201, 15
        %s204 = smul.addr %s203, 4
        %s205 = scalar_lea.vmem %s3, %s204
        %s206 = smul.u32 4, %s14
        %v208 = vld [vmem:[%s0] sm:$0xf]
        %v209 = vld [vmem:[%s179] sm:$0xff]
        %v210 = vld [vmem:[%s179 + $0x8] sm:$0xff]
        %v211 = vld [vmem:[%s179 + $0x10] sm:$0xff]
        %v212 = vld [vmem:[%s179 + $0x18] sm:$0xff]
        %v213 = vld [vmem:[%s179 + $0x20] sm:$0xff]
        %v214 = vld [vmem:[%s179 + $0x28] sm:$0xff]
        %v215 = vld [vmem:[%s179 + $0x30] sm:$0x33]
        %v216 = vld [vmem:[%s179 + $0x38] sm:$0x33]
        %v217 = vld [vmem:[%s1] sm:$0xff]
        %219 = vset.pattern.permute.xlu0 0
        %220 = vperm.xlu0 %219, %v217
        %v221 = vpop.permute.xlu0 %220
        %v231 = vunpack.c.l.b16 %v209
        %v232 = vunpack.c.h.b16 %v209
        %v233 = vunpack.c.l.b16 %v210
        %v234 = vunpack.c.h.b16 %v210
        %v235 = vunpack.c.l.b16 %v211
        %v236 = vunpack.c.h.b16 %v211
        %v237 = vunpack.c.l.b16 %v212
        %v238 = vunpack.c.h.b16 %v212
        %v239 = vunpack.c.l.b16 %v213
        %v240 = vunpack.c.h.b16 %v213
        %v241 = vunpack.c.l.b16 %v214
        %v242 = vunpack.c.h.b16 %v214
        %v243 = vunpack.c.l.b16 %v215
        %v244 = vunpack.c.h.b16 %v215
        %v245 = vunpack.c.l.b16 %v216
        %v246 = vunpack.c.h.b16 %v216
        %v247 = vpack.c.b16 %v235, %v231
        %v248 = vpack.c.b16 %v236, %v232
        %v249 = vpack.c.b16 %v237, %v233
        %v250 = vpack.c.b16 %v238, %v234
        %v251 = vpack.c.b16 %v243, %v239
        %v252 = vpack.c.b16 %v244, %v240
        %v253 = vpack.c.b16 %v245, %v241
        %v254 = vpack.c.b16 %v246, %v242
        %vm259 = vcmask 220160
        %v261 = vsel %vm259, %v208, 0
        %vm263 = vcmask 1044480
        %vm264 = vcmask 1045504
        %v265 = vsel %vm263, 4294967295, 65535
        %v266 = vsel %vm264, %v265, 0
        %v268 = vand.u32 %v251, %v266
        %v271 = vand.u32 %v252, %v266
        %v274 = vand.u32 %v253, %v266
        %v277 = vand.u32 %v254, %v266
        %279 = vmatprep.subr.bf16.mxu0 0
        %280 = vmatpush1.bf16.msra.mxu0 0
        %281 = vmatprep.subr.bf16.mxu0 0
        %282 = vmatpush1.bf16.msra.mxu0 0
        %283 = vmatprep.subr.bf16.mxu0 0
        %284 = vmatpush1.bf16.msra.mxu0 0
        %285 = vmatprep.subr.bf16.mxu0 0
        %286 = vmatpush1.bf16.msra.mxu0 0
        %287 = vmatprep.subr.bf16.mxu0 0
        %288 = vmatpush1.bf16.msra.mxu0 0
        %289 = vmatprep.subr.bf16.mxu0 0
        %290 = vmatpush1.bf16.msra.mxu0 0
        %291 = vmatprep.subr.bf16.mxu0 %v271
        %292 = vmatpush1.bf16.msra.mxu0 %v268
        %293 = vmatprep.subr.bf16.mxu0 %v248
        %294 = vmatpush1.bf16.msra.mxu0 %v247
        %295 = vmatprep.subr.bf16.mxu0 0
        %296 = vmatpush2.bf16.msra.mxu0 0
        %297 = vmatprep.subr.bf16.mxu0 0
        %298 = vmatpush2.bf16.msra.mxu0 0
        %299 = vmatprep.subr.bf16.mxu0 0
        %300 = vmatpush2.bf16.msra.mxu0 0
        %301 = vmatprep.subr.bf16.mxu0 0
        %302 = vmatpush2.bf16.msra.mxu0 0
        %303 = vmatprep.subr.bf16.mxu0 0
        %304 = vmatpush2.bf16.msra.mxu0 0
        %305 = vmatprep.subr.bf16.mxu0 0
        %306 = vmatpush2.bf16.msra.mxu0 0
        %307 = vmatprep.subr.bf16.mxu0 0
        %308 = vmatpush2.bf16.msra.mxu0 0
        %309 = vmatprep.subr.bf16.mxu0 0
        %310 = vmatpush2.bf16.msra.mxu0 0
        %311 = vmatprep.mubr.bf16.mxu0 0
        %312 = vmatmul.mubr.bf16.gmra.mxu0 %v261
        %v313 = vpop.f32.mrf.mxu0
        %v314 = vadd.f32 %v221, %v313
        %v315 = vpop.f32.mrf.mxu0
        %v316 = vadd.f32 %v221, %v315
        %v317 = vpop.f32.mrf.mxu0
        %v318 = vpop.f32.mrf.mxu0
        %319 = vdwg.mxu0
        %320 = vmatprep.subr.bf16.mxu0 0
        %321 = vmatpush1.bf16.msra.mxu0 0
        %322 = vmatprep.subr.bf16.mxu0 0
        %323 = vmatpush1.bf16.msra.mxu0 0
        %324 = vmatprep.subr.bf16.mxu0 0
        %325 = vmatpush1.bf16.msra.mxu0 0
        %326 = vmatprep.subr.bf16.mxu0 0
        %327 = vmatpush1.bf16.msra.mxu0 0
        %328 = vmatprep.subr.bf16.mxu0 0
        %329 = vmatpush1.bf16.msra.mxu0 0
        %330 = vmatprep.subr.bf16.mxu0 0
        %331 = vmatpush1.bf16.msra.mxu0 0
        %332 = vmatprep.subr.bf16.mxu0 %v277
        %333 = vmatpush1.bf16.msra.mxu0 %v274
        %334 = vmatprep.subr.bf16.mxu0 %v250
        %335 = vmatpush1.bf16.msra.mxu0 %v249
        %336 = vmatprep.subr.bf16.mxu0 0
        %337 = vmatpush2.bf16.msra.mxu0 0
        %338 = vmatprep.subr.bf16.mxu0 0
        %339 = vmatpush2.bf16.msra.mxu0 0
        %340 = vmatprep.subr.bf16.mxu0 0
        %341 = vmatpush2.bf16.msra.mxu0 0
        %342 = vmatprep.subr.bf16.mxu0 0
        %343 = vmatpush2.bf16.msra.mxu0 0
        %344 = vmatprep.subr.bf16.mxu0 0
        %345 = vmatpush2.bf16.msra.mxu0 0
        %346 = vmatprep.subr.bf16.mxu0 0
        %347 = vmatpush2.bf16.msra.mxu0 0
        %348 = vmatprep.subr.bf16.mxu0 0
        %349 = vmatpush2.bf16.msra.mxu0 0
        %350 = vmatprep.subr.bf16.mxu0 0
        %351 = vmatpush2.bf16.msra.mxu0 0
        %352 = vmatprep.mubr.bf16.mxu0 0
        %353 = vmatmul.mubr.bf16.gmra.mxu0 %v261
        %v354 = vpop.f32.mrf.mxu0
        %v355 = vadd.f32 %v221, %v354
        %v356 = vpop.f32.mrf.mxu0
        %v357 = vadd.f32 %v221, %v356
        %v358 = vpop.f32.mrf.mxu0
        %v359 = vpop.f32.mrf.mxu0
        %360 = vdwg.mxu0
        %v361 = vmax.f32 %v314, 0.0
        %v362 = vmax.f32 %v316, 0.0
        %v363 = vmax.f32 %v355, 0.0
        %v364 = vmax.f32 %v357, 0.0
        %v365 = vpack.c.bf16 %v361, %v361
        %v366 = vpack.c.bf16 %v362, %v362
        %v367 = vpack.c.bf16 %v363, %v363
        %v368 = vpack.c.bf16 %v364, %v364
        %v373 = vunpack.c.l.b16 %v365
        %v374 = vunpack.c.l.b16 %v366
        %v375 = vunpack.c.l.b16 %v367
        %v376 = vunpack.c.l.b16 %v368
        %v377 = vpack.c.b16 %v374, %v373
        %v378 = vpack.c.b16 %v376, %v375
        %381 = vst [vmem:[%s205] sm:$0xff] %v377
        %382 = vst [vmem:[%s205 + $0x8] sm:$0xff] %v378
        %s383 = smul.u32 4, %s14
        %p384 = scmp.lt.s32.totalorder %s383, 15
        %s385 = scalar_select %p384, %s383, 15
        %s386 = smul.addr %s385, 4
        %s387 = scalar_lea.vmem %s3, %s386
        // Predicated region
        $region56: #{cnn_encoder_forward.2} parent=50 // pred_check
          %p388 = pneg %p100
        $region57: #{cnn_encoder_forward.2} parent=50 // pred_check_branch
          %390 = sbr.rel (%p388) target = $region59
        $region58: #{cnn_encoder_forward.2} parent=50 // pred_region
          %s391 = smul.u32 4, %s14
        $region59: #{cnn_encoder_forward.2} parent=50 // pred_fallthru
          _
      $region51: #{cnn_encoder_forward.2} parent=5 // pred_fallthru
        _
      %p392 = scmp.le.s32.totalorder 2, %s9
      // Predicated region
      $region60: #{cnn_encoder_forward.2} parent=5 // pred_check
        %p393 = pneg %p392
      $region61: #{cnn_encoder_forward.2} parent=5 // pred_check_branch
        %395 = sbr.rel (%p393) target = $region63
      $region62: #{cnn_encoder_forward.2} parent=5 // pred_region
        %s396 = ssub.s32 %s9, 2
        // Predicated region
        $region64: #{cnn_encoder_forward.2} parent=62 // pred_check
          %p397 = pneg %p106
        $region65: #{cnn_encoder_forward.2} parent=62 // pred_check_branch
          %399 = sbr.rel (%p397) target = $region67
        $region66: #{cnn_encoder_forward.2} parent=62 // pred_region
          %s400 = smul.u32 4, %s15
          %p401 = scmp.lt.s32.totalorder %s400, 15
          %s402 = scalar_select %p401, %s400, 15
          %s403 = smul.addr %s402, 4
          %s404 = scalar_lea.vmem %s3, %s403
        $region67: #{cnn_encoder_forward.2} parent=62 // pred_fallthru
          _
      $region63: #{cnn_encoder_forward.2} parent=5 // pred_fallthru
        _
    $region6: #{cnn_encoder_forward.2} parent=1 // loop_footer
      %s13 = sadd.s32 1, %s9
    $region7: #{cnn_encoder_forward.2} parent=1 // loop_footer_branch
      %8 = sbr.rel target = $region3
    $region8: #{cnn_encoder_forward.2} parent=1 // loop_exit
      _

// kernel: cnn_encoder_forward.3
$region0: #{cnn_encoder_forward.3}
  #allocation0 [shape = 'u32[]', space=smem, size = 0x4, offset = 0x4, fixed_abs, tag = 'smem constant byte address 0x4 - core index']
  #allocation1 [shape = 'u32[144,128]{1,0:T(1,128)}', space=vmem, size = 0x12000, scoped, tag = 'internal scratch']
  %s0 = inlined_call_operand.vmem [shape: bf16[2,256,72], index: 0, kind: input, shape index: {}]
  %s1 = inlined_call_operand.vmem [shape: bf16[72,16], index: 1, kind: input, shape index: {}]
  %s2 = inlined_call_operand.vmem [shape: f32[1,16], index: 2, kind: input, shape index: {}]
  %s3 = inlined_call_operand.vmem [shape: bf16[9,64,256], index: 3, kind: input, shape index: {}]
  %s4 = inlined_call_operand.vmem [shape: bf16[9,16,32], index: 4, kind: input, shape index: {}]
  %s5 = inlined_call_operand.vmem [shape: f32[1,32], index: 5, kind: input, shape index: {}]
  %s6 = inlined_call_operand.vmem [shape: bf16[9,16,64], index: 6, kind: input, shape index: {}]
  %s7 = inlined_call_operand.vmem [shape: bf16[9,32,64], index: 7, kind: input, shape index: {}]
  %s8 = inlined_call_operand.vmem [shape: f32[1,64], index: 8, kind: input, shape index: {}]
  %s9 = inlined_call_operand.vmem [shape: bf16[9,4,16], index: 9, kind: input, shape index: {}]
  %s10 = inlined_call_operand.vmem [shape: bf16[9,64,128], index: 10, kind: input, shape index: {}]
  %s11 = inlined_call_operand.vmem [shape: f32[1,128], index: 11, kind: input, shape index: {}]
  %s12 = inlined_call_operand.vmem [shape: f32[2,256,16], index: 12, kind: output, shape index: {0}]
  %s13 = inlined_call_operand.vmem [shape: f32[2,64,32], index: 13, kind: output, shape index: {1}]
  %s14 = inlined_call_operand.hbm [shape: f32[2,16,64], index: 14, kind: output, shape index: {2}]
  %s15 = inlined_call_operand.hbm [shape: f32[2,4,128], index: 15, kind: output, shape index: {3}]
  %16 = xla_tuple %s12, %s13, %s14, %s15
  %s17 = sld [smem:[#allocation0]]
  $region105: #{cnn_encoder_forward.3} parent=0
    _
  %s19 = ssub.s32 1, %s17
  %s20 = scalar_select 0, %s19, %s17
  $region1: #{cnn_encoder_forward.3} parent=0
    #allocation2 [shape = 'u8[16384]{0}', space=vmem, size = 0x4000, scoped, tag = 'output window, operand 2']
    #allocation3 [shape = 's32[2]{0}', space=sflag, size = 0x8, scoped, tag = 'scoped memory for cnn_encoder_forward.3']
    #allocation4 [shape = 'u8[4096]{0}', space=vmem, size = 0x1000, scoped, tag = 'output window, operand 3']
    #allocation5 [shape = 's32[2]{0}', space=sflag, size = 0x8, scoped, tag = 'scoped memory for cnn_encoder_forward.3']
    %21 = vsyncpa [#allocation3], 0
    %s22 = scalar_lea.sflag [#allocation3], 1
    %23 = vsyncpa %s22, 0
    %24 = vsyncpa [#allocation5], 0
    %s25 = scalar_lea.sflag [#allocation5], 1
    %26 = vsyncpa %s25, 0
    loop: start=0, step=1, limit=4
    $region2: #{cnn_encoder_forward.3} parent=1 // loop_pre_header
      _
    $region3: #{cnn_encoder_forward.3} parent=1 // loop_header
      %s28 = sphi 0, %s32
      %p29 = scmp.ge.s32.totalorder %s28, 4
      %s38 = sphi 0, %s40
      %s41 = sphi 0, %s38
      %s42 = sphi 0, %s41
      %s58 = sphi 0, %s42
      %s62 = sphi 0, %s62
      %s64 = sphi 0, %s62
      %s65 = sphi 0, %s64
      %s79 = sphi 0, %s65
      %s83 = sphi 0, %s83
      %s85 = sphi 0, %s83
      %s86 = sphi 0, %s85
      %s100 = sphi 0, %s86
      %s104 = sphi 0, %s104
      %s106 = sphi 0, %s104
      %s107 = sphi 0, %s106
      %s121 = sphi 0, %s107
      %s125 = sphi 0, %s125
      %s127 = sphi 0, %s125
      %s128 = sphi 0, %s127
      %s142 = sphi 0, %s128
      %s146 = sphi 0, %s146
      %s148 = sphi 0, %s146
      %s149 = sphi 0, %s148
      %s163 = sphi 0, %s149
      %s167 = sphi 0, %s167
      %s169 = sphi 0, %s167
      %s170 = sphi 0, %s169
      %s184 = sphi 0, %s170
      %s188 = sphi 0, %s188
      %s190 = sphi 0, %s188
      %s191 = sphi 0, %s190
      %s205 = sphi 0, %s191
      %s209 = sphi 0, %s209
      %s211 = sphi 0, %s209
      %s212 = sphi 0, %s211
      %s226 = sphi 0, %s212
      %s230 = sphi 0, %s230
      %s232 = sphi 0, %s230
      %s233 = sphi 0, %s232
      %s247 = sphi 0, %s233
      %s251 = sphi 0, %s251
      %s253 = sphi 0, %s251
      %s254 = sphi 0, %s253
      %s268 = sphi 0, %s254
      %s272 = sphi 0, %s272
      %s274 = sphi 0, %s272
      %s275 = sphi 0, %s274
      %s289 = sphi 0, %s275
      %s295 = sphi 0, %s297
      %s298 = sphi 0, %s295
      %s299 = sphi 0, %s298
      %s315 = sphi 0, %s299
      %s321 = sphi 0, %s323
      %s324 = sphi 0, %s321
      %s325 = sphi 0, %s324
      %s341 = sphi 0, %s325
      %s347 = sphi 0, %s349
      %s350 = sphi 0, %s347
      %s351 = sphi 0, %s350
      %s367 = sphi 0, %s351
      %s373 = sphi 0, %s375
      %s376 = sphi 0, %s373
      %s377 = sphi 0, %s376
      %s393 = sphi 0, %s377
    $region4: #{cnn_encoder_forward.3} parent=1 // loop_header_branch
      %31 = sbr.rel (%p29) target = $region8
    $region5: #{cnn_encoder_forward.3} parent=1 // loop_body
      %s33 = ssub.s32 %s28, 1
      %s34 = ssub.s32 %s28, 2
      %s35 = sadd.s32 %s28, 1
      %s36 = ssub.s32 %s28, %s35
      %p37 = scmp.eq.s32.totalorder %s36, 0
      %s39 = sadd.s32 %s38, 1
      %s40 = scalar_select %p37, %s38, %s39
      %p43 = pneg %p37
      %p44 = scmp.eq.s32.totalorder %s28, 1
      %p45 = por %p43, %p44
      %p46 = scmp.ne.s32.totalorder %s38, %s41
      %p47 = scmp.eq.s32.totalorder %s28, 0
      %p48 = por %p46, %p47
      %p49 = scmp.ne.s32.totalorder %s38, %s41
      %p50 = scmp.eq.s32.totalorder %s33, 1
      %p51 = por %p49, %p50
      %p52 = scmp.ne.s32.totalorder %s41, %s42
      %p53 = scmp.eq.s32.totalorder %s33, 0
      %p54 = por %p52, %p53
      %p55 = scmp.ne.s32.totalorder %s41, %s42
      %p56 = scmp.eq.s32.totalorder %s34, 1
      %p57 = por %p55, %p56
      %p59 = scmp.ne.s32.totalorder %s42, %s58
      %p60 = scmp.eq.s32.totalorder %s34, 0
      %p61 = por %p59, %p60
      %s63 = sadd.s32 %s62, 1
      %p66 = scmp.eq.s32.totalorder %s28, 1
      %p67 = scmp.ne.s32.totalorder %s62, %s64
      %p68 = scmp.eq.s32.totalorder %s28, 0
      %p69 = por %p67, %p68
      %p70 = scmp.ne.s32.totalorder %s62, %s64
      %p71 = scmp.eq.s32.totalorder %s33, 1
      %p72 = por %p70, %p71
      %p73 = scmp.ne.s32.totalorder %s64, %s65
      %p74 = scmp.eq.s32.totalorder %s33, 0
      %p75 = por %p73, %p74
      %p76 = scmp.ne.s32.totalorder %s64, %s65
      %p77 = scmp.eq.s32.totalorder %s34, 1
      %p78 = por %p76, %p77
      %p80 = scmp.ne.s32.totalorder %s65, %s79
      %p81 = scmp.eq.s32.totalorder %s34, 0
      %p82 = por %p80, %p81
      %s84 = sadd.s32 %s83, 1
      %p87 = scmp.eq.s32.totalorder %s28, 1
      %p88 = scmp.ne.s32.totalorder %s83, %s85
      %p89 = scmp.eq.s32.totalorder %s28, 0
      %p90 = por %p88, %p89
      %p91 = scmp.ne.s32.totalorder %s83, %s85
      %p92 = scmp.eq.s32.totalorder %s33, 1
      %p93 = por %p91, %p92
      %p94 = scmp.ne.s32.totalorder %s85, %s86
      %p95 = scmp.eq.s32.totalorder %s33, 0
      %p96 = por %p94, %p95
      %p97 = scmp.ne.s32.totalorder %s85, %s86
      %p98 = scmp.eq.s32.totalorder %s34, 1
      %p99 = por %p97, %p98
      %p101 = scmp.ne.s32.totalorder %s86, %s100
      %p102 = scmp.eq.s32.totalorder %s34, 0
      %p103 = por %p101, %p102
      %s105 = sadd.s32 %s104, 1
      %p108 = scmp.eq.s32.totalorder %s28, 1
      %p109 = scmp.ne.s32.totalorder %s104, %s106
      %p110 = scmp.eq.s32.totalorder %s28, 0
      %p111 = por %p109, %p110
      %p112 = scmp.ne.s32.totalorder %s104, %s106
      %p113 = scmp.eq.s32.totalorder %s33, 1
      %p114 = por %p112, %p113
      %p115 = scmp.ne.s32.totalorder %s106, %s107
      %p116 = scmp.eq.s32.totalorder %s33, 0
      %p117 = por %p115, %p116
      %p118 = scmp.ne.s32.totalorder %s106, %s107
      %p119 = scmp.eq.s32.totalorder %s34, 1
      %p120 = por %p118, %p119
      %p122 = scmp.ne.s32.totalorder %s107, %s121
      %p123 = scmp.eq.s32.totalorder %s34, 0
      %p124 = por %p122, %p123
      %s126 = sadd.s32 %s125, 1
      %p129 = scmp.eq.s32.totalorder %s28, 1
      %p130 = scmp.ne.s32.totalorder %s125, %s127
      %p131 = scmp.eq.s32.totalorder %s28, 0
      %p132 = por %p130, %p131
      %p133 = scmp.ne.s32.totalorder %s125, %s127
      %p134 = scmp.eq.s32.totalorder %s33, 1
      %p135 = por %p133, %p134
      %p136 = scmp.ne.s32.totalorder %s127, %s128
      %p137 = scmp.eq.s32.totalorder %s33, 0
      %p138 = por %p136, %p137
      %p139 = scmp.ne.s32.totalorder %s127, %s128
      %p140 = scmp.eq.s32.totalorder %s34, 1
      %p141 = por %p139, %p140
      %p143 = scmp.ne.s32.totalorder %s128, %s142
      %p144 = scmp.eq.s32.totalorder %s34, 0
      %p145 = por %p143, %p144
      %s147 = sadd.s32 %s146, 1
      %p150 = scmp.eq.s32.totalorder %s28, 1
      %p151 = scmp.ne.s32.totalorder %s146, %s148
      %p152 = scmp.eq.s32.totalorder %s28, 0
      %p153 = por %p151, %p152
      %p154 = scmp.ne.s32.totalorder %s146, %s148
      %p155 = scmp.eq.s32.totalorder %s33, 1
      %p156 = por %p154, %p155
      %p157 = scmp.ne.s32.totalorder %s148, %s149
      %p158 = scmp.eq.s32.totalorder %s33, 0
      %p159 = por %p157, %p158
      %p160 = scmp.ne.s32.totalorder %s148, %s149
      %p161 = scmp.eq.s32.totalorder %s34, 1
      %p162 = por %p160, %p161
      %p164 = scmp.ne.s32.totalorder %s149, %s163
      %p165 = scmp.eq.s32.totalorder %s34, 0
      %p166 = por %p164, %p165
      %s168 = sadd.s32 %s167, 1
      %p171 = scmp.eq.s32.totalorder %s28, 1
      %p172 = scmp.ne.s32.totalorder %s167, %s169
      %p173 = scmp.eq.s32.totalorder %s28, 0
      %p174 = por %p172, %p173
      %p175 = scmp.ne.s32.totalorder %s167, %s169
      %p176 = scmp.eq.s32.totalorder %s33, 1
      %p177 = por %p175, %p176
      %p178 = scmp.ne.s32.totalorder %s169, %s170
      %p179 = scmp.eq.s32.totalorder %s33, 0
      %p180 = por %p178, %p179
      %p181 = scmp.ne.s32.totalorder %s169, %s170
      %p182 = scmp.eq.s32.totalorder %s34, 1
      %p183 = por %p181, %p182
      %p185 = scmp.ne.s32.totalorder %s170, %s184
      %p186 = scmp.eq.s32.totalorder %s34, 0
      %p187 = por %p185, %p186
      %s189 = sadd.s32 %s188, 1
      %p192 = scmp.eq.s32.totalorder %s28, 1
      %p193 = scmp.ne.s32.totalorder %s188, %s190
      %p194 = scmp.eq.s32.totalorder %s28, 0
      %p195 = por %p193, %p194
      %p196 = scmp.ne.s32.totalorder %s188, %s190
      %p197 = scmp.eq.s32.totalorder %s33, 1
      %p198 = por %p196, %p197
      %p199 = scmp.ne.s32.totalorder %s190, %s191
      %p200 = scmp.eq.s32.totalorder %s33, 0
      %p201 = por %p199, %p200
      %p202 = scmp.ne.s32.totalorder %s190, %s191
      %p203 = scmp.eq.s32.totalorder %s34, 1
      %p204 = por %p202, %p203
      %p206 = scmp.ne.s32.totalorder %s191, %s205
      %p207 = scmp.eq.s32.totalorder %s34, 0
      %p208 = por %p206, %p207
      %s210 = sadd.s32 %s209, 1
      %p213 = scmp.eq.s32.totalorder %s28, 1
      %p214 = scmp.ne.s32.totalorder %s209, %s211
      %p215 = scmp.eq.s32.totalorder %s28, 0
      %p216 = por %p214, %p215
      %p217 = scmp.ne.s32.totalorder %s209, %s211
      %p218 = scmp.eq.s32.totalorder %s33, 1
      %p219 = por %p217, %p218
      %p220 = scmp.ne.s32.totalorder %s211, %s212
      %p221 = scmp.eq.s32.totalorder %s33, 0
      %p222 = por %p220, %p221
      %p223 = scmp.ne.s32.totalorder %s211, %s212
      %p224 = scmp.eq.s32.totalorder %s34, 1
      %p225 = por %p223, %p224
      %p227 = scmp.ne.s32.totalorder %s212, %s226
      %p228 = scmp.eq.s32.totalorder %s34, 0
      %p229 = por %p227, %p228
      %s231 = sadd.s32 %s230, 1
      %p234 = scmp.eq.s32.totalorder %s28, 1
      %p235 = scmp.ne.s32.totalorder %s230, %s232
      %p236 = scmp.eq.s32.totalorder %s28, 0
      %p237 = por %p235, %p236
      %p238 = scmp.ne.s32.totalorder %s230, %s232
      %p239 = scmp.eq.s32.totalorder %s33, 1
      %p240 = por %p238, %p239
      %p241 = scmp.ne.s32.totalorder %s232, %s233
      %p242 = scmp.eq.s32.totalorder %s33, 0
      %p243 = por %p241, %p242
      %p244 = scmp.ne.s32.totalorder %s232, %s233
      %p245 = scmp.eq.s32.totalorder %s34, 1
      %p246 = por %p244, %p245
      %p248 = scmp.ne.s32.totalorder %s233, %s247
      %p249 = scmp.eq.s32.totalorder %s34, 0
      %p250 = por %p248, %p249
      %s252 = sadd.s32 %s251, 1
      %p255 = scmp.eq.s32.totalorder %s28, 1
      %p256 = scmp.ne.s32.totalorder %s251, %s253
      %p257 = scmp.eq.s32.totalorder %s28, 0
      %p258 = por %p256, %p257
      %p259 = scmp.ne.s32.totalorder %s251, %s253
      %p260 = scmp.eq.s32.totalorder %s33, 1
      %p261 = por %p259, %p260
      %p262 = scmp.ne.s32.totalorder %s253, %s254
      %p263 = scmp.eq.s32.totalorder %s33, 0
      %p264 = por %p262, %p263
      %p265 = scmp.ne.s32.totalorder %s253, %s254
      %p266 = scmp.eq.s32.totalorder %s34, 1
      %p267 = por %p265, %p266
      %p269 = scmp.ne.s32.totalorder %s254, %s268
      %p270 = scmp.eq.s32.totalorder %s34, 0
      %p271 = por %p269, %p270
      %s273 = sadd.s32 %s272, 1
      %p276 = scmp.eq.s32.totalorder %s28, 1
      %p277 = scmp.ne.s32.totalorder %s272, %s274
      %p278 = scmp.eq.s32.totalorder %s28, 0
      %p279 = por %p277, %p278
      %p280 = scmp.ne.s32.totalorder %s272, %s274
      %p281 = scmp.eq.s32.totalorder %s33, 1
      %p282 = por %p280, %p281
      %p283 = scmp.ne.s32.totalorder %s274, %s275
      %p284 = scmp.eq.s32.totalorder %s33, 0
      %p285 = por %p283, %p284
      %p286 = scmp.ne.s32.totalorder %s274, %s275
      %p287 = scmp.eq.s32.totalorder %s34, 1
      %p288 = por %p286, %p287
      %p290 = scmp.ne.s32.totalorder %s275, %s289
      %p291 = scmp.eq.s32.totalorder %s34, 0
      %p292 = por %p290, %p291
      %s293 = ssub.s32 %s28, %s35
      %p294 = scmp.eq.s32.totalorder %s293, 0
      %s296 = sadd.s32 %s295, 1
      %s297 = scalar_select %p294, %s295, %s296
      %p300 = pneg %p294
      %p301 = scmp.eq.s32.totalorder %s28, 1
      %p302 = por %p300, %p301
      %p303 = scmp.ne.s32.totalorder %s295, %s298
      %p304 = scmp.eq.s32.totalorder %s28, 0
      %p305 = por %p303, %p304
      %p306 = scmp.ne.s32.totalorder %s295, %s298
      %p307 = scmp.eq.s32.totalorder %s33, 1
      %p308 = por %p306, %p307
      %p309 = scmp.ne.s32.totalorder %s298, %s299
      %p310 = scmp.eq.s32.totalorder %s33, 0
      %p311 = por %p309, %p310
      %p312 = scmp.ne.s32.totalorder %s298, %s299
      %p313 = scmp.eq.s32.totalorder %s34, 1
      %p314 = por %p312, %p313
      %p316 = scmp.ne.s32.totalorder %s299, %s315
      %p317 = scmp.eq.s32.totalorder %s34, 0
      %p318 = por %p316, %p317
      %s319 = ssub.s32 %s28, %s35
      %p320 = scmp.eq.s32.totalorder %s319, 0
      %s322 = sadd.s32 %s321, 1
      %s323 = scalar_select %p320, %s321, %s322
      %p326 = pneg %p320
      %p327 = scmp.eq.s32.totalorder %s28, 1
      %p328 = por %p326, %p327
      %p329 = scmp.ne.s32.totalorder %s321, %s324
      %p330 = scmp.eq.s32.totalorder %s28, 0
      %p331 = por %p329, %p330
      %p332 = scmp.ne.s32.totalorder %s321, %s324
      %p333 = scmp.eq.s32.totalorder %s33, 1
      %p334 = por %p332, %p333
      %p335 = scmp.ne.s32.totalorder %s324, %s325
      %p336 = scmp.eq.s32.totalorder %s33, 0
      %p337 = por %p335, %p336
      %p338 = scmp.ne.s32.totalorder %s324, %s325
      %p339 = scmp.eq.s32.totalorder %s34, 1
      %p340 = por %p338, %p339
      %p342 = scmp.ne.s32.totalorder %s325, %s341
      %p343 = scmp.eq.s32.totalorder %s34, 0
      %p344 = por %p342, %p343
      %s345 = ssub.s32 %s28, %s35
      %p346 = scmp.eq.s32.totalorder %s345, 0
      %s348 = sadd.s32 %s347, 1
      %s349 = scalar_select %p346, %s347, %s348
      %p352 = pneg %p346
      %p353 = scmp.eq.s32.totalorder %s28, 1
      %p354 = por %p352, %p353
      %p355 = scmp.ne.s32.totalorder %s347, %s350
      %p356 = scmp.eq.s32.totalorder %s28, 0
      %p357 = por %p355, %p356
      %p358 = scmp.ne.s32.totalorder %s347, %s350
      %p359 = scmp.eq.s32.totalorder %s33, 1
      %p360 = por %p358, %p359
      %p361 = scmp.ne.s32.totalorder %s350, %s351
      %p362 = scmp.eq.s32.totalorder %s33, 0
      %p363 = por %p361, %p362
      %p364 = scmp.ne.s32.totalorder %s350, %s351
      %p365 = scmp.eq.s32.totalorder %s34, 1
      %p366 = por %p364, %p365
      %p368 = scmp.ne.s32.totalorder %s351, %s367
      %p369 = scmp.eq.s32.totalorder %s34, 0
      %p370 = por %p368, %p369
      %s371 = ssub.s32 %s28, %s35
      %p372 = scmp.eq.s32.totalorder %s371, 0
      %s374 = sadd.s32 %s373, 1
      %s375 = scalar_select %p372, %s373, %s374
      %p378 = pneg %p372
      %p379 = scmp.eq.s32.totalorder %s28, 1
      %p380 = por %p378, %p379
      %p381 = scmp.ne.s32.totalorder %s373, %s376
      %p382 = scmp.eq.s32.totalorder %s28, 0
      %p383 = por %p381, %p382
      %p384 = scmp.ne.s32.totalorder %s373, %s376
      %p385 = scmp.eq.s32.totalorder %s33, 1
      %p386 = por %p384, %p385
      %p387 = scmp.ne.s32.totalorder %s376, %s377
      %p388 = scmp.eq.s32.totalorder %s33, 0
      %p389 = por %p387, %p388
      %p390 = scmp.ne.s32.totalorder %s376, %s377
      %p391 = scmp.eq.s32.totalorder %s34, 1
      %p392 = por %p390, %p391
      %p394 = scmp.ne.s32.totalorder %s377, %s393
      %p395 = scmp.eq.s32.totalorder %s34, 0
      %p396 = por %p394, %p395
      %p397 = scmp.le.s32.totalorder 1, %s28
      %p398 = scmp.lt.s32.totalorder %s28, 3
      %p399 = pnand %p397, %p398
      %p400 = pneg %p399
      // Predicated region
      $region9: #{cnn_encoder_forward.3} parent=5 // pred_check
        _
      $region10: #{cnn_encoder_forward.3} parent=5 // pred_check_branch
        %402 = sbr.rel (%p399) target = $region12
      $region11: #{cnn_encoder_forward.3} parent=5 // pred_region
        %s403 = ssub.s32 %s28, 1
        // Predicated region
        $region13: #{cnn_encoder_forward.3} parent=11 // pred_check
          %p404 = pneg %p75
        $region14: #{cnn_encoder_forward.3} parent=11 // pred_check_branch
          %406 = sbr.rel (%p404) target = $region16
        $region15: #{cnn_encoder_forward.3} parent=11 // pred_region
          _
        $region16: #{cnn_encoder_forward.3} parent=11 // pred_fallthru
          _
        // Predicated region
        $region17: #{cnn_encoder_forward.3} parent=11 // pred_check
          %p407 = pneg %p96
        $region18: #{cnn_encoder_forward.3} parent=11 // pred_check_branch
          %409 = sbr.rel (%p407) target = $region20
        $region19: #{cnn_encoder_forward.3} parent=11 // pred_region
          _
        $region20: #{cnn_encoder_forward.3} parent=11 // pred_fallthru
          _
        // Predicated region
        $region21: #{cnn_encoder_forward.3} parent=11 // pred_check
          %p410 = pneg %p117
        $region22: #{cnn_encoder_forward.3} parent=11 // pred_check_branch
          %412 = sbr.rel (%p410) target = $region24
        $region23: #{cnn_encoder_forward.3} parent=11 // pred_region
          _
        $region24: #{cnn_encoder_forward.3} parent=11 // pred_fallthru
          _
        // Predicated region
        $region25: #{cnn_encoder_forward.3} parent=11 // pred_check
          %p413 = pneg %p138
        $region26: #{cnn_encoder_forward.3} parent=11 // pred_check_branch
          %415 = sbr.rel (%p413) target = $region28
        $region27: #{cnn_encoder_forward.3} parent=11 // pred_region
          _
        $region28: #{cnn_encoder_forward.3} parent=11 // pred_fallthru
          _
        // Predicated region
        $region29: #{cnn_encoder_forward.3} parent=11 // pred_check
          %p416 = pneg %p159
        $region30: #{cnn_encoder_forward.3} parent=11 // pred_check_branch
          %418 = sbr.rel (%p416) target = $region32
        $region31: #{cnn_encoder_forward.3} parent=11 // pred_region
          _
        $region32: #{cnn_encoder_forward.3} parent=11 // pred_fallthru
          _
        // Predicated region
        $region33: #{cnn_encoder_forward.3} parent=11 // pred_check
          %p419 = pneg %p180
        $region34: #{cnn_encoder_forward.3} parent=11 // pred_check_branch
          %421 = sbr.rel (%p419) target = $region36
        $region35: #{cnn_encoder_forward.3} parent=11 // pred_region
          _
        $region36: #{cnn_encoder_forward.3} parent=11 // pred_fallthru
          _
        // Predicated region
        $region37: #{cnn_encoder_forward.3} parent=11 // pred_check
          %p422 = pneg %p201
        $region38: #{cnn_encoder_forward.3} parent=11 // pred_check_branch
          %424 = sbr.rel (%p422) target = $region40
        $region39: #{cnn_encoder_forward.3} parent=11 // pred_region
          _
        $region40: #{cnn_encoder_forward.3} parent=11 // pred_fallthru
          _
        // Predicated region
        $region41: #{cnn_encoder_forward.3} parent=11 // pred_check
          %p425 = pneg %p222
        $region42: #{cnn_encoder_forward.3} parent=11 // pred_check_branch
          %427 = sbr.rel (%p425) target = $region44
        $region43: #{cnn_encoder_forward.3} parent=11 // pred_region
          _
        $region44: #{cnn_encoder_forward.3} parent=11 // pred_fallthru
          _
        // Predicated region
        $region45: #{cnn_encoder_forward.3} parent=11 // pred_check
          %p428 = pneg %p243
        $region46: #{cnn_encoder_forward.3} parent=11 // pred_check_branch
          %430 = sbr.rel (%p428) target = $region48
        $region47: #{cnn_encoder_forward.3} parent=11 // pred_region
          _
        $region48: #{cnn_encoder_forward.3} parent=11 // pred_fallthru
          _
        // Predicated region
        $region49: #{cnn_encoder_forward.3} parent=11 // pred_check
          %p431 = pneg %p264
        $region50: #{cnn_encoder_forward.3} parent=11 // pred_check_branch
          %433 = sbr.rel (%p431) target = $region52
        $region51: #{cnn_encoder_forward.3} parent=11 // pred_region
          _
        $region52: #{cnn_encoder_forward.3} parent=11 // pred_fallthru
          _
        // Predicated region
        $region53: #{cnn_encoder_forward.3} parent=11 // pred_check
          %p434 = pneg %p285
        $region54: #{cnn_encoder_forward.3} parent=11 // pred_check_branch
          %436 = sbr.rel (%p434) target = $region56
        $region55: #{cnn_encoder_forward.3} parent=11 // pred_region
          _
        $region56: #{cnn_encoder_forward.3} parent=11 // pred_fallthru
          _
      $region12: #{cnn_encoder_forward.3} parent=5 // pred_fallthru
        _
      %p437 = scmp.lt.s32.totalorder %s28, 2
      // Predicated region
      $region57: #{cnn_encoder_forward.3} parent=5 // pred_check
        %p438 = pneg %p437
      $region58: #{cnn_encoder_forward.3} parent=5 // pred_check_branch
        %440 = sbr.rel (%p438) target = $region60
      $region59: #{cnn_encoder_forward.3} parent=5 // pred_region
        // Predicated region
        $region61: #{cnn_encoder_forward.3} parent=59 // pred_check
          %p441 = pneg %p48
        $region62: #{cnn_encoder_forward.3} parent=59 // pred_check_branch
          %443 = sbr.rel (%p441) target = $region64
        $region63: #{cnn_encoder_forward.3} parent=59 // pred_region
          %p444 = scmp.lt.s32.totalorder %s28, 1
          %s445 = scalar_select %p444, %s28, 1
          %s446 = smul.addr %s445, 32
          %s447 = smul.addr %s446, 4
          %s448 = scalar_lea.vmem %s0, %s447
        $region64: #{cnn_encoder_forward.3} parent=59 // pred_fallthru
          _
      $region60: #{cnn_encoder_forward.3} parent=5 // pred_fallthru
        _
      %p449 = scmp.le.s32.totalorder 1, %s28
      %p450 = scmp.lt.s32.totalorder %s28, 3
      %p451 = pnand %p449, %p450
      %p452 = pneg %p451
      // Predicated region
      $region65: #{cnn_encoder_forward.3} parent=5 // pred_check
        _
      $region66: #{cnn_encoder_forward.3} parent=5 // pred_check_branch
        %454 = sbr.rel (%p451) target = $region68
      $region67: #{cnn_encoder_forward.3} parent=5 // pred_region
        %s455 = ssub.s32 %s28, 1
        %p456 = scmp.lt.s32.totalorder %s33, 1
        %s457 = scalar_select %p456, %s33, 1
        %s458 = smul.addr %s457, 32
        %s459 = smul.addr %s458, 4
        %s460 = scalar_lea.vmem %s0, %s459
        %p461 = pneg %p54
        %p462 = pneg %p51
        %p463 = pneg %p75
        %p464 = pneg %p72
        %p465 = pneg %p96
        %p466 = pneg %p93
        %p467 = pneg %p117
        %p468 = pneg %p114
        %p469 = pneg %p138
        %p470 = pneg %p135
        %p471 = pneg %p159
        %p472 = pneg %p156
        %p473 = pneg %p180
        %p474 = pneg %p177
        %p475 = pneg %p201
        %p476 = pneg %p198
        %p477 = pneg %p222
        %p478 = pneg %p219
        %p479 = pneg %p243
        %p480 = pneg %p240
        %p481 = pneg %p264
        %p482 = pneg %p261
        %p483 = pneg %p285
        %p484 = pneg %p282
        %p485 = pneg %p311
        %p486 = pneg %p308
        %p487 = scmp.lt.s32.totalorder %s33, 1
        %s488 = scalar_select %p487, %s33, 1
        %s489 = smul.addr %s488, 32
        %s490 = smul.addr %s489, 8
        %s491 = scalar_lea.vmem %s12, %s490
        %p492 = pneg %p337
        %p493 = pneg %p334
        %p494 = scmp.lt.s32.totalorder %s33, 1
        %s495 = scalar_select %p494, %s33, 1
        %s496 = smul.addr %s495, 8
        %s497 = smul.addr %s496, 8
        %s498 = scalar_lea.vmem %s13, %s497
        %p499 = pneg %p363
        %p500 = pneg %p360
        %s501 = sand.u32 %s350, 1
        %s502 = scalar_lea.sflag [#allocation3], %s501
        %s503 = sand.u32 %s350, 1
        %s504 = smul.addr %s503, 16
        %s505 = scalar_lea.vmem [#allocation2], %s504
        %p506 = pneg %p389
        %p507 = pneg %p386
        %s508 = sand.u32 %s376, 1
        %s509 = scalar_lea.sflag [#allocation5], %s508
        %s510 = sand.u32 %s376, 1
        %s511 = smul.addr %s510, 4
        %s512 = scalar_lea.vmem [#allocation4], %s511
        %p513 = scmp.lt.s32.totalorder %s33, 1
        %s514 = scalar_select %p513, %s33, 1
        %s515 = smul.addr %s514, 32
        %s516 = smul.addr %s515, 4
        %s517 = scalar_lea.vmem %s0, %s516
        %p518 = scmp.lt.s32.totalorder %s33, 1
        %s519 = scalar_select %p518, %s33, 1
        %s520 = smul.addr %s519, 32
        %s521 = smul.addr %s520, 8
        %s522 = scalar_lea.vmem %s12, %s521
        %p523 = scmp.lt.s32.totalorder %s33, 1
        %s524 = scalar_select %p523, %s33, 1
        %s525 = smul.addr %s524, 8
        %s526 = smul.addr %s525, 8
        %s527 = scalar_lea.vmem %s13, %s526
        %v529 = vld [vmem:[%s517] sm:$0xf]
        %v530 = vld [vmem:[%s517 + $0x4] sm:$0xf]
        %v531 = vld [vmem:[%s517 + $0x8] sm:$0xf]
        %v532 = vld [vmem:[%s517 + $0xc] sm:$0xf]
        %v533 = vld [vmem:[%s517 + $0x10] sm:$0xf]
        %v534 = vld [vmem:[%s517 + $0x14] sm:$0xf]
        %v535 = vld [vmem:[%s517 + $0x18] sm:$0xf]
        %v536 = vld [vmem:[%s517 + $0x1c] sm:$0xf]
        %v537 = vld [vmem:[%s517 + $0x20] sm:$0xf]
        %v538 = vld [vmem:[%s517 + $0x24] sm:$0xf]
        %v539 = vld [vmem:[%s517 + $0x28] sm:$0xf]
        %v540 = vld [vmem:[%s517 + $0x2c] sm:$0xf]
        %v541 = vld [vmem:[%s517 + $0x30] sm:$0xf]
        %v542 = vld [vmem:[%s517 + $0x34] sm:$0xf]
        %v543 = vld [vmem:[%s517 + $0x38] sm:$0xf]
        %v544 = vld [vmem:[%s517 + $0x3c] sm:$0xf]
        %v545 = vld [vmem:[%s517 + $0x40] sm:$0xf]
        %v546 = vld [vmem:[%s517 + $0x44] sm:$0xf]
        %v547 = vld [vmem:[%s517 + $0x48] sm:$0xf]
        %v548 = vld [vmem:[%s517 + $0x4c] sm:$0xf]
        %v549 = vld [vmem:[%s517 + $0x50] sm:$0xf]
        %v550 = vld [vmem:[%s517 + $0x54] sm:$0xf]
        %v551 = vld [vmem:[%s517 + $0x58] sm:$0xf]
        %v552 = vld [vmem:[%s517 + $0x5c] sm:$0xf]
        %v553 = vld [vmem:[%s517 + $0x60] sm:$0xf]
        %v554 = vld [vmem:[%s517 + $0x64] sm:$0xf]
        %v555 = vld [vmem:[%s517 + $0x68] sm:$0xf]
        %v556 = vld [vmem:[%s517 + $0x6c] sm:$0xf]
        %v557 = vld [vmem:[%s517 + $0x70] sm:$0xf]
        %v558 = vld [vmem:[%s517 + $0x74] sm:$0xf]
        %v559 = vld [vmem:[%s517 + $0x78] sm:$0xf]
        %v560 = vld [vmem:[%s517 + $0x7c] sm:$0xf]
        %v561 = vld [vmem:[%s1] sm:$0xf]
        %v562 = vld [vmem:[%s1 + $0x4] sm:$0xf]
        %v563 = vld [vmem:[%s1 + $0x8] sm:$0xf]
        %v564 = vld [vmem:[%s1 + $0xc] sm:$0xf]
        %v565 = vld [vmem:[%s1 + $0x10] sm:$0xf]
        %v566 = vld [vmem:[%s1 + $0x14] sm:$0xf]
        %v567 = vld [vmem:[%s1 + $0x18] sm:$0xf]
        %v568 = vld [vmem:[%s1 + $0x1c] sm:$0xf]
        %v569 = vld [vmem:[%s1 + $0x20] sm:$0xf]
        %v570 = vld [vmem:[%s2] sm:$0x1]
        %v572 = vlaneseq
        %v573 = vshrl.u32 %v572, 7
        %v574 = vsub.s32 0, %v573
        %v575 = vrot.slane %v570, %v574
        %v609 = vunpack.c.l.b16 %v529
        %v610 = vunpack.c.l.b16 %v530
        %v611 = vunpack.c.l.b16 %v531
        %v612 = vunpack.c.l.b16 %v532
        %v613 = vunpack.c.l.b16 %v533
        %v614 = vunpack.c.l.b16 %v534
        %v615 = vunpack.c.l.b16 %v535
        %v616 = vunpack.c.l.b16 %v536
        %v617 = vunpack.c.l.b16 %v537
        %v618 = vunpack.c.l.b16 %v538
        %v619 = vunpack.c.l.b16 %v539
        %v620 = vunpack.c.l.b16 %v540
        %v621 = vunpack.c.l.b16 %v541
        %v622 = vunpack.c.l.b16 %v542
        %v623 = vunpack.c.l.b16 %v543
        %v624 = vunpack.c.l.b16 %v544
        %v625 = vunpack.c.l.b16 %v545
        %v626 = vunpack.c.l.b16 %v546
        %v627 = vunpack.c.l.b16 %v547
        %v628 = vunpack.c.l.b16 %v548
        %v629 = vunpack.c.l.b16 %v549
        %v630 = vunpack.c.l.b16 %v550
        %v631 = vunpack.c.l.b16 %v551
        %v632 = vunpack.c.l.b16 %v552
        %v633 = vunpack.c.l.b16 %v553
        %v634 = vunpack.c.l.b16 %v554
        %v635 = vunpack.c.l.b16 %v555
        %v636 = vunpack.c.l.b16 %v556
        %v637 = vunpack.c.l.b16 %v557
        %v638 = vunpack.c.l.b16 %v558
        %v639 = vunpack.c.l.b16 %v559
        %v640 = vunpack.c.l.b16 %v560
        %v641 = vpack.c.b16 %v610, %v609
        %v642 = vpack.c.b16 %v612, %v611
        %v643 = vpack.c.b16 %v614, %v613
        %v644 = vpack.c.b16 %v616, %v615
        %v645 = vpack.c.b16 %v618, %v617
        %v646 = vpack.c.b16 %v620, %v619
        %v647 = vpack.c.b16 %v622, %v621
        %v648 = vpack.c.b16 %v624, %v623
        %v649 = vpack.c.b16 %v626, %v625
        %v650 = vpack.c.b16 %v628, %v627
        %v651 = vpack.c.b16 %v630, %v629
        %v652 = vpack.c.b16 %v632, %v631
        %v653 = vpack.c.b16 %v634, %v633
        %v654 = vpack.c.b16 %v636, %v635
        %v655 = vpack.c.b16 %v638, %v637
        %v656 = vpack.c.b16 %v640, %v639
        %v666 = vunpack.c.l.b16 %v561
        %v667 = vunpack.c.l.b16 %v562
        %v668 = vunpack.c.l.b16 %v563
        %v669 = vunpack.c.l.b16 %v564
        %v670 = vunpack.c.l.b16 %v565
        %v671 = vunpack.c.l.b16 %v566
        %v672 = vunpack.c.l.b16 %v567
        %v673 = vunpack.c.l.b16 %v568
        %v674 = vunpack.c.l.b16 %v569
        %v675 = vpack.c.b16 %v667, %v666
        %v676 = vpack.c.b16 %v669, %v668
        %v677 = vpack.c.b16 %v671, %v670
        %v678 = vpack.c.b16 %v673, %v672
        %v679 = vpack.c.b16 %v674, %v674
        %vm684 = vcmask 588800
        %v686 = vsel %vm684, %v641, 0
        %v689 = vsel %vm684, %v642, 0
        %v692 = vsel %vm684, %v643, 0
        %v695 = vsel %vm684, %v644, 0
        %v698 = vsel %vm684, %v645, 0
        %v701 = vsel %vm684, %v646, 0
        %v704 = vsel %vm684, %v647, 0
        %v707 = vsel %vm684, %v648, 0
        %v710 = vsel %vm684, %v649, 0
        %v713 = vsel %vm684, %v650, 0
        %v716 = vsel %vm684, %v651, 0
        %v719 = vsel %vm684, %v652, 0
        %v722 = vsel %vm684, %v653, 0
        %v725 = vsel %vm684, %v654, 0
        %v728 = vsel %vm684, %v655, 0
        %v731 = vsel %vm684, %v656, 0
        %vm733 = vcmask 1043456
        %v735 = vsel %vm733, %v679, 0
        %737 = vmatprep.subr.bf16.mxu0 0
        %738 = vmatpush1.bf16.msra.mxu0 0
        %739 = vmatprep.subr.bf16.mxu0 0
        %740 = vmatpush1.bf16.msra.mxu0 0
        %741 = vmatprep.subr.bf16.mxu0 0
        %742 = vmatpush1.bf16.msra.mxu0 0
        %743 = vmatprep.subr.bf16.mxu0 0
        %744 = vmatpush1.bf16.msra.mxu0 %v735
        %745 = vmatprep.subr.bf16.mxu0 0
        %746 = vmatpush1.bf16.msra.mxu0 %v678
        %747 = vmatprep.subr.bf16.mxu0 0
        %748 = vmatpush1.bf16.msra.mxu0 %v677
        %749 = vmatprep.subr.bf16.mxu0 0
        %750 = vmatpush1.bf16.msra.mxu0 %v676
        %751 = vmatprep.subr.bf16.mxu0 0
        %752 = vmatpush1.bf16.msra.mxu0 %v675
        %753 = vmatprep.subr.bf16.mxu0 0
        %754 = vmatpush2.bf16.msra.mxu0 0
        %755 = vmatprep.subr.bf16.mxu0 0
        %756 = vmatpush2.bf16.msra.mxu0 0
        %757 = vmatprep.subr.bf16.mxu0 0
        %758 = vmatpush2.bf16.msra.mxu0 0
        %759 = vmatprep.subr.bf16.mxu0 0
        %760 = vmatpush2.bf16.msra.mxu0 0
        %761 = vmatprep.subr.bf16.mxu0 0
        %762 = vmatpush2.bf16.msra.mxu0 0
        %763 = vmatprep.subr.bf16.mxu0 0
        %764 = vmatpush2.bf16.msra.mxu0 0
        %765 = vmatprep.subr.bf16.mxu0 0
        %766 = vmatpush2.bf16.msra.mxu0 0
        %767 = vmatprep.subr.bf16.mxu0 0
        %768 = vmatpush2.bf16.msra.mxu0 0
        %769 = vmatprep.mubr.bf16.mxu0 0
        %770 = vmatmul.mubr.bf16.gmra.mxu0 %v686
        %v771 = vpop.f32.mrf.mxu0
        %v772 = vadd.f32 %v575, %v771
        %v773 = vpop.f32.mrf.mxu0
        %v774 = vpop.f32.mrf.mxu0
        %v775 = vadd.f32 %v575, %v774
        %v776 = vpop.f32.mrf.mxu0
        %777 = vmatprep.mubr.bf16.mxu0 0
        %778 = vmatmul.mubr.bf16.gmra.mxu0 %v689
        %v779 = vpop.f32.mrf.mxu0
        %v780 = vadd.f32 %v575, %v779
        %v781 = vpop.f32.mrf.mxu0
        %v782 = vpop.f32.mrf.mxu0
        %v783 = vadd.f32 %v575, %v782
        %v784 = vpop.f32.mrf.mxu0
        %785 = vmatprep.mubr.bf16.mxu0 0
        %786 = vmatmul.mubr.bf16.gmra.mxu0 %v692
        %v787 = vpop.f32.mrf.mxu0
        %v788 = vadd.f32 %v575, %v787
        %v789 = vpop.f32.mrf.mxu0
        %v790 = vpop.f32.mrf.mxu0
        %v791 = vadd.f32 %v575, %v790
        %v792 = vpop.f32.mrf.mxu0
        %793 = vmatprep.mubr.bf16.mxu0 0
        %794 = vmatmul.mubr.bf16.gmra.mxu0 %v695
        %v795 = vpop.f32.mrf.mxu0
        %v796 = vadd.f32 %v575, %v795
        %v797 = vpop.f32.mrf.mxu0
        %v798 = vpop.f32.mrf.mxu0
        %v799 = vadd.f32 %v575, %v798
        %v800 = vpop.f32.mrf.mxu0
        %801 = vmatprep.mubr.bf16.mxu0 0
        %802 = vmatmul.mubr.bf16.gmra.mxu0 %v698
        %v803 = vpop.f32.mrf.mxu0
        %v804 = vadd.f32 %v575, %v803
        %v805 = vpop.f32.mrf.mxu0
        %v806 = vpop.f32.mrf.mxu0
        %v807 = vadd.f32 %v575, %v806
        %v808 = vpop.f32.mrf.mxu0
        %809 = vmatprep.mubr.bf16.mxu0 0
        %810 = vmatmul.mubr.bf16.gmra.mxu0 %v701
        %v811 = vpop.f32.mrf.mxu0
        %v812 = vadd.f32 %v575, %v811
        %v813 = vpop.f32.mrf.mxu0
        %v814 = vpop.f32.mrf.mxu0
        %v815 = vadd.f32 %v575, %v814
        %v816 = vpop.f32.mrf.mxu0
        %817 = vmatprep.mubr.bf16.mxu0 0
        %818 = vmatmul.mubr.bf16.gmra.mxu0 %v704
        %v819 = vpop.f32.mrf.mxu0
        %v820 = vadd.f32 %v575, %v819
        %v821 = vpop.f32.mrf.mxu0
        %v822 = vpop.f32.mrf.mxu0
        %v823 = vadd.f32 %v575, %v822
        %v824 = vpop.f32.mrf.mxu0
        %825 = vmatprep.mubr.bf16.mxu0 0
        %826 = vmatmul.mubr.bf16.gmra.mxu0 %v707
        %v827 = vpop.f32.mrf.mxu0
        %v828 = vadd.f32 %v575, %v827
        %v829 = vpop.f32.mrf.mxu0
        %v830 = vpop.f32.mrf.mxu0
        %v831 = vadd.f32 %v575, %v830
        %v832 = vpop.f32.mrf.mxu0
        %833 = vmatprep.mubr.bf16.mxu0 0
        %834 = vmatmul.mubr.bf16.gmra.mxu0 %v710
        %v835 = vpop.f32.mrf.mxu0
        %v836 = vadd.f32 %v575, %v835
        %v837 = vpop.f32.mrf.mxu0
        %v838 = vpop.f32.mrf.mxu0
        %v839 = vadd.f32 %v575, %v838
        %v840 = vpop.f32.mrf.mxu0
        %841 = vmatprep.mubr.bf16.mxu0 0
        %842 = vmatmul.mubr.bf16.gmra.mxu0 %v713
        %v843 = vpop.f32.mrf.mxu0
        %v844 = vadd.f32 %v575, %v843
        %v845 = vpop.f32.mrf.mxu0
        %v846 = vpop.f32.mrf.mxu0
        %v847 = vadd.f32 %v575, %v846
        %v848 = vpop.f32.mrf.mxu0
        %849 = vmatprep.mubr.bf16.mxu0 0
        %850 = vmatmul.mubr.bf16.gmra.mxu0 %v716
        %v851 = vpop.f32.mrf.mxu0
        %v852 = vadd.f32 %v575, %v851
        %v853 = vpop.f32.mrf.mxu0
        %v854 = vpop.f32.mrf.mxu0
        %v855 = vadd.f32 %v575, %v854
        %v856 = vpop.f32.mrf.mxu0
        %857 = vmatprep.mubr.bf16.mxu0 0
        %858 = vmatmul.mubr.bf16.gmra.mxu0 %v719
        %v859 = vpop.f32.mrf.mxu0
        %v860 = vadd.f32 %v575, %v859
        %v861 = vpop.f32.mrf.mxu0
        %v862 = vpop.f32.mrf.mxu0
        %v863 = vadd.f32 %v575, %v862
        %v864 = vpop.f32.mrf.mxu0
        %865 = vmatprep.mubr.bf16.mxu0 0
        %866 = vmatmul.mubr.bf16.gmra.mxu0 %v722
        %v867 = vpop.f32.mrf.mxu0
        %v868 = vadd.f32 %v575, %v867
        %v869 = vpop.f32.mrf.mxu0
        %v870 = vpop.f32.mrf.mxu0
        %v871 = vadd.f32 %v575, %v870
        %v872 = vpop.f32.mrf.mxu0
        %873 = vmatprep.mubr.bf16.mxu0 0
        %874 = vmatmul.mubr.bf16.gmra.mxu0 %v725
        %v875 = vpop.f32.mrf.mxu0
        %v876 = vadd.f32 %v575, %v875
        %v877 = vpop.f32.mrf.mxu0
        %v878 = vpop.f32.mrf.mxu0
        %v879 = vadd.f32 %v575, %v878
        %v880 = vpop.f32.mrf.mxu0
        %881 = vmatprep.mubr.bf16.mxu0 0
        %882 = vmatmul.mubr.bf16.gmra.mxu0 %v728
        %v883 = vpop.f32.mrf.mxu0
        %v884 = vadd.f32 %v575, %v883
        %v885 = vpop.f32.mrf.mxu0
        %v886 = vpop.f32.mrf.mxu0
        %v887 = vadd.f32 %v575, %v886
        %v888 = vpop.f32.mrf.mxu0
        %889 = vmatprep.mubr.bf16.mxu0 0
        %890 = vmatmul.mubr.bf16.gmra.mxu0 %v731
        %v891 = vpop.f32.mrf.mxu0
        %v892 = vadd.f32 %v575, %v891
        %v893 = vpop.f32.mrf.mxu0
        %v894 = vpop.f32.mrf.mxu0
        %v895 = vadd.f32 %v575, %v894
        %v896 = vpop.f32.mrf.mxu0
        %897 = vdwg.mxu0
        %v898 = vmax.f32 %v772, 0.0
        %v899 = vmax.f32 %v775, 0.0
        %v900 = vmax.f32 %v780, 0.0
        %v901 = vmax.f32 %v783, 0.0
        %v902 = vmax.f32 %v788, 0.0
        %v903 = vmax.f32 %v791, 0.0
        %v904 = vmax.f32 %v796, 0.0
        %v905 = vmax.f32 %v799, 0.0
        %v906 = vmax.f32 %v804, 0.0
        %v907 = vmax.f32 %v807, 0.0
        %v908 = vmax.f32 %v812, 0.0
        %v909 = vmax.f32 %v815, 0.0
        %v910 = vmax.f32 %v820, 0.0
        %v911 = vmax.f32 %v823, 0.0
        %v912 = vmax.f32 %v828, 0.0
        %v913 = vmax.f32 %v831, 0.0
        %v914 = vmax.f32 %v836, 0.0
        %v915 = vmax.f32 %v839, 0.0
        %v916 = vmax.f32 %v844, 0.0
        %v917 = vmax.f32 %v847, 0.0
        %v918 = vmax.f32 %v852, 0.0
        %v919 = vmax.f32 %v855, 0.0
        %v920 = vmax.f32 %v860, 0.0
        %v921 = vmax.f32 %v863, 0.0
        %v922 = vmax.f32 %v868, 0.0
        %v923 = vmax.f32 %v871, 0.0
        %v924 = vmax.f32 %v876, 0.0
        %v925 = vmax.f32 %v879, 0.0
        %v926 = vmax.f32 %v884, 0.0
        %v927 = vmax.f32 %v887, 0.0
        %v928 = vmax.f32 %v892, 0.0
        %v929 = vmax.f32 %v895, 0.0
        %vm930 = vcmask 130048
        %931 = vst.msk [vmem:[%s522] sm:$0xff] %vm930, %v898
        %932 = vst.msk [vmem:[%s522 + $0x8] sm:$0xff] %vm930, %v899
        %933 = vst.msk [vmem:[%s522 + $0x10] sm:$0xff] %vm930, %v900
        %934 = vst.msk [vmem:[%s522 + $0x18] sm:$0xff] %vm930, %v901
        %935 = vst.msk [vmem:[%s522 + $0x20] sm:$0xff] %vm930, %v902
        %936 = vst.msk [vmem:[%s522 + $0x28] sm:$0xff] %vm930, %v903
        %937 = vst.msk [vmem:[%s522 + $0x30] sm:$0xff] %vm930, %v904
        %938 = vst.msk [vmem:[%s522 + $0x38] sm:$0xff] %vm930, %v905
        %939 = vst.msk [vmem:[%s522 + $0x40] sm:$0xff] %vm930, %v906
        %940 = vst.msk [vmem:[%s522 + $0x48] sm:$0xff] %vm930, %v907
        %941 = vst.msk [vmem:[%s522 + $0x50] sm:$0xff] %vm930, %v908
        %942 = vst.msk [vmem:[%s522 + $0x58] sm:$0xff] %vm930, %v909
        %943 = vst.msk [vmem:[%s522 + $0x60] sm:$0xff] %vm930, %v910
        %944 = vst.msk [vmem:[%s522 + $0x68] sm:$0xff] %vm930, %v911
        %945 = vst.msk [vmem:[%s522 + $0x70] sm:$0xff] %vm930, %v912
        %946 = vst.msk [vmem:[%s522 + $0x78] sm:$0xff] %vm930, %v913
        %947 = vst.msk [vmem:[%s522 + $0x80] sm:$0xff] %vm930, %v914
        %948 = vst.msk [vmem:[%s522 + $0x88] sm:$0xff] %vm930, %v915
        %949 = vst.msk [vmem:[%s522 + $0x90] sm:$0xff] %vm930, %v916
        %950 = vst.msk [vmem:[%s522 + $0x98] sm:$0xff] %vm930, %v917
        %951 = vst.msk [vmem:[%s522 + $0xa0] sm:$0xff] %vm930, %v918
        %952 = vst.msk [vmem:[%s522 + $0xa8] sm:$0xff] %vm930, %v919
        %953 = vst.msk [vmem:[%s522 + $0xb0] sm:$0xff] %vm930, %v920
        %954 = vst.msk [vmem:[%s522 + $0xb8] sm:$0xff] %vm930, %v921
        %955 = vst.msk [vmem:[%s522 + $0xc0] sm:$0xff] %vm930, %v922
        %956 = vst.msk [vmem:[%s522 + $0xc8] sm:$0xff] %vm930, %v923
        %957 = vst.msk [vmem:[%s522 + $0xd0] sm:$0xff] %vm930, %v924
        %958 = vst.msk [vmem:[%s522 + $0xd8] sm:$0xff] %vm930, %v925
        %959 = vst.msk [vmem:[%s522 + $0xe0] sm:$0xff] %vm930, %v926
        %960 = vst.msk [vmem:[%s522 + $0xe8] sm:$0xff] %vm930, %v927
        %961 = vst.msk [vmem:[%s522 + $0xf0] sm:$0xff] %vm930, %v928
        %962 = vst.msk [vmem:[%s522 + $0xf8] sm:$0xff] %vm930, %v929
        %v963 = vpack.c.bf16 %v899, %v898
        %v964 = vpack.c.bf16 %v901, %v900
        %v965 = vpack.c.bf16 %v903, %v902
        %v966 = vpack.c.bf16 %v905, %v904
        %v967 = vpack.c.bf16 %v907, %v906
        %v968 = vpack.c.bf16 %v909, %v908
        %v969 = vpack.c.bf16 %v911, %v910
        %v970 = vpack.c.bf16 %v913, %v912
        %v971 = vpack.c.bf16 %v915, %v914
        %v972 = vpack.c.bf16 %v917, %v916
        %v973 = vpack.c.bf16 %v919, %v918
        %v974 = vpack.c.bf16 %v921, %v920
        %v975 = vpack.c.bf16 %v923, %v922
        %v976 = vpack.c.bf16 %v925, %v924
        %v977 = vpack.c.bf16 %v927, %v926
        %v978 = vpack.c.bf16 %v929, %v928
        %v979 = vld [vmem:[%s3] sm:$0xff]
        %v980 = vld [vmem:[%s3 + $0x8] sm:$0xff]
        %v981 = vld [vmem:[%s3 + $0x10] sm:$0xff]
        %v982 = vld [vmem:[%s3 + $0x18] sm:$0xff]
        %v983 = vld [vmem:[%s3 + $0x20] sm:$0xff]
        %v984 = vld [vmem:[%s3 + $0x28] sm:$0xff]
        %v985 = vld [vmem:[%s3 + $0x30] sm:$0xff]
        %v986 = vld [vmem:[%s3 + $0x38] sm:$0xff]
        %v995 = vunpack.c.l.b16 %v979
        %v996 = vunpack.c.h.b16 %v979
        %v997 = vunpack.c.l.b16 %v980
        %v998 = vunpack.c.h.b16 %v980
        %v999 = vunpack.c.l.b16 %v981
        %v1000 = vunpack.c.h.b16 %v981
        %v1001 = vunpack.c.l.b16 %v982
        %v1002 = vunpack.c.h.b16 %v982
        %v1003 = vunpack.c.l.b16 %v983
        %v1004 = vunpack.c.h.b16 %v983
        %v1005 = vunpack.c.l.b16 %v984
        %v1006 = vunpack.c.h.b16 %v984
        %v1007 = vunpack.c.l.b16 %v985
        %v1008 = vunpack.c.h.b16 %v985
        %v1009 = vunpack.c.l.b16 %v986
        %v1010 = vunpack.c.h.b16 %v986
        %v1011 = vpack.c.b16 %v997, %v995
        %v1012 = vpack.c.b16 %v998, %v996
        %v1013 = vpack.c.b16 %v1001, %v999
        %v1014 = vpack.c.b16 %v1002, %v1000
        %v1015 = vpack.c.b16 %v1005, %v1003
        %v1016 = vpack.c.b16 %v1006, %v1004
        %v1017 = vpack.c.b16 %v1009, %v1007
        %v1018 = vpack.c.b16 %v1010, %v1008
        %1027 = vmatprep.subr.bf16.mxu0 0
        %1028 = vmatpush1.bf16.msra.mxu0 %v970
        %1029 = vmatprep.subr.bf16.mxu0 0
        %1030 = vmatpush1.bf16.msra.mxu0 %v969
        %1031 = vmatprep.subr.bf16.mxu0 0
        %1032 = vmatpush1.bf16.msra.mxu0 %v968
        %1033 = vmatprep.subr.bf16.mxu0 0
        %1034 = vmatpush1.bf16.msra.mxu0 %v967
        %1035 = vmatprep.subr.bf16.mxu0 0
        %1036 = vmatpush1.bf16.msra.mxu0 %v966
        %1037 = vmatprep.subr.bf16.mxu0 0
        %1038 = vmatpush1.bf16.msra.mxu0 %v965
        %1039 = vmatprep.subr.bf16.mxu0 0
        %1040 = vmatpush1.bf16.msra.mxu0 %v964
        %1041 = vmatprep.subr.bf16.mxu0 0
        %1042 = vmatpush1.bf16.msra.mxu0 %v963
        %1043 = vmatprep.subr.bf16.mxu0 0
        %1044 = vmatpush2.bf16.msra.mxu0 %v978
        %1045 = vmatprep.subr.bf16.mxu0 0
        %1046 = vmatpush2.bf16.msra.mxu0 %v977
        %1047 = vmatprep.subr.bf16.mxu0 0
        %1048 = vmatpush2.bf16.msra.mxu0 %v976
        %1049 = vmatprep.subr.bf16.mxu0 0
        %1050 = vmatpush2.bf16.msra.mxu0 %v975
        %1051 = vmatprep.subr.bf16.mxu0 0
        %1052 = vmatpush2.bf16.msra.mxu0 %v974
        %1053 = vmatprep.subr.bf16.mxu0 0
        %1054 = vmatpush2.bf16.msra.mxu0 %v973
        %1055 = vmatprep.subr.bf16.mxu0 0
        %1056 = vmatpush2.bf16.msra.mxu0 %v972
        %1057 = vmatprep.subr.bf16.mxu0 0
        %1058 = vmatpush2.bf16.msra.mxu0 %v971
        %1059 = vmatprep.mubr.bf16.mxu0 %v1012
        %1060 = vmatmul.mubr.bf16.gmra.mxu0 %v1011
        %v1061 = vpop.f32.mrf.mxu0
        %v1062 = vadd.f32 0.0, %v1061
        %v1063 = vpop.f32.mrf.mxu0
        %v1064 = vpop.f32.mrf.mxu0
        %v1065 = vadd.f32 0.0, %v1064
        %v1066 = vpop.f32.mrf.mxu0
        %1067 = vmatprep.mubr.bf16.mxu0 %v1014
        %1068 = vmatmul.mubr.bf16.gmra.mxu0 %v1013
        %v1069 = vpop.f32.mrf.mxu0
        %v1070 = vadd.f32 0.0, %v1069
        %v1071 = vpop.f32.mrf.mxu0
        %v1072 = vpop.f32.mrf.mxu0
        %v1073 = vadd.f32 0.0, %v1072
        %v1074 = vpop.f32.mrf.mxu0
        %1075 = vmatprep.mubr.bf16.mxu0 %v1016
        %1076 = vmatmul.mubr.bf16.gmra.mxu0 %v1015
        %v1077 = vpop.f32.mrf.mxu0
        %v1078 = vadd.f32 0.0, %v1077
        %v1079 = vpop.f32.mrf.mxu0
        %v1080 = vpop.f32.mrf.mxu0
        %v1081 = vadd.f32 0.0, %v1080
        %v1082 = vpop.f32.mrf.mxu0
        %1083 = vmatprep.mubr.bf16.mxu0 %v1018
        %1084 = vmatmul.mubr.bf16.gmra.mxu0 %v1017
        %v1085 = vpop.f32.mrf.mxu0
        %v1086 = vadd.f32 0.0, %v1085
        %v1087 = vpop.f32.mrf.mxu0
        %v1088 = vpop.f32.mrf.mxu0
        %v1089 = vadd.f32 0.0, %v1088
        %v1090 = vpop.f32.mrf.mxu0
        %1091 = vdwg.mxu0
        %v1092 = vpack.c.bf16 %v1065, %v1062
        %v1093 = vpack.c.bf16 %v1073, %v1070
        %v1094 = vpack.c.bf16 %v1081, %v1078
        %v1095 = vpack.c.bf16 %v1089, %v1086
        %v1096 = vld [vmem:[%s4] sm:$0xf]
        %v1097 = vld [vmem:[%s4 + $0x4] sm:$0xf]
        %s1098 = scalar_lea.vmem %s3, 64
        %v1099 = vld [vmem:[%s1098] sm:$0xff]
        %v1100 = vld [vmem:[%s1098 + $0x8] sm:$0xff]
        %v1101 = vld [vmem:[%s1098 + $0x10] sm:$0xff]
        %v1102 = vld [vmem:[%s1098 + $0x18] sm:$0xff]
        %v1103 = vld [vmem:[%s1098 + $0x20] sm:$0xff]
        %v1104 = vld [vmem:[%s1098 + $0x28] sm:$0xff]
        %v1105 = vld [vmem:[%s1098 + $0x30] sm:$0xff]
        %v1106 = vld [vmem:[%s1098 + $0x38] sm:$0xff]
        %v1115 = vunpack.c.l.b16 %v1099
        %v1116 = vunpack.c.h.b16 %v1099
        %v1117 = vunpack.c.l.b16 %v1100
        %v1118 = vunpack.c.h.b16 %v1100
        %v1119 = vunpack.c.l.b16 %v1101
        %v1120 = vunpack.c.h.b16 %v1101
        %v1121 = vunpack.c.l.b16 %v1102
        %v1122 = vunpack.c.h.b16 %v1102
        %v1123 = vunpack.c.l.b16 %v1103
        %v1124 = vunpack.c.h.b16 %v1103
        %v1125 = vunpack.c.l.b16 %v1104
        %v1126 = vunpack.c.h.b16 %v1104
        %v1127 = vunpack.c.l.b16 %v1105
        %v1128 = vunpack.c.h.b16 %v1105
        %v1129 = vunpack.c.l.b16 %v1106
        %v1130 = vunpack.c.h.b16 %v1106
        %v1131 = vpack.c.b16 %v1117, %v1115
        %v1132 = vpack.c.b16 %v1118, %v1116
        %v1133 = vpack.c.b16 %v1121, %v1119
        %v1134 = vpack.c.b16 %v1122, %v1120
        %v1135 = vpack.c.b16 %v1125, %v1123
        %v1136 = vpack.c.b16 %v1126, %v1124
        %v1137 = vpack.c.b16 %v1129, %v1127
        %v1138 = vpack.c.b16 %v1130, %v1128
        %1147 = vmatprep.subr.bf16.mxu0 0
        %1148 = vmatpush1.bf16.msra.mxu0 %v970
        %1149 = vmatprep.subr.bf16.mxu0 0
        %1150 = vmatpush1.bf16.msra.mxu0 %v969
        %1151 = vmatprep.subr.bf16.mxu0 0
        %1152 = vmatpush1.bf16.msra.mxu0 %v968
        %1153 = vmatprep.subr.bf16.mxu0 0
        %1154 = vmatpush1.bf16.msra.mxu0 %v967
        %1155 = vmatprep.subr.bf16.mxu0 0
        %1156 = vmatpush1.bf16.msra.mxu0 %v966
        %1157 = vmatprep.subr.bf16.mxu0 0
        %1158 = vmatpush1.bf16.msra.mxu0 %v965
        %1159 = vmatprep.subr.bf16.mxu0 0
        %1160 = vmatpush1.bf16.msra.mxu0 %v964
        %1161 = vmatprep.subr.bf16.mxu0 0
        %1162 = vmatpush1.bf16.msra.mxu0 %v963
        %1163 = vmatprep.subr.bf16.mxu0 0
        %1164 = vmatpush2.bf16.msra.mxu0 %v978
        %1165 = vmatprep.subr.bf16.mxu0 0
        %1166 = vmatpush2.bf16.msra.mxu0 %v977
        %1167 = vmatprep.subr.bf16.mxu0 0
        %1168 = vmatpush2.bf16.msra.mxu0 %v976
        %1169 = vmatprep.subr.bf16.mxu0 0
        %1170 = vmatpush2.bf16.msra.mxu0 %v975
        %1171 = vmatprep.subr.bf16.mxu0 0
        %1172 = vmatpush2.bf16.msra.mxu0 %v974
        %1173 = vmatprep.subr.bf16.mxu0 0
        %1174 = vmatpush2.bf16.msra.mxu0 %v973
        %1175 = vmatprep.subr.bf16.mxu0 0
        %1176 = vmatpush2.bf16.msra.mxu0 %v972
        %1177 = vmatprep.subr.bf16.mxu0 0
        %1178 = vmatpush2.bf16.msra.mxu0 %v971
        %1179 = vmatprep.mubr.bf16.mxu0 %v1132
        %1180 = vmatmul.mubr.bf16.gmra.mxu0 %v1131
        %v1181 = vpop.f32.mrf.mxu0
        %v1182 = vadd.f32 0.0, %v1181
        %v1183 = vpop.f32.mrf.mxu0
        %v1184 = vpop.f32.mrf.mxu0
        %v1185 = vadd.f32 0.0, %v1184
        %v1186 = vpop.f32.mrf.mxu0
        %1187 = vmatprep.mubr.bf16.mxu0 %v1134
        %1188 = vmatmul.mubr.bf16.gmra.mxu0 %v1133
        %v1189 = vpop.f32.mrf.mxu0
        %v1190 = vadd.f32 0.0, %v1189
        %v1191 = vpop.f32.mrf.mxu0
        %v1192 = vpop.f32.mrf.mxu0
        %v1193 = vadd.f32 0.0, %v1192
        %v1194 = vpop.f32.mrf.mxu0
        %1195 = vmatprep.mubr.bf16.mxu0 %v1136
        %1196 = vmatmul.mubr.bf16.gmra.mxu0 %v1135
        %v1197 = vpop.f32.mrf.mxu0
        %v1198 = vadd.f32 0.0, %v1197
        %v1199 = vpop.f32.mrf.mxu0
        %v1200 = vpop.f32.mrf.mxu0
        %v1201 = vadd.f32 0.0, %v1200
        %v1202 = vpop.f32.mrf.mxu0
        %1203 = vmatprep.mubr.bf16.mxu0 %v1138
        %1204 = vmatmul.mubr.bf16.gmra.mxu0 %v1137
        %v1205 = vpop.f32.mrf.mxu0
        %v1206 = vadd.f32 0.0, %v1205
        %v1207 = vpop.f32.mrf.mxu0
        %v1208 = vpop.f32.mrf.mxu0
        %v1209 = vadd.f32 0.0, %v1208
        %v1210 = vpop.f32.mrf.mxu0
        %1211 = vdwg.mxu0
        %v1212 = vpack.c.bf16 %v1185, %v1182
        %v1213 = vpack.c.bf16 %v1193, %v1190
        %v1214 = vpack.c.bf16 %v1201, %v1198
        %v1215 = vpack.c.bf16 %v1209, %v1206
        %s1216 = scalar_lea.vmem %s4, 8
        %v1217 = vld [vmem:[%s1216] sm:$0xf]
        %v1218 = vld [vmem:[%s1216 + $0x4] sm:$0xf]
        %v1221 = vunpack.c.l.b16 %v1217
        %v1222 = vunpack.c.l.b16 %v1218
        %v1223 = vpack.c.b16 %v1222, %v1221
        %v1226 = vsel %vm930, %v1212, 0
        %v1229 = vsel %vm930, %v1213, 0
        %v1232 = vsel %vm930, %v1214, 0
        %v1235 = vsel %vm930, %v1215, 0
        %1237 = vmatprep.subr.bf16.mxu0 0
        %1238 = vmatpush1.bf16.msra.mxu0 0
        %1239 = vmatprep.subr.bf16.mxu0 0
        %1240 = vmatpush1.bf16.msra.mxu0 0
        %1241 = vmatprep.subr.bf16.mxu0 0
        %1242 = vmatpush1.bf16.msra.mxu0 0
        %1243 = vmatprep.subr.bf16.mxu0 0
        %1244 = vmatpush1.bf16.msra.mxu0 0
        %1245 = vmatprep.subr.bf16.mxu0 0
        %1246 = vmatpush1.bf16.msra.mxu0 0
        %1247 = vmatprep.subr.bf16.mxu0 0
        %1248 = vmatpush1.bf16.msra.mxu0 0
        %1249 = vmatprep.subr.bf16.mxu0 0
        %1250 = vmatpush1.bf16.msra.mxu0 0
        %1251 = vmatprep.subr.bf16.mxu0 0
        %1252 = vmatpush1.bf16.msra.mxu0 %v1223
        %1253 = vmatprep.subr.bf16.mxu0 0
        %1254 = vmatpush2.bf16.msra.mxu0 0
        %1255 = vmatprep.subr.bf16.mxu0 0
        %1256 = vmatpush2.bf16.msra.mxu0 0
        %1257 = vmatprep.subr.bf16.mxu0 0
        %1258 = vmatpush2.bf16.msra.mxu0 0
        %1259 = vmatprep.subr.bf16.mxu0 0
        %1260 = vmatpush2.bf16.msra.mxu0 0
        %1261 = vmatprep.subr.bf16.mxu0 0
        %1262 = vmatpush2.bf16.msra.mxu0 0
        %1263 = vmatprep.subr.bf16.mxu0 0
        %1264 = vmatpush2.bf16.msra.mxu0 0
        %1265 = vmatprep.subr.bf16.mxu0 0
        %1266 = vmatpush2.bf16.msra.mxu0 0
        %1267 = vmatprep.subr.bf16.mxu0 0
        %1268 = vmatpush2.bf16.msra.mxu0 0
        %1269 = vmatprep.mubr.bf16.mxu0 0
        %1270 = vmatmul.mubr.bf16.gmra.mxu0 %v1226
        %v1271 = vpop.f32.mrf.mxu0
        %v1272 = vadd.f32 0.0, %v1271
        %v1273 = vpop.f32.mrf.mxu0
        %v1274 = vpop.f32.mrf.mxu0
        %v1275 = vadd.f32 0.0, %v1274
        %v1276 = vpop.f32.mrf.mxu0
        %1277 = vmatprep.mubr.bf16.mxu0 0
        %1278 = vmatmul.mubr.bf16.gmra.mxu0 %v1229
        %v1279 = vpop.f32.mrf.mxu0
        %v1280 = vadd.f32 0.0, %v1279
        %v1281 = vpop.f32.mrf.mxu0
        %v1282 = vpop.f32.mrf.mxu0
        %v1283 = vadd.f32 0.0, %v1282
        %v1284 = vpop.f32.mrf.mxu0
        %1285 = vmatprep.mubr.bf16.mxu0 0
        %1286 = vmatmul.mubr.bf16.gmra.mxu0 %v1232
        %v1287 = vpop.f32.mrf.mxu0
        %v1288 = vadd.f32 0.0, %v1287
        %v1289 = vpop.f32.mrf.mxu0
        %v1290 = vpop.f32.mrf.mxu0
        %v1291 = vadd.f32 0.0, %v1290
        %v1292 = vpop.f32.mrf.mxu0
        %1293 = vmatprep.mubr.bf16.mxu0 0
        %1294 = vmatmul.mubr.bf16.gmra.mxu0 %v1235
        %v1295 = vpop.f32.mrf.mxu0
        %v1296 = vadd.f32 0.0, %v1295
        %v1297 = vpop.f32.mrf.mxu0
        %v1298 = vpop.f32.mrf.mxu0
        %v1299 = vadd.f32 0.0, %v1298
        %v1300 = vpop.f32.mrf.mxu0
        %1301 = vdwg.mxu0
        %v1304 = vunpack.c.l.b16 %v1096
        %v1305 = vunpack.c.l.b16 %v1097
        %v1306 = vpack.c.b16 %v1305, %v1304
        %v1309 = vsel %vm930, %v1092, 0
        %v1312 = vsel %vm930, %v1093, 0
        %v1315 = vsel %vm930, %v1094, 0
        %v1318 = vsel %vm930, %v1095, 0
        %1320 = vmatprep.subr.bf16.mxu0 0
        %1321 = vmatpush1.bf16.msra.mxu0 0
        %1322 = vmatprep.subr.bf16.mxu0 0
        %1323 = vmatpush1.bf16.msra.mxu0 0
        %1324 = vmatprep.subr.bf16.mxu0 0
        %1325 = vmatpush1.bf16.msra.mxu0 0
        %1326 = vmatprep.subr.bf16.mxu0 0
        %1327 = vmatpush1.bf16.msra.mxu0 0
        %1328 = vmatprep.subr.bf16.mxu0 0
        %1329 = vmatpush1.bf16.msra.mxu0 0
        %1330 = vmatprep.subr.bf16.mxu0 0
        %1331 = vmatpush1.bf16.msra.mxu0 0
        %1332 = vmatprep.subr.bf16.mxu0 0
        %1333 = vmatpush1.bf16.msra.mxu0 0
        %1334 = vmatprep.subr.bf16.mxu0 0
        %1335 = vmatpush1.bf16.msra.mxu0 %v1306
        %1336 = vmatprep.subr.bf16.mxu0 0
        %1337 = vmatpush2.bf16.msra.mxu0 0
        %1338 = vmatprep.subr.bf16.mxu0 0
        %1339 = vmatpush2.bf16.msra.mxu0 0
        %1340 = vmatprep.subr.bf16.mxu0 0
        %1341 = vmatpush2.bf16.msra.mxu0 0
        %1342 = vmatprep.subr.bf16.mxu0 0
        %1343 = vmatpush2.bf16.msra.mxu0 0
        %1344 = vmatprep.subr.bf16.mxu0 0
        %1345 = vmatpush2.bf16.msra.mxu0 0
        %1346 = vmatprep.subr.bf16.mxu0 0
        %1347 = vmatpush2.bf16.msra.mxu0 0
        %1348 = vmatprep.subr.bf16.mxu0 0
        %1349 = vmatpush2.bf16.msra.mxu0 0
        %1350 = vmatprep.subr.bf16.mxu0 0
        %1351 = vmatpush2.bf16.msra.mxu0 0
        %1352 = vmatprep.mubr.bf16.mxu0 0
        %1353 = vmatmul.mubr.bf16.gmra.mxu0 %v1309
        %v1354 = vpop.f32.mrf.mxu0
        %v1355 = vadd.f32 %v1272, %v1354
        %v1356 = vpop.f32.mrf.mxu0
        %v1357 = vpop.f32.mrf.mxu0
        %v1358 = vadd.f32 %v1275, %v1357
        %v1359 = vpop.f32.mrf.mxu0
        %1360 = vmatprep.mubr.bf16.mxu0 0
        %1361 = vmatmul.mubr.bf16.gmra.mxu0 %v1312
        %v1362 = vpop.f32.mrf.mxu0
        %v1363 = vadd.f32 %v1280, %v1362
        %v1364 = vpop.f32.mrf.mxu0
        %v1365 = vpop.f32.mrf.mxu0
        %v1366 = vadd.f32 %v1283, %v1365
        %v1367 = vpop.f32.mrf.mxu0
        %1368 = vmatprep.mubr.bf16.mxu0 0
        %1369 = vmatmul.mubr.bf16.gmra.mxu0 %v1315
        %v1370 = vpop.f32.mrf.mxu0
        %v1371 = vadd.f32 %v1288, %v1370
        %v1372 = vpop.f32.mrf.mxu0
        %v1373 = vpop.f32.mrf.mxu0
        %v1374 = vadd.f32 %v1291, %v1373
        %v1375 = vpop.f32.mrf.mxu0
        %1376 = vmatprep.mubr.bf16.mxu0 0
        %1377 = vmatmul.mubr.bf16.gmra.mxu0 %v1318
        %v1378 = vpop.f32.mrf.mxu0
        %v1379 = vadd.f32 %v1296, %v1378
        %v1380 = vpop.f32.mrf.mxu0
        %v1381 = vpop.f32.mrf.mxu0
        %v1382 = vadd.f32 %v1299, %v1381
        %v1383 = vpop.f32.mrf.mxu0
        %1384 = vdwg.mxu0
        %s1385 = scalar_lea.vmem %s3, 128
        %v1386 = vld [vmem:[%s1385] sm:$0xff]
        %v1387 = vld [vmem:[%s1385 + $0x8] sm:$0xff]
        %v1388 = vld [vmem:[%s1385 + $0x10] sm:$0xff]
        %v1389 = vld [vmem:[%s1385 + $0x18] sm:$0xff]
        %v1390 = vld [vmem:[%s1385 + $0x20] sm:$0xff]
        %v1391 = vld [vmem:[%s1385 + $0x28] sm:$0xff]
        %v1392 = vld [vmem:[%s1385 + $0x30] sm:$0xff]
        %v1393 = vld [vmem:[%s1385 + $0x38] sm:$0xff]
        %v1402 = vunpack.c.l.b16 %v1386
        %v1403 = vunpack.c.h.b16 %v1386
        %v1404 = vunpack.c.l.b16 %v1387
        %v1405 = vunpack.c.h.b16 %v1387
        %v1406 = vunpack.c.l.b16 %v1388
        %v1407 = vunpack.c.h.b16 %v1388
        %v1408 = vunpack.c.l.b16 %v1389
        %v1409 = vunpack.c.h.b16 %v1389
        %v1410 = vunpack.c.l.b16 %v1390
        %v1411 = vunpack.c.h.b16 %v1390
        %v1412 = vunpack.c.l.b16 %v1391
        %v1413 = vunpack.c.h.b16 %v1391
        %v1414 = vunpack.c.l.b16 %v1392
        %v1415 = vunpack.c.h.b16 %v1392
        %v1416 = vunpack.c.l.b16 %v1393
        %v1417 = vunpack.c.h.b16 %v1393
        %v1418 = vpack.c.b16 %v1404, %v1402
        %v1419 = vpack.c.b16 %v1405, %v1403
        %v1420 = vpack.c.b16 %v1408, %v1406
        %v1421 = vpack.c.b16 %v1409, %v1407
        %v1422 = vpack.c.b16 %v1412, %v1410
        %v1423 = vpack.c.b16 %v1413, %v1411
        %v1424 = vpack.c.b16 %v1416, %v1414
        %v1425 = vpack.c.b16 %v1417, %v1415
        %1434 = vmatprep.subr.bf16.mxu0 0
        %1435 = vmatpush1.bf16.msra.mxu0 %v970
        %1436 = vmatprep.subr.bf16.mxu0 0
        %1437 = vmatpush1.bf16.msra.mxu0 %v969
        %1438 = vmatprep.subr.bf16.mxu0 0
        %1439 = vmatpush1.bf16.msra.mxu0 %v968
        %1440 = vmatprep.subr.bf16.mxu0 0
        %1441 = vmatpush1.bf16.msra.mxu0 %v967
        %1442 = vmatprep.subr.bf16.mxu0 0
        %1443 = vmatpush1.bf16.msra.mxu0 %v966
        %1444 = vmatprep.subr.bf16.mxu0 0
        %1445 = vmatpush1.bf16.msra.mxu0 %v965
        %1446 = vmatprep.subr.bf16.mxu0 0
        %1447 = vmatpush1.bf16.msra.mxu0 %v964
        %1448 = vmatprep.subr.bf16.mxu0 0
        %1449 = vmatpush1.bf16.msra.mxu0 %v963
        %1450 = vmatprep.subr.bf16.mxu0 0
        %1451 = vmatpush2.bf16.msra.mxu0 %v978
        %1452 = vmatprep.subr.bf16.mxu0 0
        %1453 = vmatpush2.bf16.msra.mxu0 %v977
        %1454 = vmatprep.subr.bf16.mxu0 0
        %1455 = vmatpush2.bf16.msra.mxu0 %v976
        %1456 = vmatprep.subr.bf16.mxu0 0
        %1457 = vmatpush2.bf16.msra.mxu0 %v975
        %1458 = vmatprep.subr.bf16.mxu0 0
        %1459 = vmatpush2.bf16.msra.mxu0 %v974
        %1460 = vmatprep.subr.bf16.mxu0 0
        %1461 = vmatpush2.bf16.msra.mxu0 %v973
        %1462 = vmatprep.subr.bf16.mxu0 0
        %1463 = vmatpush2.bf16.msra.mxu0 %v972
        %1464 = vmatprep.subr.bf16.mxu0 0
        %1465 = vmatpush2.bf16.msra.mxu0 %v971
        %1466 = vmatprep.mubr.bf16.mxu0 %v1419
        %1467 = vmatmul.mubr.bf16.gmra.mxu0 %v1418
        %v1468 = vpop.f32.mrf.mxu0
        %v1469 = vadd.f32 0.0, %v1468
        %v1470 = vpop.f32.mrf.mxu0
        %v1471 = vpop.f32.mrf.mxu0
        %v1472 = vadd.f32 0.0, %v1471
        %v1473 = vpop.f32.mrf.mxu0
        %1474 = vmatprep.mubr.bf16.mxu0 %v1421
        %1475 = vmatmul.mubr.bf16.gmra.mxu0 %v1420
        %v1476 = vpop.f32.mrf.mxu0
        %v1477 = vadd.f32 0.0, %v1476
        %v1478 = vpop.f32.mrf.mxu0
        %v1479 = vpop.f32.mrf.mxu0
        %v1480 = vadd.f32 0.0, %v1479
        %v1481 = vpop.f32.mrf.mxu0
        %1482 = vmatprep.mubr.bf16.mxu0 %v1423
        %1483 = vmatmul.mubr.bf16.gmra.mxu0 %v1422
        %v1484 = vpop.f32.mrf.mxu0
        %v1485 = vadd.f32 0.0, %v1484
        %v1486 = vpop.f32.mrf.mxu0
        %v1487 = vpop.f32.mrf.mxu0
        %v1488 = vadd.f32 0.0, %v1487
        %v1489 = vpop.f32.mrf.mxu0
        %1490 = vmatprep.mubr.bf16.mxu0 %v1425
        %1491 = vmatmul.mubr.bf16.gmra.mxu0 %v1424
        %v1492 = vpop.f32.mrf.mxu0
        %v1493 = vadd.f32 0.0, %v1492
        %v1494 = vpop.f32.mrf.mxu0
        %v1495 = vpop.f32.mrf.mxu0
        %v1496 = vadd.f32 0.0, %v1495
        %v1497 = vpop.f32.mrf.mxu0
        %1498 = vdwg.mxu0
        %v1499 = vpack.c.bf16 %v1472, %v1469
        %v1500 = vpack.c.bf16 %v1480, %v1477
        %v1501 = vpack.c.bf16 %v1488, %v1485
        %v1502 = vpack.c.bf16 %v1496, %v1493
        %s1503 = scalar_lea.vmem %s4, 16
        %v1504 = vld [vmem:[%s1503] sm:$0xf]
        %v1505 = vld [vmem:[%s1503 + $0x4] sm:$0xf]
        %v1508 = vunpack.c.l.b16 %v1504
        %v1509 = vunpack.c.l.b16 %v1505
        %v1510 = vpack.c.b16 %v1509, %v1508
        %v1513 = vsel %vm930, %v1499, 0
        %v1516 = vsel %vm930, %v1500, 0
        %v1519 = vsel %vm930, %v1501, 0
        %v1522 = vsel %vm930, %v1502, 0
        %1524 = vmatprep.subr.bf16.mxu0 0
        %1525 = vmatpush1.bf16.msra.mxu0 0
        %1526 = vmatprep.subr.bf16.mxu0 0
        %1527 = vmatpush1.bf16.msra.mxu0 0
        %1528 = vmatprep.subr.bf16.mxu0 0
        %1529 = vmatpush1.bf16.msra.mxu0 0
        %1530 = vmatprep.subr.bf16.mxu0 0
        %1531 = vmatpush1.bf16.msra.mxu0 0
        %1532 = vmatprep.subr.bf16.mxu0 0
        %1533 = vmatpush1.bf16.msra.mxu0 0
        %1534 = vmatprep.subr.bf16.mxu0 0
        %1535 = vmatpush1.bf16.msra.mxu0 0
        %1536 = vmatprep.subr.bf16.mxu0 0
        %1537 = vmatpush1.bf16.msra.mxu0 0
        %1538 = vmatprep.subr.bf16.mxu0 0
        %1539 = vmatpush1.bf16.msra.mxu0 %v1510
        %1540 = vmatprep.subr.bf16.mxu0 0
        %1541 = vmatpush2.bf16.msra.mxu0 0
        %1542 = vmatprep.subr.bf16.mxu0 0
        %1543 = vmatpush2.bf16.msra.mxu0 0
        %1544 = vmatprep.subr.bf16.mxu0 0
        %1545 = vmatpush2.bf16.msra.mxu0 0
        %1546 = vmatprep.subr.bf16.mxu0 0
        %1547 = vmatpush2.bf16.msra.mxu0 0
        %1548 = vmatprep.subr.bf16.mxu0 0
        %1549 = vmatpush2.bf16.msra.mxu0 0
        %1550 = vmatprep.subr.bf16.mxu0 0
        %1551 = vmatpush2.bf16.msra.mxu0 0
        %1552 = vmatprep.subr.bf16.mxu0 0
        %1553 = vmatpush2.bf16.msra.mxu0 0
        %1554 = vmatprep.subr.bf16.mxu0 0
        %1555 = vmatpush2.bf16.msra.mxu0 0
        %1556 = vmatprep.mubr.bf16.mxu0 0
        %1557 = vmatmul.mubr.bf16.gmra.mxu0 %v1513
        %v1558 = vpop.f32.mrf.mxu0
        %v1559 = vadd.f32 0.0, %v1558
        %v1560 = vpop.f32.mrf.mxu0
        %v1561 = vpop.f32.mrf.mxu0
        %v1562 = vadd.f32 0.0, %v1561
        %v1563 = vpop.f32.mrf.mxu0
        %1564 = vmatprep.mubr.bf16.mxu0 0
        %1565 = vmatmul.mubr.bf16.gmra.mxu0 %v1516
        %v1566 = vpop.f32.mrf.mxu0
        %v1567 = vadd.f32 0.0, %v1566
        %v1568 = vpop.f32.mrf.mxu0
        %v1569 = vpop.f32.mrf.mxu0
        %v1570 = vadd.f32 0.0, %v1569
        %v1571 = vpop.f32.mrf.mxu0
        %1572 = vmatprep.mubr.bf16.mxu0 0
        %1573 = vmatmul.mubr.bf16.gmra.mxu0 %v1519
        %v1574 = vpop.f32.mrf.mxu0
        %v1575 = vadd.f32 0.0, %v1574
        %v1576 = vpop.f32.mrf.mxu0
        %v1577 = vpop.f32.mrf.mxu0
        %v1578 = vadd.f32 0.0, %v1577
        %v1579 = vpop.f32.mrf.mxu0
        %1580 = vmatprep.mubr.bf16.mxu0 0
        %1581 = vmatmul.mubr.bf16.gmra.mxu0 %v1522
        %v1582 = vpop.f32.mrf.mxu0
        %v1583 = vadd.f32 0.0, %v1582
        %v1584 = vpop.f32.mrf.mxu0
        %v1585 = vpop.f32.mrf.mxu0
        %v1586 = vadd.f32 0.0, %v1585
        %v1587 = vpop.f32.mrf.mxu0
        %1588 = vdwg.mxu0
        %v1589 = vadd.f32 %v1355, %v1559
        %v1590 = vadd.f32 %v1358, %v1562
        %v1591 = vadd.f32 %v1363, %v1567
        %v1592 = vadd.f32 %v1366, %v1570
        %v1593 = vadd.f32 %v1371, %v1575
        %v1594 = vadd.f32 %v1374, %v1578
        %v1595 = vadd.f32 %v1379, %v1583
        %v1596 = vadd.f32 %v1382, %v1586
        %s1597 = scalar_lea.vmem %s3, 192
        %v1598 = vld [vmem:[%s1597] sm:$0xff]
        %v1599 = vld [vmem:[%s1597 + $0x8] sm:$0xff]
        %v1600 = vld [vmem:[%s1597 + $0x10] sm:$0xff]
        %v1601 = vld [vmem:[%s1597 + $0x18] sm:$0xff]
        %v1602 = vld [vmem:[%s1597 + $0x20] sm:$0xff]
        %v1603 = vld [vmem:[%s1597 + $0x28] sm:$0xff]
        %v1604 = vld [vmem:[%s1597 + $0x30] sm:$0xff]
        %v1605 = vld [vmem:[%s1597 + $0x38] sm:$0xff]
        %v1614 = vunpack.c.l.b16 %v1598
        %v1615 = vunpack.c.h.b16 %v1598
        %v1616 = vunpack.c.l.b16 %v1599
        %v1617 = vunpack.c.h.b16 %v1599
        %v1618 = vunpack.c.l.b16 %v1600
        %v1619 = vunpack.c.h.b16 %v1600
        %v1620 = vunpack.c.l.b16 %v1601
        %v1621 = vunpack.c.h.b16 %v1601
        %v1622 = vunpack.c.l.b16 %v1602
        %v1623 = vunpack.c.h.b16 %v1602
        %v1624 = vunpack.c.l.b16 %v1603
        %v1625 = vunpack.c.h.b16 %v1603
        %v1626 = vunpack.c.l.b16 %v1604
        %v1627 = vunpack.c.h.b16 %v1604
        %v1628 = vunpack.c.l.b16 %v1605
        %v1629 = vunpack.c.h.b16 %v1605
        %v1630 = vpack.c.b16 %v1616, %v1614
        %v1631 = vpack.c.b16 %v1617, %v1615
        %v1632 = vpack.c.b16 %v1620, %v1618
        %v1633 = vpack.c.b16 %v1621, %v1619
        %v1634 = vpack.c.b16 %v1624, %v1622
        %v1635 = vpack.c.b16 %v1625, %v1623
        %v1636 = vpack.c.b16 %v1628, %v1626
        %v1637 = vpack.c.b16 %v1629, %v1627
        %1646 = vmatprep.subr.bf16.mxu0 0
        %1647 = vmatpush1.bf16.msra.mxu0 %v970
        %1648 = vmatprep.subr.bf16.mxu0 0
        %1649 = vmatpush1.bf16.msra.mxu0 %v969
        %1650 = vmatprep.subr.bf16.mxu0 0
        %1651 = vmatpush1.bf16.msra.mxu0 %v968
        %1652 = vmatprep.subr.bf16.mxu0 0
        %1653 = vmatpush1.bf16.msra.mxu0 %v967
        %1654 = vmatprep.subr.bf16.mxu0 0
        %1655 = vmatpush1.bf16.msra.mxu0 %v966
        %1656 = vmatprep.subr.bf16.mxu0 0
        %1657 = vmatpush1.bf16.msra.mxu0 %v965
        %1658 = vmatprep.subr.bf16.mxu0 0
        %1659 = vmatpush1.bf16.msra.mxu0 %v964
        %1660 = vmatprep.subr.bf16.mxu0 0
        %1661 = vmatpush1.bf16.msra.mxu0 %v963
        %1662 = vmatprep.subr.bf16.mxu0 0
        %1663 = vmatpush2.bf16.msra.mxu0 %v978
        %1664 = vmatprep.subr.bf16.mxu0 0
        %1665 = vmatpush2.bf16.msra.mxu0 %v977
        %1666 = vmatprep.subr.bf16.mxu0 0
        %1667 = vmatpush2.bf16.msra.mxu0 %v976
        %1668 = vmatprep.subr.bf16.mxu0 0
        %1669 = vmatpush2.bf16.msra.mxu0 %v975
        %1670 = vmatprep.subr.bf16.mxu0 0
        %1671 = vmatpush2.bf16.msra.mxu0 %v974
        %1672 = vmatprep.subr.bf16.mxu0 0
        %1673 = vmatpush2.bf16.msra.mxu0 %v973
        %1674 = vmatprep.subr.bf16.mxu0 0
        %1675 = vmatpush2.bf16.msra.mxu0 %v972
        %1676 = vmatprep.subr.bf16.mxu0 0
        %1677 = vmatpush2.bf16.msra.mxu0 %v971
        %1678 = vmatprep.mubr.bf16.mxu0 %v1631
        %1679 = vmatmul.mubr.bf16.gmra.mxu0 %v1630
        %v1680 = vpop.f32.mrf.mxu0
        %v1681 = vadd.f32 0.0, %v1680
        %v1682 = vpop.f32.mrf.mxu0
        %v1683 = vpop.f32.mrf.mxu0
        %v1684 = vadd.f32 0.0, %v1683
        %v1685 = vpop.f32.mrf.mxu0
        %1686 = vmatprep.mubr.bf16.mxu0 %v1633
        %1687 = vmatmul.mubr.bf16.gmra.mxu0 %v1632
        %v1688 = vpop.f32.mrf.mxu0
        %v1689 = vadd.f32 0.0, %v1688
        %v1690 = vpop.f32.mrf.mxu0
        %v1691 = vpop.f32.mrf.mxu0
        %v1692 = vadd.f32 0.0, %v1691
        %v1693 = vpop.f32.mrf.mxu0
        %1694 = vmatprep.mubr.bf16.mxu0 %v1635
        %1695 = vmatmul.mubr.bf16.gmra.mxu0 %v1634
        %v1696 = vpop.f32.mrf.mxu0
        %v1697 = vadd.f32 0.0, %v1696
        %v1698 = vpop.f32.mrf.mxu0
        %v1699 = vpop.f32.mrf.mxu0
        %v1700 = vadd.f32 0.0, %v1699
        %v1701 = vpop.f32.mrf.mxu0
        %1702 = vmatprep.mubr.bf16.mxu0 %v1637
        %1703 = vmatmul.mubr.bf16.gmra.mxu0 %v1636
        %v1704 = vpop.f32.mrf.mxu0
        %v1705 = vadd.f32 0.0, %v1704
        %v1706 = vpop.f32.mrf.mxu0
        %v1707 = vpop.f32.mrf.mxu0
        %v1708 = vadd.f32 0.0, %v1707
        %v1709 = vpop.f32.mrf.mxu0
        %1710 = vdwg.mxu0
        %v1711 = vpack.c.bf16 %v1684, %v1681
        %v1712 = vpack.c.bf16 %v1692, %v1689
        %v1713 = vpack.c.bf16 %v1700, %v1697
        %v1714 = vpack.c.bf16 %v1708, %v1705
        %s1715 = scalar_lea.vmem %s4, 24
        %v1716 = vld [vmem:[%s1715] sm:$0xf]
        %v1717 = vld [vmem:[%s1715 + $0x4] sm:$0xf]
        %v1720 = vunpack.c.l.b16 %v1716
        %v1721 = vunpack.c.l.b16 %v1717
        %v1722 = vpack.c.b16 %v1721, %v1720
        %v1725 = vsel %vm930, %v1711, 0
        %v1728 = vsel %vm930, %v1712, 0
        %v1731 = vsel %vm930, %v1713, 0
        %v1734 = vsel %vm930, %v1714, 0
        %1736 = vmatprep.subr.bf16.mxu0 0
        %1737 = vmatpush1.bf16.msra.mxu0 0
        %1738 = vmatprep.subr.bf16.mxu0 0
        %1739 = vmatpush1.bf16.msra.mxu0 0
        %1740 = vmatprep.subr.bf16.mxu0 0
        %1741 = vmatpush1.bf16.msra.mxu0 0
        %1742 = vmatprep.subr.bf16.mxu0 0
        %1743 = vmatpush1.bf16.msra.mxu0 0
        %1744 = vmatprep.subr.bf16.mxu0 0
        %1745 = vmatpush1.bf16.msra.mxu0 0
        %1746 = vmatprep.subr.bf16.mxu0 0
        %1747 = vmatpush1.bf16.msra.mxu0 0
        %1748 = vmatprep.subr.bf16.mxu0 0
        %1749 = vmatpush1.bf16.msra.mxu0 0
        %1750 = vmatprep.subr.bf16.mxu0 0
        %1751 = vmatpush1.bf16.msra.mxu0 %v1722
        %1752 = vmatprep.subr.bf16.mxu0 0
        %1753 = vmatpush2.bf16.msra.mxu0 0
        %1754 = vmatprep.subr.bf16.mxu0 0
        %1755 = vmatpush2.bf16.msra.mxu0 0
        %1756 = vmatprep.subr.bf16.mxu0 0
        %1757 = vmatpush2.bf16.msra.mxu0 0
        %1758 = vmatprep.subr.bf16.mxu0 0
        %1759 = vmatpush2.bf16.msra.mxu0 0
        %1760 = vmatprep.subr.bf16.mxu0 0
        %1761 = vmatpush2.bf16.msra.mxu0 0
        %1762 = vmatprep.subr.bf16.mxu0 0
        %1763 = vmatpush2.bf16.msra.mxu0 0
        %1764 = vmatprep.subr.bf16.mxu0 0
        %1765 = vmatpush2.bf16.msra.mxu0 0
        %1766 = vmatprep.subr.bf16.mxu0 0
        %1767 = vmatpush2.bf16.msra.mxu0 0
        %1768 = vmatprep.mubr.bf16.mxu0 0
        %1769 = vmatmul.mubr.bf16.gmra.mxu0 %v1725
        %v1770 = vpop.f32.mrf.mxu0
        %v1771 = vadd.f32 0.0, %v1770
        %v1772 = vpop.f32.mrf.mxu0
        %v1773 = vpop.f32.mrf.mxu0
        %v1774 = vadd.f32 0.0, %v1773
        %v1775 = vpop.f32.mrf.mxu0
        %1776 = vmatprep.mubr.bf16.mxu0 0
        %1777 = vmatmul.mubr.bf16.gmra.mxu0 %v1728
        %v1778 = vpop.f32.mrf.mxu0
        %v1779 = vadd.f32 0.0, %v1778
        %v1780 = vpop.f32.mrf.mxu0
        %v1781 = vpop.f32.mrf.mxu0
        %v1782 = vadd.f32 0.0, %v1781
        %v1783 = vpop.f32.mrf.mxu0
        %1784 = vmatprep.mubr.bf16.mxu0 0
        %1785 = vmatmul.mubr.bf16.gmra.mxu0 %v1731
        %v1786 = vpop.f32.mrf.mxu0
        %v1787 = vadd.f32 0.0, %v1786
        %v1788 = vpop.f32.mrf.mxu0
        %v1789 = vpop.f32.mrf.mxu0
        %v1790 = vadd.f32 0.0, %v1789
        %v1791 = vpop.f32.mrf.mxu0
        %1792 = vmatprep.mubr.bf16.mxu0 0
        %1793 = vmatmul.mubr.bf16.gmra.mxu0 %v1734
        %v1794 = vpop.f32.mrf.mxu0
        %v1795 = vadd.f32 0.0, %v1794
        %v1796 = vpop.f32.mrf.mxu0
        %v1797 = vpop.f32.mrf.mxu0
        %v1798 = vadd.f32 0.0, %v1797
        %v1799 = vpop.f32.mrf.mxu0
        %1800 = vdwg.mxu0
        %v1801 = vadd.f32 %v1589, %v1771
        %v1802 = vadd.f32 %v1590, %v1774
        %v1803 = vadd.f32 %v1591, %v1779
        %v1804 = vadd.f32 %v1592, %v1782
        %v1805 = vadd.f32 %v1593, %v1787
        %v1806 = vadd.f32 %v1594, %v1790
        %v1807 = vadd.f32 %v1595, %v1795
        %v1808 = vadd.f32 %v1596, %v1798
        %s1809 = scalar_lea.vmem %s3, 256
        %v1810 = vld [vmem:[%s1809] sm:$0xff]
        %v1811 = vld [vmem:[%s1809 + $0x8] sm:$0xff]
        %v1812 = vld [vmem:[%s1809 + $0x10] sm:$0xff]
        %v1813 = vld [vmem:[%s1809 + $0x18] sm:$0xff]
        %v1814 = vld [vmem:[%s1809 + $0x20] sm:$0xff]
        %v1815 = vld [vmem:[%s1809 + $0x28] sm:$0xff]
        %v1816 = vld [vmem:[%s1809 + $0x30] sm:$0xff]
        %v1817 = vld [vmem:[%s1809 + $0x38] sm:$0xff]
        %v1826 = vunpack.c.l.b16 %v1810
        %v1827 = vunpack.c.h.b16 %v1810
        %v1828 = vunpack.c.l.b16 %v1811
        %v1829 = vunpack.c.h.b16 %v1811
        %v1830 = vunpack.c.l.b16 %v1812
        %v1831 = vunpack.c.h.b16 %v1812
        %v1832 = vunpack.c.l.b16 %v1813
        %v1833 = vunpack.c.h.b16 %v1813
        %v1834 = vunpack.c.l.b16 %v1814
        %v1835 = vunpack.c.h.b16 %v1814
        %v1836 = vunpack.c.l.b16 %v1815
        %v1837 = vunpack.c.h.b16 %v1815
        %v1838 = vunpack.c.l.b16 %v1816
        %v1839 = vunpack.c.h.b16 %v1816
        %v1840 = vunpack.c.l.b16 %v1817
        %v1841 = vunpack.c.h.b16 %v1817
        %v1842 = vpack.c.b16 %v1828, %v1826
        %v1843 = vpack.c.b16 %v1829, %v1827
        %v1844 = vpack.c.b16 %v1832, %v1830
        %v1845 = vpack.c.b16 %v1833, %v1831
        %v1846 = vpack.c.b16 %v1836, %v1834
        %v1847 = vpack.c.b16 %v1837, %v1835
        %v1848 = vpack.c.b16 %v1840, %v1838
        %v1849 = vpack.c.b16 %v1841, %v1839
        %1858 = vmatprep.subr.bf16.mxu0 0
        %1859 = vmatpush1.bf16.msra.mxu0 %v970
        %1860 = vmatprep.subr.bf16.mxu0 0
        %1861 = vmatpush1.bf16.msra.mxu0 %v969
        %1862 = vmatprep.subr.bf16.mxu0 0
        %1863 = vmatpush1.bf16.msra.mxu0 %v968
        %1864 = vmatprep.subr.bf16.mxu0 0
        %1865 = vmatpush1.bf16.msra.mxu0 %v967
        %1866 = vmatprep.subr.bf16.mxu0 0
        %1867 = vmatpush1.bf16.msra.mxu0 %v966
        %1868 = vmatprep.subr.bf16.mxu0 0
        %1869 = vmatpush1.bf16.msra.mxu0 %v965
        %1870 = vmatprep.subr.bf16.mxu0 0
        %1871 = vmatpush1.bf16.msra.mxu0 %v964
        %1872 = vmatprep.subr.bf16.mxu0 0
        %1873 = vmatpush1.bf16.msra.mxu0 %v963
        %1874 = vmatprep.subr.bf16.mxu0 0
        %1875 = vmatpush2.bf16.msra.mxu0 %v978
        %1876 = vmatprep.subr.bf16.mxu0 0
        %1877 = vmatpush2.bf16.msra.mxu0 %v977
        %1878 = vmatprep.subr.bf16.mxu0 0
        %1879 = vmatpush2.bf16.msra.mxu0 %v976
        %1880 = vmatprep.subr.bf16.mxu0 0
        %1881 = vmatpush2.bf16.msra.mxu0 %v975
        %1882 = vmatprep.subr.bf16.mxu0 0
        %1883 = vmatpush2.bf16.msra.mxu0 %v974
        %1884 = vmatprep.subr.bf16.mxu0 0
        %1885 = vmatpush2.bf16.msra.mxu0 %v973
        %1886 = vmatprep.subr.bf16.mxu0 0
        %1887 = vmatpush2.bf16.msra.mxu0 %v972
        %1888 = vmatprep.subr.bf16.mxu0 0
        %1889 = vmatpush2.bf16.msra.mxu0 %v971
        %1890 = vmatprep.mubr.bf16.mxu0 %v1843
        %1891 = vmatmul.mubr.bf16.gmra.mxu0 %v1842
        %v1892 = vpop.f32.mrf.mxu0
        %v1893 = vadd.f32 0.0, %v1892
        %v1894 = vpop.f32.mrf.mxu0
        %v1895 = vpop.f32.mrf.mxu0
        %v1896 = vadd.f32 0.0, %v1895
        %v1897 = vpop.f32.mrf.mxu0
        %1898 = vmatprep.mubr.bf16.mxu0 %v1845
        %1899 = vmatmul.mubr.bf16.gmra.mxu0 %v1844
        %v1900 = vpop.f32.mrf.mxu0
        %v1901 = vadd.f32 0.0, %v1900
        %v1902 = vpop.f32.mrf.mxu0
        %v1903 = vpop.f32.mrf.mxu0
        %v1904 = vadd.f32 0.0, %v1903
        %v1905 = vpop.f32.mrf.mxu0
        %1906 = vmatprep.mubr.bf16.mxu0 %v1847
        %1907 = vmatmul.mubr.bf16.gmra.mxu0 %v1846
        %v1908 = vpop.f32.mrf.mxu0
        %v1909 = vadd.f32 0.0, %v1908
        %v1910 = vpop.f32.mrf.mxu0
        %v1911 = vpop.f32.mrf.mxu0
        %v1912 = vadd.f32 0.0, %v1911
        %v1913 = vpop.f32.mrf.mxu0
        %1914 = vmatprep.mubr.bf16.mxu0 %v1849
        %1915 = vmatmul.mubr.bf16.gmra.mxu0 %v1848
        %v1916 = vpop.f32.mrf.mxu0
        %v1917 = vadd.f32 0.0, %v1916
        %v1918 = vpop.f32.mrf.mxu0
        %v1919 = vpop.f32.mrf.mxu0
        %v1920 = vadd.f32 0.0, %v1919
        %v1921 = vpop.f32.mrf.mxu0
        %1922 = vdwg.mxu0
        %v1923 = vpack.c.bf16 %v1896, %v1893
        %v1924 = vpack.c.bf16 %v1904, %v1901
        %v1925 = vpack.c.bf16 %v1912, %v1909
        %v1926 = vpack.c.bf16 %v1920, %v1917
        %s1927 = scalar_lea.vmem %s4, 32
        %v1928 = vld [vmem:[%s1927] sm:$0xf]
        %v1929 = vld [vmem:[%s1927 + $0x4] sm:$0xf]
        %v1932 = vunpack.c.l.b16 %v1928
        %v1933 = vunpack.c.l.b16 %v1929
        %v1934 = vpack.c.b16 %v1933, %v1932
        %v1937 = vsel %vm930, %v1923, 0
        %v1940 = vsel %vm930, %v1924, 0
        %v1943 = vsel %vm930, %v1925, 0
        %v1946 = vsel %vm930, %v1926, 0
        %1948 = vmatprep.subr.bf16.mxu0 0
        %1949 = vmatpush1.bf16.msra.mxu0 0
        %1950 = vmatprep.subr.bf16.mxu0 0
        %1951 = vmatpush1.bf16.msra.mxu0 0
        %1952 = vmatprep.subr.bf16.mxu0 0
        %1953 = vmatpush1.bf16.msra.mxu0 0
        %1954 = vmatprep.subr.bf16.mxu0 0
        %1955 = vmatpush1.bf16.msra.mxu0 0
        %1956 = vmatprep.subr.bf16.mxu0 0
        %1957 = vmatpush1.bf16.msra.mxu0 0
        %1958 = vmatprep.subr.bf16.mxu0 0
        %1959 = vmatpush1.bf16.msra.mxu0 0
        %1960 = vmatprep.subr.bf16.mxu0 0
        %1961 = vmatpush1.bf16.msra.mxu0 0
        %1962 = vmatprep.subr.bf16.mxu0 0
        %1963 = vmatpush1.bf16.msra.mxu0 %v1934
        %1964 = vmatprep.subr.bf16.mxu0 0
        %1965 = vmatpush2.bf16.msra.mxu0 0
        %1966 = vmatprep.subr.bf16.mxu0 0
        %1967 = vmatpush2.bf16.msra.mxu0 0
        %1968 = vmatprep.subr.bf16.mxu0 0
        %1969 = vmatpush2.bf16.msra.mxu0 0
        %1970 = vmatprep.subr.bf16.mxu0 0
        %1971 = vmatpush2.bf16.msra.mxu0 0
        %1972 = vmatprep.subr.bf16.mxu0 0
        %1973 = vmatpush2.bf16.msra.mxu0 0
        %1974 = vmatprep.subr.bf16.mxu0 0
        %1975 = vmatpush2.bf16.msra.mxu0 0
        %1976 = vmatprep.subr.bf16.mxu0 0
        %1977 = vmatpush2.bf16.msra.mxu0 0
        %1978 = vmatprep.subr.bf16.mxu0 0
        %1979 = vmatpush2.bf16.msra.mxu0 0
        %1980 = vmatprep.mubr.bf16.mxu0 0
        %1981 = vmatmul.mubr.bf16.gmra.mxu0 %v1937
        %v1982 = vpop.f32.mrf.mxu0
        %v1983 = vadd.f32 0.0, %v1982
        %v1984 = vpop.f32.mrf.mxu0
        %v1985 = vpop.f32.mrf.mxu0
        %v1986 = vadd.f32 0.0, %v1985
        %v1987 = vpop.f32.mrf.mxu0
        %1988 = vmatprep.mubr.bf16.mxu0 0
        %1989 = vmatmul.mubr.bf16.gmra.mxu0 %v1940
        %v1990 = vpop.f32.mrf.mxu0
        %v1991 = vadd.f32 0.0, %v1990
        %v1992 = vpop.f32.mrf.mxu0
        %v1993 = vpop.f32.mrf.mxu0
        %v1994 = vadd.f32 0.0, %v1993
        %v1995 = vpop.f32.mrf.mxu0
        %1996 = vmatprep.mubr.bf16.mxu0 0
        %1997 = vmatmul.mubr.bf16.gmra.mxu0 %v1943
        %v1998 = vpop.f32.mrf.mxu0
        %v1999 = vadd.f32 0.0, %v1998
        %v2000 = vpop.f32.mrf.mxu0
        %v2001 = vpop.f32.mrf.mxu0
        %v2002 = vadd.f32 0.0, %v2001
        %v2003 = vpop.f32.mrf.mxu0
        %2004 = vmatprep.mubr.bf16.mxu0 0
        %2005 = vmatmul.mubr.bf16.gmra.mxu0 %v1946
        %v2006 = vpop.f32.mrf.mxu0
        %v2007 = vadd.f32 0.0, %v2006
        %v2008 = vpop.f32.mrf.mxu0
        %v2009 = vpop.f32.mrf.mxu0
        %v2010 = vadd.f32 0.0, %v2009
        %v2011 = vpop.f32.mrf.mxu0
        %2012 = vdwg.mxu0
        %v2013 = vadd.f32 %v1801, %v1983
        %v2014 = vadd.f32 %v1802, %v1986
        %v2015 = vadd.f32 %v1803, %v1991
        %v2016 = vadd.f32 %v1804, %v1994
        %v2017 = vadd.f32 %v1805, %v1999
        %v2018 = vadd.f32 %v1806, %v2002
        %v2019 = vadd.f32 %v1807, %v2007
        %v2020 = vadd.f32 %v1808, %v2010
        %s2021 = scalar_lea.vmem %s3, 320
        %v2022 = vld [vmem:[%s2021] sm:$0xff]
        %v2023 = vld [vmem:[%s2021 + $0x8] sm:$0xff]
        %v2024 = vld [vmem:[%s2021 + $0x10] sm:$0xff]
        %v2025 = vld [vmem:[%s2021 + $0x18] sm:$0xff]
        %v2026 = vld [vmem:[%s2021 + $0x20] sm:$0xff]
        %v2027 = vld [vmem:[%s2021 + $0x28] sm:$0xff]
        %v2028 = vld [vmem:[%s2021 + $0x30] sm:$0xff]
        %v2029 = vld [vmem:[%s2021 + $0x38] sm:$0xff]
        %v2038 = vunpack.c.l.b16 %v2022
        %v2039 = vunpack.c.h.b16 %v2022
        %v2040 = vunpack.c.l.b16 %v2023
        %v2041 = vunpack.c.h.b16 %v2023
        %v2042 = vunpack.c.l.b16 %v2024
        %v2043 = vunpack.c.h.b16 %v2024
        %v2044 = vunpack.c.l.b16 %v2025
        %v2045 = vunpack.c.h.b16 %v2025
        %v2046 = vunpack.c.l.b16 %v2026
        %v2047 = vunpack.c.h.b16 %v2026
        %v2048 = vunpack.c.l.b16 %v2027
        %v2049 = vunpack.c.h.b16 %v2027
        %v2050 = vunpack.c.l.b16 %v2028
        %v2051 = vunpack.c.h.b16 %v2028
        %v2052 = vunpack.c.l.b16 %v2029
        %v2053 = vunpack.c.h.b16 %v2029
        %v2054 = vpack.c.b16 %v2040, %v2038
        %v2055 = vpack.c.b16 %v2041, %v2039
        %v2056 = vpack.c.b16 %v2044, %v2042
        %v2057 = vpack.c.b16 %v2045, %v2043
        %v2058 = vpack.c.b16 %v2048, %v2046
        %v2059 = vpack.c.b16 %v2049, %v2047
        %v2060 = vpack.c.b16 %v2052, %v2050
        %v2061 = vpack.c.b16 %v2053, %v2051
        %2070 = vmatprep.subr.bf16.mxu0 0
        %2071 = vmatpush1.bf16.msra.mxu0 %v970
        %2072 = vmatprep.subr.bf16.mxu0 0
        %2073 = vmatpush1.bf16.msra.mxu0 %v969
        %2074 = vmatprep.subr.bf16.mxu0 0
        %2075 = vmatpush1.bf16.msra.mxu0 %v968
        %2076 = vmatprep.subr.bf16.mxu0 0
        %2077 = vmatpush1.bf16.msra.mxu0 %v967
        %2078 = vmatprep.subr.bf16.mxu0 0
        %2079 = vmatpush1.bf16.msra.mxu0 %v966
        %2080 = vmatprep.subr.bf16.mxu0 0
        %2081 = vmatpush1.bf16.msra.mxu0 %v965
        %2082 = vmatprep.subr.bf16.mxu0 0
        %2083 = vmatpush1.bf16.msra.mxu0 %v964
        %2084 = vmatprep.subr.bf16.mxu0 0
        %2085 = vmatpush1.bf16.msra.mxu0 %v963
        %2086 = vmatprep.subr.bf16.mxu0 0
        %2087 = vmatpush2.bf16.msra.mxu0 %v978
        %2088 = vmatprep.subr.bf16.mxu0 0
        %2089 = vmatpush2.bf16.msra.mxu0 %v977
        %2090 = vmatprep.subr.bf16.mxu0 0
        %2091 = vmatpush2.bf16.msra.mxu0 %v976
        %2092 = vmatprep.subr.bf16.mxu0 0
        %2093 = vmatpush2.bf16.msra.mxu0 %v975
        %2094 = vmatprep.subr.bf16.mxu0 0
        %2095 = vmatpush2.bf16.msra.mxu0 %v974
        %2096 = vmatprep.subr.bf16.mxu0 0
        %2097 = vmatpush2.bf16.msra.mxu0 %v973
        %2098 = vmatprep.subr.bf16.mxu0 0
        %2099 = vmatpush2.bf16.msra.mxu0 %v972
        %2100 = vmatprep.subr.bf16.mxu0 0
        %2101 = vmatpush2.bf16.msra.mxu0 %v971
        %2102 = vmatprep.mubr.bf16.mxu0 %v2055
        %2103 = vmatmul.mubr.bf16.gmra.mxu0 %v2054
        %v2104 = vpop.f32.mrf.mxu0
        %v2105 = vadd.f32 0.0, %v2104
        %v2106 = vpop.f32.mrf.mxu0
        %v2107 = vpop.f32.mrf.mxu0
        %v2108 = vadd.f32 0.0, %v2107
        %v2109 = vpop.f32.mrf.mxu0
        %2110 = vmatprep.mubr.bf16.mxu0 %v2057
        %2111 = vmatmul.mubr.bf16.gmra.mxu0 %v2056
        %v2112 = vpop.f32.mrf.mxu0
        %v2113 = vadd.f32 0.0, %v2112
        %v2114 = vpop.f32.mrf.mxu0
        %v2115 = vpop.f32.mrf.mxu0
        %v2116 = vadd.f32 0.0, %v2115
        %v2117 = vpop.f32.mrf.mxu0
        %2118 = vmatprep.mubr.bf16.mxu0 %v2059
        %2119 = vmatmul.mubr.bf16.gmra.mxu0 %v2058
        %v2120 = vpop.f32.mrf.mxu0
        %v2121 = vadd.f32 0.0, %v2120
        %v2122 = vpop.f32.mrf.mxu0
        %v2123 = vpop.f32.mrf.mxu0
        %v2124 = vadd.f32 0.0, %v2123
        %v2125 = vpop.f32.mrf.mxu0
        %2126 = vmatprep.mubr.bf16.mxu0 %v2061
        %2127 = vmatmul.mubr.bf16.gmra.mxu0 %v2060
        %v2128 = vpop.f32.mrf.mxu0
        %v2129 = vadd.f32 0.0, %v2128
        %v2130 = vpop.f32.mrf.mxu0
        %v2131 = vpop.f32.mrf.mxu0
        %v2132 = vadd.f32 0.0, %v2131
        %v2133 = vpop.f32.mrf.mxu0
        %2134 = vdwg.mxu0
        %v2135 = vpack.c.bf16 %v2108, %v2105
        %v2136 = vpack.c.bf16 %v2116, %v2113
        %v2137 = vpack.c.bf16 %v2124, %v2121
        %v2138 = vpack.c.bf16 %v2132, %v2129
        %s2139 = scalar_lea.vmem %s4, 40
        %v2140 = vld [vmem:[%s2139] sm:$0xf]
        %v2141 = vld [vmem:[%s2139 + $0x4] sm:$0xf]
        %v2144 = vunpack.c.l.b16 %v2140
        %v2145 = vunpack.c.l.b16 %v2141
        %v2146 = vpack.c.b16 %v2145, %v2144
        %v2149 = vsel %vm930, %v2135, 0
        %v2152 = vsel %vm930, %v2136, 0
        %v2155 = vsel %vm930, %v2137, 0
        %v2158 = vsel %vm930, %v2138, 0
        %2160 = vmatprep.subr.bf16.mxu0 0
        %2161 = vmatpush1.bf16.msra.mxu0 0
        %2162 = vmatprep.subr.bf16.mxu0 0
        %2163 = vmatpush1.bf16.msra.mxu0 0
        %2164 = vmatprep.subr.bf16.mxu0 0
        %2165 = vmatpush1.bf16.msra.mxu0 0
        %2166 = vmatprep.subr.bf16.mxu0 0
        %2167 = vmatpush1.bf16.msra.mxu0 0
        %2168 = vmatprep.subr.bf16.mxu0 0
        %2169 = vmatpush1.bf16.msra.mxu0 0
        %2170 = vmatprep.subr.bf16.mxu0 0
        %2171 = vmatpush1.bf16.msra.mxu0 0
        %2172 = vmatprep.subr.bf16.mxu0 0
        %2173 = vmatpush1.bf16.msra.mxu0 0
        %2174 = vmatprep.subr.bf16.mxu0 0
        %2175 = vmatpush1.bf16.msra.mxu0 %v2146
        %2176 = vmatprep.subr.bf16.mxu0 0
        %2177 = vmatpush2.bf16.msra.mxu0 0
        %2178 = vmatprep.subr.bf16.mxu0 0
        %2179 = vmatpush2.bf16.msra.mxu0 0
        %2180 = vmatprep.subr.bf16.mxu0 0
        %2181 = vmatpush2.bf16.msra.mxu0 0
        %2182 = vmatprep.subr.bf16.mxu0 0
        %2183 = vmatpush2.bf16.msra.mxu0 0
        %2184 = vmatprep.subr.bf16.mxu0 0
        %2185 = vmatpush2.bf16.msra.mxu0 0
        %2186 = vmatprep.subr.bf16.mxu0 0
        %2187 = vmatpush2.bf16.msra.mxu0 0
        %2188 = vmatprep.subr.bf16.mxu0 0
        %2189 = vmatpush2.bf16.msra.mxu0 0
        %2190 = vmatprep.subr.bf16.mxu0 0
        %2191 = vmatpush2.bf16.msra.mxu0 0
        %2192 = vmatprep.mubr.bf16.mxu0 0
        %2193 = vmatmul.mubr.bf16.gmra.mxu0 %v2149
        %v2194 = vpop.f32.mrf.mxu0
        %v2195 = vadd.f32 0.0, %v2194
        %v2196 = vpop.f32.mrf.mxu0
        %v2197 = vpop.f32.mrf.mxu0
        %v2198 = vadd.f32 0.0, %v2197
        %v2199 = vpop.f32.mrf.mxu0
        %2200 = vmatprep.mubr.bf16.mxu0 0
        %2201 = vmatmul.mubr.bf16.gmra.mxu0 %v2152
        %v2202 = vpop.f32.mrf.mxu0
        %v2203 = vadd.f32 0.0, %v2202
        %v2204 = vpop.f32.mrf.mxu0
        %v2205 = vpop.f32.mrf.mxu0
        %v2206 = vadd.f32 0.0, %v2205
        %v2207 = vpop.f32.mrf.mxu0
        %2208 = vmatprep.mubr.bf16.mxu0 0
        %2209 = vmatmul.mubr.bf16.gmra.mxu0 %v2155
        %v2210 = vpop.f32.mrf.mxu0
        %v2211 = vadd.f32 0.0, %v2210
        %v2212 = vpop.f32.mrf.mxu0
        %v2213 = vpop.f32.mrf.mxu0
        %v2214 = vadd.f32 0.0, %v2213
        %v2215 = vpop.f32.mrf.mxu0
        %2216 = vmatprep.mubr.bf16.mxu0 0
        %2217 = vmatmul.mubr.bf16.gmra.mxu0 %v2158
        %v2218 = vpop.f32.mrf.mxu0
        %v2219 = vadd.f32 0.0, %v2218
        %v2220 = vpop.f32.mrf.mxu0
        %v2221 = vpop.f32.mrf.mxu0
        %v2222 = vadd.f32 0.0, %v2221
        %v2223 = vpop.f32.mrf.mxu0
        %2224 = vdwg.mxu0
        %v2225 = vadd.f32 %v2013, %v2195
        %v2226 = vadd.f32 %v2014, %v2198
        %v2227 = vadd.f32 %v2015, %v2203
        %v2228 = vadd.f32 %v2016, %v2206
        %v2229 = vadd.f32 %v2017, %v2211
        %v2230 = vadd.f32 %v2018, %v2214
        %v2231 = vadd.f32 %v2019, %v2219
        %v2232 = vadd.f32 %v2020, %v2222
        %s2233 = scalar_lea.vmem %s3, 384
        %v2234 = vld [vmem:[%s2233] sm:$0xff]
        %v2235 = vld [vmem:[%s2233 + $0x8] sm:$0xff]
        %v2236 = vld [vmem:[%s2233 + $0x10] sm:$0xff]
        %v2237 = vld [vmem:[%s2233 + $0x18] sm:$0xff]
        %v2238 = vld [vmem:[%s2233 + $0x20] sm:$0xff]
        %v2239 = vld [vmem:[%s2233 + $0x28] sm:$0xff]
        %v2240 = vld [vmem:[%s2233 + $0x30] sm:$0xff]
        %v2241 = vld [vmem:[%s2233 + $0x38] sm:$0xff]
        %v2250 = vunpack.c.l.b16 %v2234
        %v2251 = vunpack.c.h.b16 %v2234
        %v2252 = vunpack.c.l.b16 %v2235
        %v2253 = vunpack.c.h.b16 %v2235
        %v2254 = vunpack.c.l.b16 %v2236
        %v2255 = vunpack.c.h.b16 %v2236
        %v2256 = vunpack.c.l.b16 %v2237
        %v2257 = vunpack.c.h.b16 %v2237
        %v2258 = vunpack.c.l.b16 %v2238
        %v2259 = vunpack.c.h.b16 %v2238
        %v2260 = vunpack.c.l.b16 %v2239
        %v2261 = vunpack.c.h.b16 %v2239
        %v2262 = vunpack.c.l.b16 %v2240
        %v2263 = vunpack.c.h.b16 %v2240
        %v2264 = vunpack.c.l.b16 %v2241
        %v2265 = vunpack.c.h.b16 %v2241
        %v2266 = vpack.c.b16 %v2252, %v2250
        %v2267 = vpack.c.b16 %v2253, %v2251
        %v2268 = vpack.c.b16 %v2256, %v2254
        %v2269 = vpack.c.b16 %v2257, %v2255
        %v2270 = vpack.c.b16 %v2260, %v2258
        %v2271 = vpack.c.b16 %v2261, %v2259
        %v2272 = vpack.c.b16 %v2264, %v2262
        %v2273 = vpack.c.b16 %v2265, %v2263
        %2282 = vmatprep.subr.bf16.mxu0 0
        %2283 = vmatpush1.bf16.msra.mxu0 %v970
        %2284 = vmatprep.subr.bf16.mxu0 0
        %2285 = vmatpush1.bf16.msra.mxu0 %v969
        %2286 = vmatprep.subr.bf16.mxu0 0
        %2287 = vmatpush1.bf16.msra.mxu0 %v968
        %2288 = vmatprep.subr.bf16.mxu0 0
        %2289 = vmatpush1.bf16.msra.mxu0 %v967
        %2290 = vmatprep.subr.bf16.mxu0 0
        %2291 = vmatpush1.bf16.msra.mxu0 %v966
        %2292 = vmatprep.subr.bf16.mxu0 0
        %2293 = vmatpush1.bf16.msra.mxu0 %v965
        %2294 = vmatprep.subr.bf16.mxu0 0
        %2295 = vmatpush1.bf16.msra.mxu0 %v964
        %2296 = vmatprep.subr.bf16.mxu0 0
        %2297 = vmatpush1.bf16.msra.mxu0 %v963
        %2298 = vmatprep.subr.bf16.mxu0 0
        %2299 = vmatpush2.bf16.msra.mxu0 %v978
        %2300 = vmatprep.subr.bf16.mxu0 0
        %2301 = vmatpush2.bf16.msra.mxu0 %v977
        %2302 = vmatprep.subr.bf16.mxu0 0
        %2303 = vmatpush2.bf16.msra.mxu0 %v976
        %2304 = vmatprep.subr.bf16.mxu0 0
        %2305 = vmatpush2.bf16.msra.mxu0 %v975
        %2306 = vmatprep.subr.bf16.mxu0 0
        %2307 = vmatpush2.bf16.msra.mxu0 %v974
        %2308 = vmatprep.subr.bf16.mxu0 0
        %2309 = vmatpush2.bf16.msra.mxu0 %v973
        %2310 = vmatprep.subr.bf16.mxu0 0
        %2311 = vmatpush2.bf16.msra.mxu0 %v972
        %2312 = vmatprep.subr.bf16.mxu0 0
        %2313 = vmatpush2.bf16.msra.mxu0 %v971
        %2314 = vmatprep.mubr.bf16.mxu0 %v2267
        %2315 = vmatmul.mubr.bf16.gmra.mxu0 %v2266
        %v2316 = vpop.f32.mrf.mxu0
        %v2317 = vadd.f32 0.0, %v2316
        %v2318 = vpop.f32.mrf.mxu0
        %v2319 = vpop.f32.mrf.mxu0
        %v2320 = vadd.f32 0.0, %v2319
        %v2321 = vpop.f32.mrf.mxu0
        %2322 = vmatprep.mubr.bf16.mxu0 %v2269
        %2323 = vmatmul.mubr.bf16.gmra.mxu0 %v2268
        %v2324 = vpop.f32.mrf.mxu0
        %v2325 = vadd.f32 0.0, %v2324
        %v2326 = vpop.f32.mrf.mxu0
        %v2327 = vpop.f32.mrf.mxu0
        %v2328 = vadd.f32 0.0, %v2327
        %v2329 = vpop.f32.mrf.mxu0
        %2330 = vmatprep.mubr.bf16.mxu0 %v2271
        %2331 = vmatmul.mubr.bf16.gmra.mxu0 %v2270
        %v2332 = vpop.f32.mrf.mxu0
        %v2333 = vadd.f32 0.0, %v2332
        %v2334 = vpop.f32.mrf.mxu0
        %v2335 = vpop.f32.mrf.mxu0
        %v2336 = vadd.f32 0.0, %v2335
        %v2337 = vpop.f32.mrf.mxu0
        %2338 = vmatprep.mubr.bf16.mxu0 %v2273
        %2339 = vmatmul.mubr.bf16.gmra.mxu0 %v2272
        %v2340 = vpop.f32.mrf.mxu0
        %v2341 = vadd.f32 0.0, %v2340
        %v2342 = vpop.f32.mrf.mxu0
        %v2343 = vpop.f32.mrf.mxu0
        %v2344 = vadd.f32 0.0, %v2343
        %v2345 = vpop.f32.mrf.mxu0
        %2346 = vdwg.mxu0
        %v2347 = vpack.c.bf16 %v2320, %v2317
        %v2348 = vpack.c.bf16 %v2328, %v2325
        %v2349 = vpack.c.bf16 %v2336, %v2333
        %v2350 = vpack.c.bf16 %v2344, %v2341
        %s2351 = scalar_lea.vmem %s4, 48
        %v2352 = vld [vmem:[%s2351] sm:$0xf]
        %v2353 = vld [vmem:[%s2351 + $0x4] sm:$0xf]
        %v2356 = vunpack.c.l.b16 %v2352
        %v2357 = vunpack.c.l.b16 %v2353
        %v2358 = vpack.c.b16 %v2357, %v2356
        %v2361 = vsel %vm930, %v2347, 0
        %v2364 = vsel %vm930, %v2348, 0
        %v2367 = vsel %vm930, %v2349, 0
        %v2370 = vsel %vm930, %v2350, 0
        %2372 = vmatprep.subr.bf16.mxu0 0
        %2373 = vmatpush1.bf16.msra.mxu0 0
        %2374 = vmatprep.subr.bf16.mxu0 0
        %2375 = vmatpush1.bf16.msra.mxu0 0
        %2376 = vmatprep.subr.bf16.mxu0 0
        %2377 = vmatpush1.bf16.msra.mxu0 0
        %2378 = vmatprep.subr.bf16.mxu0 0
        %2379 = vmatpush1.bf16.msra.mxu0 0
        %2380 = vmatprep.subr.bf16.mxu0 0
        %2381 = vmatpush1.bf16.msra.mxu0 0
        %2382 = vmatprep.subr.bf16.mxu0 0
        %2383 = vmatpush1.bf16.msra.mxu0 0
        %2384 = vmatprep.subr.bf16.mxu0 0
        %2385 = vmatpush1.bf16.msra.mxu0 0
        %2386 = vmatprep.subr.bf16.mxu0 0
        %2387 = vmatpush1.bf16.msra.mxu0 %v2358
        %2388 = vmatprep.subr.bf16.mxu0 0
        %2389 = vmatpush2.bf16.msra.mxu0 0
        %2390 = vmatprep.subr.bf16.mxu0 0
        %2391 = vmatpush2.bf16.msra.mxu0 0
        %2392 = vmatprep.subr.bf16.mxu0 0
        %2393 = vmatpush2.bf16.msra.mxu0 0
        %2394 = vmatprep.subr.bf16.mxu0 0
        %2395 = vmatpush2.bf16.msra.mxu0 0
        %2396 = vmatprep.subr.bf16.mxu0 0
        %2397 = vmatpush2.bf16.msra.mxu0 0
        %2398 = vmatprep.subr.bf16.mxu0 0
        %2399 = vmatpush2.bf16.msra.mxu0 0
        %2400 = vmatprep.subr.bf16.mxu0 0
        %2401 = vmatpush2.bf16.msra.mxu0 0
        %2402 = vmatprep.subr.bf16.mxu0 0
        %2403 = vmatpush2.bf16.msra.mxu0 0
        %2404 = vmatprep.mubr.bf16.mxu0 0
        %2405 = vmatmul.mubr.bf16.gmra.mxu0 %v2361
        %v2406 = vpop.f32.mrf.mxu0
        %v2407 = vadd.f32 0.0, %v2406
        %v2408 = vpop.f32.mrf.mxu0
        %v2409 = vpop.f32.mrf.mxu0
        %v2410 = vadd.f32 0.0, %v2409
        %v2411 = vpop.f32.mrf.mxu0
        %2412 = vmatprep.mubr.bf16.mxu0 0
        %2413 = vmatmul.mubr.bf16.gmra.mxu0 %v2364
        %v2414 = vpop.f32.mrf.mxu0
        %v2415 = vadd.f32 0.0, %v2414
        %v2416 = vpop.f32.mrf.mxu0
        %v2417 = vpop.f32.mrf.mxu0
        %v2418 = vadd.f32 0.0, %v2417
        %v2419 = vpop.f32.mrf.mxu0
        %2420 = vmatprep.mubr.bf16.mxu0 0
        %2421 = vmatmul.mubr.bf16.gmra.mxu0 %v2367
        %v2422 = vpop.f32.mrf.mxu0
        %v2423 = vadd.f32 0.0, %v2422
        %v2424 = vpop.f32.mrf.mxu0
        %v2425 = vpop.f32.mrf.mxu0
        %v2426 = vadd.f32 0.0, %v2425
        %v2427 = vpop.f32.mrf.mxu0
        %2428 = vmatprep.mubr.bf16.mxu0 0
        %2429 = vmatmul.mubr.bf16.gmra.mxu0 %v2370
        %v2430 = vpop.f32.mrf.mxu0
        %v2431 = vadd.f32 0.0, %v2430
        %v2432 = vpop.f32.mrf.mxu0
        %v2433 = vpop.f32.mrf.mxu0
        %v2434 = vadd.f32 0.0, %v2433
        %v2435 = vpop.f32.mrf.mxu0
        %2436 = vdwg.mxu0
        %v2437 = vadd.f32 %v2225, %v2407
        %v2438 = vadd.f32 %v2226, %v2410
        %v2439 = vadd.f32 %v2227, %v2415
        %v2440 = vadd.f32 %v2228, %v2418
        %v2441 = vadd.f32 %v2229, %v2423
        %v2442 = vadd.f32 %v2230, %v2426
        %v2443 = vadd.f32 %v2231, %v2431
        %v2444 = vadd.f32 %v2232, %v2434
        %s2445 = scalar_lea.vmem %s3, 448
        %v2446 = vld [vmem:[%s2445] sm:$0xff]
        %v2447 = vld [vmem:[%s2445 + $0x8] sm:$0xff]
        %v2448 = vld [vmem:[%s2445 + $0x10] sm:$0xff]
        %v2449 = vld [vmem:[%s2445 + $0x18] sm:$0xff]
        %v2450 = vld [vmem:[%s2445 + $0x20] sm:$0xff]
        %v2451 = vld [vmem:[%s2445 + $0x28] sm:$0xff]
        %v2452 = vld [vmem:[%s2445 + $0x30] sm:$0xff]
        %v2453 = vld [vmem:[%s2445 + $0x38] sm:$0xff]
        %v2462 = vunpack.c.l.b16 %v2446
        %v2463 = vunpack.c.h.b16 %v2446
        %v2464 = vunpack.c.l.b16 %v2447
        %v2465 = vunpack.c.h.b16 %v2447
        %v2466 = vunpack.c.l.b16 %v2448
        %v2467 = vunpack.c.h.b16 %v2448
        %v2468 = vunpack.c.l.b16 %v2449
        %v2469 = vunpack.c.h.b16 %v2449
        %v2470 = vunpack.c.l.b16 %v2450
        %v2471 = vunpack.c.h.b16 %v2450
        %v2472 = vunpack.c.l.b16 %v2451
        %v2473 = vunpack.c.h.b16 %v2451
        %v2474 = vunpack.c.l.b16 %v2452
        %v2475 = vunpack.c.h.b16 %v2452
        %v2476 = vunpack.c.l.b16 %v2453
        %v2477 = vunpack.c.h.b16 %v2453
        %v2478 = vpack.c.b16 %v2464, %v2462
        %v2479 = vpack.c.b16 %v2465, %v2463
        %v2480 = vpack.c.b16 %v2468, %v2466
        %v2481 = vpack.c.b16 %v2469, %v2467
        %v2482 = vpack.c.b16 %v2472, %v2470
        %v2483 = vpack.c.b16 %v2473, %v2471
        %v2484 = vpack.c.b16 %v2476, %v2474
        %v2485 = vpack.c.b16 %v2477, %v2475
        %2494 = vmatprep.subr.bf16.mxu0 0
        %2495 = vmatpush1.bf16.msra.mxu0 %v970
        %2496 = vmatprep.subr.bf16.mxu0 0
        %2497 = vmatpush1.bf16.msra.mxu0 %v969
        %2498 = vmatprep.subr.bf16.mxu0 0
        %2499 = vmatpush1.bf16.msra.mxu0 %v968
        %2500 = vmatprep.subr.bf16.mxu0 0
        %2501 = vmatpush1.bf16.msra.mxu0 %v967
        %2502 = vmatprep.subr.bf16.mxu0 0
        %2503 = vmatpush1.bf16.msra.mxu0 %v966
        %2504 = vmatprep.subr.bf16.mxu0 0
        %2505 = vmatpush1.bf16.msra.mxu0 %v965
        %2506 = vmatprep.subr.bf16.mxu0 0
        %2507 = vmatpush1.bf16.msra.mxu0 %v964
        %2508 = vmatprep.subr.bf16.mxu0 0
        %2509 = vmatpush1.bf16.msra.mxu0 %v963
        %2510 = vmatprep.subr.bf16.mxu0 0
        %2511 = vmatpush2.bf16.msra.mxu0 %v978
        %2512 = vmatprep.subr.bf16.mxu0 0
        %2513 = vmatpush2.bf16.msra.mxu0 %v977
        %2514 = vmatprep.subr.bf16.mxu0 0
        %2515 = vmatpush2.bf16.msra.mxu0 %v976
        %2516 = vmatprep.subr.bf16.mxu0 0
        %2517 = vmatpush2.bf16.msra.mxu0 %v975
        %2518 = vmatprep.subr.bf16.mxu0 0
        %2519 = vmatpush2.bf16.msra.mxu0 %v974
        %2520 = vmatprep.subr.bf16.mxu0 0
        %2521 = vmatpush2.bf16.msra.mxu0 %v973
        %2522 = vmatprep.subr.bf16.mxu0 0
        %2523 = vmatpush2.bf16.msra.mxu0 %v972
        %2524 = vmatprep.subr.bf16.mxu0 0
        %2525 = vmatpush2.bf16.msra.mxu0 %v971
        %2526 = vmatprep.mubr.bf16.mxu0 %v2479
        %2527 = vmatmul.mubr.bf16.gmra.mxu0 %v2478
        %v2528 = vpop.f32.mrf.mxu0
        %v2529 = vadd.f32 0.0, %v2528
        %v2530 = vpop.f32.mrf.mxu0
        %v2531 = vpop.f32.mrf.mxu0
        %v2532 = vadd.f32 0.0, %v2531
        %v2533 = vpop.f32.mrf.mxu0
        %2534 = vmatprep.mubr.bf16.mxu0 %v2481
        %2535 = vmatmul.mubr.bf16.gmra.mxu0 %v2480
        %v2536 = vpop.f32.mrf.mxu0
        %v2537 = vadd.f32 0.0, %v2536
        %v2538 = vpop.f32.mrf.mxu0
        %v2539 = vpop.f32.mrf.mxu0
        %v2540 = vadd.f32 0.0, %v2539
        %v2541 = vpop.f32.mrf.mxu0
        %2542 = vmatprep.mubr.bf16.mxu0 %v2483
        %2543 = vmatmul.mubr.bf16.gmra.mxu0 %v2482
        %v2544 = vpop.f32.mrf.mxu0
        %v2545 = vadd.f32 0.0, %v2544
        %v2546 = vpop.f32.mrf.mxu0
        %v2547 = vpop.f32.mrf.mxu0
        %v2548 = vadd.f32 0.0, %v2547
        %v2549 = vpop.f32.mrf.mxu0
        %2550 = vmatprep.mubr.bf16.mxu0 %v2485
        %2551 = vmatmul.mubr.bf16.gmra.mxu0 %v2484
        %v2552 = vpop.f32.mrf.mxu0
        %v2553 = vadd.f32 0.0, %v2552
        %v2554 = vpop.f32.mrf.mxu0
        %v2555 = vpop.f32.mrf.mxu0
        %v2556 = vadd.f32 0.0, %v2555
        %v2557 = vpop.f32.mrf.mxu0
        %2558 = vdwg.mxu0
        %v2559 = vpack.c.bf16 %v2532, %v2529
        %v2560 = vpack.c.bf16 %v2540, %v2537
        %v2561 = vpack.c.bf16 %v2548, %v2545
        %v2562 = vpack.c.bf16 %v2556, %v2553
        %s2563 = scalar_lea.vmem %s4, 56
        %v2564 = vld [vmem:[%s2563] sm:$0xf]
        %v2565 = vld [vmem:[%s2563 + $0x4] sm:$0xf]
        %v2568 = vunpack.c.l.b16 %v2564
        %v2569 = vunpack.c.l.b16 %v2565
        %v2570 = vpack.c.b16 %v2569, %v2568
        %v2573 = vsel %vm930, %v2559, 0
        %v2576 = vsel %vm930, %v2560, 0
        %v2579 = vsel %vm930, %v2561, 0
        %v2582 = vsel %vm930, %v2562, 0
        %2584 = vmatprep.subr.bf16.mxu0 0
        %2585 = vmatpush1.bf16.msra.mxu0 0
        %2586 = vmatprep.subr.bf16.mxu0 0
        %2587 = vmatpush1.bf16.msra.mxu0 0
        %2588 = vmatprep.subr.bf16.mxu0 0
        %2589 = vmatpush1.bf16.msra.mxu0 0
        %2590 = vmatprep.subr.bf16.mxu0 0
        %2591 = vmatpush1.bf16.msra.mxu0 0
        %2592 = vmatprep.subr.bf16.mxu0 0
        %2593 = vmatpush1.bf16.msra.mxu0 0
        %2594 = vmatprep.subr.bf16.mxu0 0
        %2595 = vmatpush1.bf16.msra.mxu0 0
        %2596 = vmatprep.subr.bf16.mxu0 0
        %2597 = vmatpush1.bf16.msra.mxu0 0
        %2598 = vmatprep.subr.bf16.mxu0 0
        %2599 = vmatpush1.bf16.msra.mxu0 %v2570
        %2600 = vmatprep.subr.bf16.mxu0 0
        %2601 = vmatpush2.bf16.msra.mxu0 0
        %2602 = vmatprep.subr.bf16.mxu0 0
        %2603 = vmatpush2.bf16.msra.mxu0 0
        %2604 = vmatprep.subr.bf16.mxu0 0
        %2605 = vmatpush2.bf16.msra.mxu0 0
        %2606 = vmatprep.subr.bf16.mxu0 0
        %2607 = vmatpush2.bf16.msra.mxu0 0
        %2608 = vmatprep.subr.bf16.mxu0 0
        %2609 = vmatpush2.bf16.msra.mxu0 0
        %2610 = vmatprep.subr.bf16.mxu0 0
        %2611 = vmatpush2.bf16.msra.mxu0 0
        %2612 = vmatprep.subr.bf16.mxu0 0
        %2613 = vmatpush2.bf16.msra.mxu0 0
        %2614 = vmatprep.subr.bf16.mxu0 0
        %2615 = vmatpush2.bf16.msra.mxu0 0
        %2616 = vmatprep.mubr.bf16.mxu0 0
        %2617 = vmatmul.mubr.bf16.gmra.mxu0 %v2573
        %v2618 = vpop.f32.mrf.mxu0
        %v2619 = vadd.f32 0.0, %v2618
        %v2620 = vpop.f32.mrf.mxu0
        %v2621 = vpop.f32.mrf.mxu0
        %v2622 = vadd.f32 0.0, %v2621
        %v2623 = vpop.f32.mrf.mxu0
        %2624 = vmatprep.mubr.bf16.mxu0 0
        %2625 = vmatmul.mubr.bf16.gmra.mxu0 %v2576
        %v2626 = vpop.f32.mrf.mxu0
        %v2627 = vadd.f32 0.0, %v2626
        %v2628 = vpop.f32.mrf.mxu0
        %v2629 = vpop.f32.mrf.mxu0
        %v2630 = vadd.f32 0.0, %v2629
        %v2631 = vpop.f32.mrf.mxu0
        %2632 = vmatprep.mubr.bf16.mxu0 0
        %2633 = vmatmul.mubr.bf16.gmra.mxu0 %v2579
        %v2634 = vpop.f32.mrf.mxu0
        %v2635 = vadd.f32 0.0, %v2634
        %v2636 = vpop.f32.mrf.mxu0
        %v2637 = vpop.f32.mrf.mxu0
        %v2638 = vadd.f32 0.0, %v2637
        %v2639 = vpop.f32.mrf.mxu0
        %2640 = vmatprep.mubr.bf16.mxu0 0
        %2641 = vmatmul.mubr.bf16.gmra.mxu0 %v2582
        %v2642 = vpop.f32.mrf.mxu0
        %v2643 = vadd.f32 0.0, %v2642
        %v2644 = vpop.f32.mrf.mxu0
        %v2645 = vpop.f32.mrf.mxu0
        %v2646 = vadd.f32 0.0, %v2645
        %v2647 = vpop.f32.mrf.mxu0
        %2648 = vdwg.mxu0
        %v2649 = vadd.f32 %v2437, %v2619
        %v2650 = vadd.f32 %v2438, %v2622
        %v2651 = vadd.f32 %v2439, %v2627
        %v2652 = vadd.f32 %v2440, %v2630
        %v2653 = vadd.f32 %v2441, %v2635
        %v2654 = vadd.f32 %v2442, %v2638
        %v2655 = vadd.f32 %v2443, %v2643
        %v2656 = vadd.f32 %v2444, %v2646
        %s2657 = scalar_lea.vmem %s3, 512
        %v2658 = vld [vmem:[%s2657] sm:$0xff]
        %v2659 = vld [vmem:[%s2657 + $0x8] sm:$0xff]
        %v2660 = vld [vmem:[%s2657 + $0x10] sm:$0xff]
        %v2661 = vld [vmem:[%s2657 + $0x18] sm:$0xff]
        %v2662 = vld [vmem:[%s2657 + $0x20] sm:$0xff]
        %v2663 = vld [vmem:[%s2657 + $0x28] sm:$0xff]
        %v2664 = vld [vmem:[%s2657 + $0x30] sm:$0xff]
        %v2665 = vld [vmem:[%s2657 + $0x38] sm:$0xff]
        %v2674 = vunpack.c.l.b16 %v2658
        %v2675 = vunpack.c.h.b16 %v2658
        %v2676 = vunpack.c.l.b16 %v2659
        %v2677 = vunpack.c.h.b16 %v2659
        %v2678 = vunpack.c.l.b16 %v2660
        %v2679 = vunpack.c.h.b16 %v2660
        %v2680 = vunpack.c.l.b16 %v2661
        %v2681 = vunpack.c.h.b16 %v2661
        %v2682 = vunpack.c.l.b16 %v2662
        %v2683 = vunpack.c.h.b16 %v2662
        %v2684 = vunpack.c.l.b16 %v2663
        %v2685 = vunpack.c.h.b16 %v2663
        %v2686 = vunpack.c.l.b16 %v2664
        %v2687 = vunpack.c.h.b16 %v2664
        %v2688 = vunpack.c.l.b16 %v2665
        %v2689 = vunpack.c.h.b16 %v2665
        %v2690 = vpack.c.b16 %v2676, %v2674
        %v2691 = vpack.c.b16 %v2677, %v2675
        %v2692 = vpack.c.b16 %v2680, %v2678
        %v2693 = vpack.c.b16 %v2681, %v2679
        %v2694 = vpack.c.b16 %v2684, %v2682
        %v2695 = vpack.c.b16 %v2685, %v2683
        %v2696 = vpack.c.b16 %v2688, %v2686
        %v2697 = vpack.c.b16 %v2689, %v2687
        %2706 = vmatprep.subr.bf16.mxu0 0
        %2707 = vmatpush1.bf16.msra.mxu0 %v970
        %2708 = vmatprep.subr.bf16.mxu0 0
        %2709 = vmatpush1.bf16.msra.mxu0 %v969
        %2710 = vmatprep.subr.bf16.mxu0 0
        %2711 = vmatpush1.bf16.msra.mxu0 %v968
        %2712 = vmatprep.subr.bf16.mxu0 0
        %2713 = vmatpush1.bf16.msra.mxu0 %v967
        %2714 = vmatprep.subr.bf16.mxu0 0
        %2715 = vmatpush1.bf16.msra.mxu0 %v966
        %2716 = vmatprep.subr.bf16.mxu0 0
        %2717 = vmatpush1.bf16.msra.mxu0 %v965
        %2718 = vmatprep.subr.bf16.mxu0 0
        %2719 = vmatpush1.bf16.msra.mxu0 %v964
        %2720 = vmatprep.subr.bf16.mxu0 0
        %2721 = vmatpush1.bf16.msra.mxu0 %v963
        %2722 = vmatprep.subr.bf16.mxu0 0
        %2723 = vmatpush2.bf16.msra.mxu0 %v978
        %2724 = vmatprep.subr.bf16.mxu0 0
        %2725 = vmatpush2.bf16.msra.mxu0 %v977
        %2726 = vmatprep.subr.bf16.mxu0 0
        %2727 = vmatpush2.bf16.msra.mxu0 %v976
        %2728 = vmatprep.subr.bf16.mxu0 0
        %2729 = vmatpush2.bf16.msra.mxu0 %v975
        %2730 = vmatprep.subr.bf16.mxu0 0
        %2731 = vmatpush2.bf16.msra.mxu0 %v974
        %2732 = vmatprep.subr.bf16.mxu0 0
        %2733 = vmatpush2.bf16.msra.mxu0 %v973
        %2734 = vmatprep.subr.bf16.mxu0 0
        %2735 = vmatpush2.bf16.msra.mxu0 %v972
        %2736 = vmatprep.subr.bf16.mxu0 0
        %2737 = vmatpush2.bf16.msra.mxu0 %v971
        %2738 = vmatprep.mubr.bf16.mxu0 %v2691
        %2739 = vmatmul.mubr.bf16.gmra.mxu0 %v2690
        %v2740 = vpop.f32.mrf.mxu0
        %v2741 = vadd.f32 0.0, %v2740
        %v2742 = vpop.f32.mrf.mxu0
        %v2743 = vpop.f32.mrf.mxu0
        %v2744 = vadd.f32 0.0, %v2743
        %v2745 = vpop.f32.mrf.mxu0
        %2746 = vmatprep.mubr.bf16.mxu0 %v2693
        %2747 = vmatmul.mubr.bf16.gmra.mxu0 %v2692
        %v2748 = vpop.f32.mrf.mxu0
        %v2749 = vadd.f32 0.0, %v2748
        %v2750 = vpop.f32.mrf.mxu0
        %v2751 = vpop.f32.mrf.mxu0
        %v2752 = vadd.f32 0.0, %v2751
        %v2753 = vpop.f32.mrf.mxu0
        %2754 = vmatprep.mubr.bf16.mxu0 %v2695
        %2755 = vmatmul.mubr.bf16.gmra.mxu0 %v2694
        %v2756 = vpop.f32.mrf.mxu0
        %v2757 = vadd.f32 0.0, %v2756
        %v2758 = vpop.f32.mrf.mxu0
        %v2759 = vpop.f32.mrf.mxu0
        %v2760 = vadd.f32 0.0, %v2759
        %v2761 = vpop.f32.mrf.mxu0
        %2762 = vmatprep.mubr.bf16.mxu0 %v2697
        %2763 = vmatmul.mubr.bf16.gmra.mxu0 %v2696
        %v2764 = vpop.f32.mrf.mxu0
        %v2765 = vadd.f32 0.0, %v2764
        %v2766 = vpop.f32.mrf.mxu0
        %v2767 = vpop.f32.mrf.mxu0
        %v2768 = vadd.f32 0.0, %v2767
        %v2769 = vpop.f32.mrf.mxu0
        %2770 = vdwg.mxu0
        %v2771 = vpack.c.bf16 %v2744, %v2741
        %v2772 = vpack.c.bf16 %v2752, %v2749
        %v2773 = vpack.c.bf16 %v2760, %v2757
        %v2774 = vpack.c.bf16 %v2768, %v2765
        %s2775 = scalar_lea.vmem %s4, 64
        %v2776 = vld [vmem:[%s2775] sm:$0xf]
        %v2777 = vld [vmem:[%s2775 + $0x4] sm:$0xf]
        %v2780 = vunpack.c.l.b16 %v2776
        %v2781 = vunpack.c.l.b16 %v2777
        %v2782 = vpack.c.b16 %v2781, %v2780
        %v2785 = vsel %vm930, %v2771, 0
        %v2788 = vsel %vm930, %v2772, 0
        %v2791 = vsel %vm930, %v2773, 0
        %v2794 = vsel %vm930, %v2774, 0
        %2796 = vmatprep.subr.bf16.mxu0 0
        %2797 = vmatpush1.bf16.msra.mxu0 0
        %2798 = vmatprep.subr.bf16.mxu0 0
        %2799 = vmatpush1.bf16.msra.mxu0 0
        %2800 = vmatprep.subr.bf16.mxu0 0
        %2801 = vmatpush1.bf16.msra.mxu0 0
        %2802 = vmatprep.subr.bf16.mxu0 0
        %2803 = vmatpush1.bf16.msra.mxu0 0
        %2804 = vmatprep.subr.bf16.mxu0 0
        %2805 = vmatpush1.bf16.msra.mxu0 0
        %2806 = vmatprep.subr.bf16.mxu0 0
        %2807 = vmatpush1.bf16.msra.mxu0 0
        %2808 = vmatprep.subr.bf16.mxu0 0
        %2809 = vmatpush1.bf16.msra.mxu0 0
        %2810 = vmatprep.subr.bf16.mxu0 0
        %2811 = vmatpush1.bf16.msra.mxu0 %v2782
        %2812 = vmatprep.subr.bf16.mxu0 0
        %2813 = vmatpush2.bf16.msra.mxu0 0
        %2814 = vmatprep.subr.bf16.mxu0 0
        %2815 = vmatpush2.bf16.msra.mxu0 0
        %2816 = vmatprep.subr.bf16.mxu0 0
        %2817 = vmatpush2.bf16.msra.mxu0 0
        %2818 = vmatprep.subr.bf16.mxu0 0
        %2819 = vmatpush2.bf16.msra.mxu0 0
        %2820 = vmatprep.subr.bf16.mxu0 0
        %2821 = vmatpush2.bf16.msra.mxu0 0
        %2822 = vmatprep.subr.bf16.mxu0 0
        %2823 = vmatpush2.bf16.msra.mxu0 0
        %2824 = vmatprep.subr.bf16.mxu0 0
        %2825 = vmatpush2.bf16.msra.mxu0 0
        %2826 = vmatprep.subr.bf16.mxu0 0
        %2827 = vmatpush2.bf16.msra.mxu0 0
        %2828 = vmatprep.mubr.bf16.mxu0 0
        %2829 = vmatmul.mubr.bf16.gmra.mxu0 %v2785
        %v2830 = vpop.f32.mrf.mxu0
        %v2831 = vadd.f32 0.0, %v2830
        %v2832 = vpop.f32.mrf.mxu0
        %v2833 = vpop.f32.mrf.mxu0
        %v2834 = vadd.f32 0.0, %v2833
        %v2835 = vpop.f32.mrf.mxu0
        %2836 = vmatprep.mubr.bf16.mxu0 0
        %2837 = vmatmul.mubr.bf16.gmra.mxu0 %v2788
        %v2838 = vpop.f32.mrf.mxu0
        %v2839 = vadd.f32 0.0, %v2838
        %v2840 = vpop.f32.mrf.mxu0
        %v2841 = vpop.f32.mrf.mxu0
        %v2842 = vadd.f32 0.0, %v2841
        %v2843 = vpop.f32.mrf.mxu0
        %2844 = vmatprep.mubr.bf16.mxu0 0
        %2845 = vmatmul.mubr.bf16.gmra.mxu0 %v2791
        %v2846 = vpop.f32.mrf.mxu0
        %v2847 = vadd.f32 0.0, %v2846
        %v2848 = vpop.f32.mrf.mxu0
        %v2849 = vpop.f32.mrf.mxu0
        %v2850 = vadd.f32 0.0, %v2849
        %v2851 = vpop.f32.mrf.mxu0
        %2852 = vmatprep.mubr.bf16.mxu0 0
        %2853 = vmatmul.mubr.bf16.gmra.mxu0 %v2794
        %v2854 = vpop.f32.mrf.mxu0
        %v2855 = vadd.f32 0.0, %v2854
        %v2856 = vpop.f32.mrf.mxu0
        %v2857 = vpop.f32.mrf.mxu0
        %v2858 = vadd.f32 0.0, %v2857
        %v2859 = vpop.f32.mrf.mxu0
        %2860 = vdwg.mxu0
        %v2861 = vadd.f32 %v2649, %v2831
        %v2862 = vadd.f32 %v2650, %v2834
        %v2863 = vadd.f32 %v2651, %v2839
        %v2864 = vadd.f32 %v2652, %v2842
        %v2865 = vadd.f32 %v2653, %v2847
        %v2866 = vadd.f32 %v2654, %v2850
        %v2867 = vadd.f32 %v2655, %v2855
        %v2868 = vadd.f32 %v2656, %v2858
        %v2869 = vld [vmem:[%s5] sm:$0x1]
        %v2871 = vlaneseq
        %v2872 = vshrl.u32 %v2871, 7
        %v2873 = vsub.s32 0, %v2872
        %v2874 = vrot.slane %v2869, %v2873
        %v2876 = vadd.f32 %v2861, %v2874
        %v2877 = vadd.f32 %v2862, %v2874
        %v2878 = vadd.f32 %v2863, %v2874
        %v2879 = vadd.f32 %v2864, %v2874
        %v2880 = vadd.f32 %v2865, %v2874
        %v2881 = vadd.f32 %v2866, %v2874
        %v2882 = vadd.f32 %v2867, %v2874
        %v2883 = vadd.f32 %v2868, %v2874
        %v2884 = vmax.f32 %v2876, 0.0
        %v2885 = vmax.f32 %v2877, 0.0
        %v2886 = vmax.f32 %v2878, 0.0
        %v2887 = vmax.f32 %v2879, 0.0
        %v2888 = vmax.f32 %v2880, 0.0
        %v2889 = vmax.f32 %v2881, 0.0
        %v2890 = vmax.f32 %v2882, 0.0
        %v2891 = vmax.f32 %v2883, 0.0
        %vm2892 = vcmask 261120
        %2893 = vst.msk [vmem:[%s527] sm:$0xff] %vm2892, %v2884
        %2894 = vst.msk [vmem:[%s527 + $0x8] sm:$0xff] %vm2892, %v2885
        %2895 = vst.msk [vmem:[%s527 + $0x10] sm:$0xff] %vm2892, %v2886
        %2896 = vst.msk [vmem:[%s527 + $0x18] sm:$0xff] %vm2892, %v2887
        %2897 = vst.msk [vmem:[%s527 + $0x20] sm:$0xff] %vm2892, %v2888
        %2898 = vst.msk [vmem:[%s527 + $0x28] sm:$0xff] %vm2892, %v2889
        %2899 = vst.msk [vmem:[%s527 + $0x30] sm:$0xff] %vm2892, %v2890
        %2900 = vst.msk [vmem:[%s527 + $0x38] sm:$0xff] %vm2892, %v2891
        %v2901 = vpack.c.bf16 %v2885, %v2884
        %v2902 = vpack.c.bf16 %v2887, %v2886
        %v2903 = vpack.c.bf16 %v2889, %v2888
        %v2904 = vpack.c.bf16 %v2891, %v2890
        %v2905 = vld [vmem:[%s6] sm:$0xf]
        %v2906 = vld [vmem:[%s6 + $0x4] sm:$0xf]
        %v2909 = vunpack.c.l.b16 %v2905
        %v2910 = vunpack.c.l.b16 %v2906
        %v2911 = vpack.c.b16 %v2910, %v2909
        %vm2912 = vcmask 523264
        %v2914 = vsel %vm2912, %v2911, 0
        %2916 = vmatprep.subr.bf16.mxu0 0
        %2917 = vmatpush1.bf16.msra.mxu0 0
        %2918 = vmatprep.subr.bf16.mxu0 0
        %2919 = vmatpush1.bf16.msra.mxu0 0
        %2920 = vmatprep.subr.bf16.mxu0 0
        %2921 = vmatpush1.bf16.msra.mxu0 0
        %2922 = vmatprep.subr.bf16.mxu0 0
        %2923 = vmatpush1.bf16.msra.mxu0 0
        %2924 = vmatprep.subr.bf16.mxu0 0
        %2925 = vmatpush1.bf16.msra.mxu0 %v2904
        %2926 = vmatprep.subr.bf16.mxu0 0
        %2927 = vmatpush1.bf16.msra.mxu0 %v2903
        %2928 = vmatprep.subr.bf16.mxu0 0
        %2929 = vmatpush1.bf16.msra.mxu0 %v2902
        %2930 = vmatprep.subr.bf16.mxu0 0
        %2931 = vmatpush1.bf16.msra.mxu0 %v2901
        %2932 = vmatprep.subr.bf16.mxu0 0
        %2933 = vmatpush2.bf16.msra.mxu0 0
        %2934 = vmatprep.subr.bf16.mxu0 0
        %2935 = vmatpush2.bf16.msra.mxu0 0
        %2936 = vmatprep.subr.bf16.mxu0 0
        %2937 = vmatpush2.bf16.msra.mxu0 0
        %2938 = vmatprep.subr.bf16.mxu0 0
        %2939 = vmatpush2.bf16.msra.mxu0 0
        %2940 = vmatprep.subr.bf16.mxu0 0
        %2941 = vmatpush2.bf16.msra.mxu0 0
        %2942 = vmatprep.subr.bf16.mxu0 0
        %2943 = vmatpush2.bf16.msra.mxu0 0
        %2944 = vmatprep.subr.bf16.mxu0 0
        %2945 = vmatpush2.bf16.msra.mxu0 0
        %2946 = vmatprep.subr.bf16.mxu0 0
        %2947 = vmatpush2.bf16.msra.mxu0 0
        %2948 = vmatprep.mubr.bf16.mxu0 0
        %2949 = vmatmul.mubr.bf16.gmra.mxu0 %v2914
        %v2950 = vpop.f32.mrf.mxu0
        %v2951 = vadd.f32 0.0, %v2950
        %v2952 = vpop.f32.mrf.mxu0
        %v2953 = vpop.f32.mrf.mxu0
        %v2954 = vadd.f32 0.0, %v2953
        %v2955 = vpop.f32.mrf.mxu0
        %2956 = vdwg.mxu0
        %v2957 = vpack.c.bf16 %v2954, %v2951
        %v2958 = vld [vmem:[%s7] sm:$0xf]
        %v2959 = vld [vmem:[%s7 + $0x4] sm:$0xf]
        %v2960 = vld [vmem:[%s7 + $0x8] sm:$0xf]
        %v2961 = vld [vmem:[%s7 + $0xc] sm:$0xf]
        %s2962 = scalar_lea.vmem %s6, 8
        %v2963 = vld [vmem:[%s2962] sm:$0xf]
        %v2964 = vld [vmem:[%s2962 + $0x4] sm:$0xf]
        %v2967 = vunpack.c.l.b16 %v2963
        %v2968 = vunpack.c.l.b16 %v2964
        %v2969 = vpack.c.b16 %v2968, %v2967
        %v2971 = vsel %vm2912, %v2969, 0
        %2973 = vmatprep.subr.bf16.mxu0 0
        %2974 = vmatpush1.bf16.msra.mxu0 0
        %2975 = vmatprep.subr.bf16.mxu0 0
        %2976 = vmatpush1.bf16.msra.mxu0 0
        %2977 = vmatprep.subr.bf16.mxu0 0
        %2978 = vmatpush1.bf16.msra.mxu0 0
        %2979 = vmatprep.subr.bf16.mxu0 0
        %2980 = vmatpush1.bf16.msra.mxu0 0
        %2981 = vmatprep.subr.bf16.mxu0 0
        %2982 = vmatpush1.bf16.msra.mxu0 %v2904
        %2983 = vmatprep.subr.bf16.mxu0 0
        %2984 = vmatpush1.bf16.msra.mxu0 %v2903
        %2985 = vmatprep.subr.bf16.mxu0 0
        %2986 = vmatpush1.bf16.msra.mxu0 %v2902
        %2987 = vmatprep.subr.bf16.mxu0 0
        %2988 = vmatpush1.bf16.msra.mxu0 %v2901
        %2989 = vmatprep.subr.bf16.mxu0 0
        %2990 = vmatpush2.bf16.msra.mxu0 0
        %2991 = vmatprep.subr.bf16.mxu0 0
        %2992 = vmatpush2.bf16.msra.mxu0 0
        %2993 = vmatprep.subr.bf16.mxu0 0
        %2994 = vmatpush2.bf16.msra.mxu0 0
        %2995 = vmatprep.subr.bf16.mxu0 0
        %2996 = vmatpush2.bf16.msra.mxu0 0
        %2997 = vmatprep.subr.bf16.mxu0 0
        %2998 = vmatpush2.bf16.msra.mxu0 0
        %2999 = vmatprep.subr.bf16.mxu0 0
        %3000 = vmatpush2.bf16.msra.mxu0 0
        %3001 = vmatprep.subr.bf16.mxu0 0
        %3002 = vmatpush2.bf16.msra.mxu0 0
        %3003 = vmatprep.subr.bf16.mxu0 0
        %3004 = vmatpush2.bf16.msra.mxu0 0
        %3005 = vmatprep.mubr.bf16.mxu0 0
        %3006 = vmatmul.mubr.bf16.gmra.mxu0 %v2971
        %v3007 = vpop.f32.mrf.mxu0
        %v3008 = vadd.f32 0.0, %v3007
        %v3009 = vpop.f32.mrf.mxu0
        %v3010 = vpop.f32.mrf.mxu0
        %v3011 = vadd.f32 0.0, %v3010
        %v3012 = vpop.f32.mrf.mxu0
        %3013 = vdwg.mxu0
        %v3014 = vpack.c.bf16 %v3011, %v3008
        %s3015 = scalar_lea.vmem %s7, 16
        %v3016 = vld [vmem:[%s3015] sm:$0xf]
        %v3017 = vld [vmem:[%s3015 + $0x4] sm:$0xf]
        %v3018 = vld [vmem:[%s3015 + $0x8] sm:$0xf]
        %v3019 = vld [vmem:[%s3015 + $0xc] sm:$0xf]
        %v3024 = vunpack.c.l.b16 %v3016
        %v3025 = vunpack.c.l.b16 %v3017
        %v3026 = vunpack.c.l.b16 %v3018
        %v3027 = vunpack.c.l.b16 %v3019
        %v3028 = vpack.c.b16 %v3025, %v3024
        %v3029 = vpack.c.b16 %v3027, %v3026
        %v3033 = vsel %vm2892, %v3014, 0
        %3035 = vmatprep.subr.bf16.mxu0 0
        %3036 = vmatpush1.bf16.msra.mxu0 0
        %3037 = vmatprep.subr.bf16.mxu0 0
        %3038 = vmatpush1.bf16.msra.mxu0 0
        %3039 = vmatprep.subr.bf16.mxu0 0
        %3040 = vmatpush1.bf16.msra.mxu0 0
        %3041 = vmatprep.subr.bf16.mxu0 0
        %3042 = vmatpush1.bf16.msra.mxu0 0
        %3043 = vmatprep.subr.bf16.mxu0 0
        %3044 = vmatpush1.bf16.msra.mxu0 0
        %3045 = vmatprep.subr.bf16.mxu0 0
        %3046 = vmatpush1.bf16.msra.mxu0 0
        %3047 = vmatprep.subr.bf16.mxu0 0
        %3048 = vmatpush1.bf16.msra.mxu0 %v3029
        %3049 = vmatprep.subr.bf16.mxu0 0
        %3050 = vmatpush1.bf16.msra.mxu0 %v3028
        %3051 = vmatprep.subr.bf16.mxu0 0
        %3052 = vmatpush2.bf16.msra.mxu0 0
        %3053 = vmatprep.subr.bf16.mxu0 0
        %3054 = vmatpush2.bf16.msra.mxu0 0
        %3055 = vmatprep.subr.bf16.mxu0 0
        %3056 = vmatpush2.bf16.msra.mxu0 0
        %3057 = vmatprep.subr.bf16.mxu0 0
        %3058 = vmatpush2.bf16.msra.mxu0 0
        %3059 = vmatprep.subr.bf16.mxu0 0
        %3060 = vmatpush2.bf16.msra.mxu0 0
        %3061 = vmatprep.subr.bf16.mxu0 0
        %3062 = vmatpush2.bf16.msra.mxu0 0
        %3063 = vmatprep.subr.bf16.mxu0 0
        %3064 = vmatpush2.bf16.msra.mxu0 0
        %3065 = vmatprep.subr.bf16.mxu0 0
        %3066 = vmatpush2.bf16.msra.mxu0 0
        %3067 = vmatprep.mubr.bf16.mxu0 0
        %3068 = vmatmul.mubr.bf16.gmra.mxu0 %v3033
        %v3069 = vpop.f32.mrf.mxu0
        %v3070 = vadd.f32 0.0, %v3069
        %v3071 = vpop.f32.mrf.mxu0
        %v3072 = vpop.f32.mrf.mxu0
        %v3073 = vadd.f32 0.0, %v3072
        %v3074 = vpop.f32.mrf.mxu0
        %3075 = vdwg.mxu0
        %v3080 = vunpack.c.l.b16 %v2958
        %v3081 = vunpack.c.l.b16 %v2959
        %v3082 = vunpack.c.l.b16 %v2960
        %v3083 = vunpack.c.l.b16 %v2961
        %v3084 = vpack.c.b16 %v3081, %v3080
        %v3085 = vpack.c.b16 %v3083, %v3082
        %v3089 = vsel %vm2892, %v2957, 0
        %3091 = vmatprep.subr.bf16.mxu0 0
        %3092 = vmatpush1.bf16.msra.mxu0 0
        %3093 = vmatprep.subr.bf16.mxu0 0
        %3094 = vmatpush1.bf16.msra.mxu0 0
        %3095 = vmatprep.subr.bf16.mxu0 0
        %3096 = vmatpush1.bf16.msra.mxu0 0
        %3097 = vmatprep.subr.bf16.mxu0 0
        %3098 = vmatpush1.bf16.msra.mxu0 0
        %3099 = vmatprep.subr.bf16.mxu0 0
        %3100 = vmatpush1.bf16.msra.mxu0 0
        %3101 = vmatprep.subr.bf16.mxu0 0
        %3102 = vmatpush1.bf16.msra.mxu0 0
        %3103 = vmatprep.subr.bf16.mxu0 0
        %3104 = vmatpush1.bf16.msra.mxu0 %v3085
        %3105 = vmatprep.subr.bf16.mxu0 0
        %3106 = vmatpush1.bf16.msra.mxu0 %v3084
        %3107 = vmatprep.subr.bf16.mxu0 0
        %3108 = vmatpush2.bf16.msra.mxu0 0
        %3109 = vmatprep.subr.bf16.mxu0 0
        %3110 = vmatpush2.bf16.msra.mxu0 0
        %3111 = vmatprep.subr.bf16.mxu0 0
        %3112 = vmatpush2.bf16.msra.mxu0 0
        %3113 = vmatprep.subr.bf16.mxu0 0
        %3114 = vmatpush2.bf16.msra.mxu0 0
        %3115 = vmatprep.subr.bf16.mxu0 0
        %3116 = vmatpush2.bf16.msra.mxu0 0
        %3117 = vmatprep.subr.bf16.mxu0 0
        %3118 = vmatpush2.bf16.msra.mxu0 0
        %3119 = vmatprep.subr.bf16.mxu0 0
        %3120 = vmatpush2.bf16.msra.mxu0 0
        %3121 = vmatprep.subr.bf16.mxu0 0
        %3122 = vmatpush2.bf16.msra.mxu0 0
        %3123 = vmatprep.mubr.bf16.mxu0 0
        %3124 = vmatmul.mubr.bf16.gmra.mxu0 %v3089
        %v3125 = vpop.f32.mrf.mxu0
        %v3126 = vadd.f32 %v3070, %v3125
        %v3127 = vpop.f32.mrf.mxu0
        %v3128 = vpop.f32.mrf.mxu0
        %v3129 = vadd.f32 %v3073, %v3128
        %v3130 = vpop.f32.mrf.mxu0
        %3131 = vdwg.mxu0
        %s3132 = scalar_lea.vmem %s6, 16
        %v3133 = vld [vmem:[%s3132] sm:$0xf]
        %v3134 = vld [vmem:[%s3132 + $0x4] sm:$0xf]
        %v3137 = vunpack.c.l.b16 %v3133
        %v3138 = vunpack.c.l.b16 %v3134
        %v3139 = vpack.c.b16 %v3138, %v3137
        %v3141 = vsel %vm2912, %v3139, 0
        %3143 = vmatprep.subr.bf16.mxu0 0
        %3144 = vmatpush1.bf16.msra.mxu0 0
        %3145 = vmatprep.subr.bf16.mxu0 0
        %3146 = vmatpush1.bf16.msra.mxu0 0
        %3147 = vmatprep.subr.bf16.mxu0 0
        %3148 = vmatpush1.bf16.msra.mxu0 0
        %3149 = vmatprep.subr.bf16.mxu0 0
        %3150 = vmatpush1.bf16.msra.mxu0 0
        %3151 = vmatprep.subr.bf16.mxu0 0
        %3152 = vmatpush1.bf16.msra.mxu0 %v2904
        %3153 = vmatprep.subr.bf16.mxu0 0
        %3154 = vmatpush1.bf16.msra.mxu0 %v2903
        %3155 = vmatprep.subr.bf16.mxu0 0
        %3156 = vmatpush1.bf16.msra.mxu0 %v2902
        %3157 = vmatprep.subr.bf16.mxu0 0
        %3158 = vmatpush1.bf16.msra.mxu0 %v2901
        %3159 = vmatprep.subr.bf16.mxu0 0
        %3160 = vmatpush2.bf16.msra.mxu0 0
        %3161 = vmatprep.subr.bf16.mxu0 0
        %3162 = vmatpush2.bf16.msra.mxu0 0
        %3163 = vmatprep.subr.bf16.mxu0 0
        %3164 = vmatpush2.bf16.msra.mxu0 0
        %3165 = vmatprep.subr.bf16.mxu0 0
        %3166 = vmatpush2.bf16.msra.mxu0 0
        %3167 = vmatprep.subr.bf16.mxu0 0
        %3168 = vmatpush2.bf16.msra.mxu0 0
        %3169 = vmatprep.subr.bf16.mxu0 0
        %3170 = vmatpush2.bf16.msra.mxu0 0
        %3171 = vmatprep.subr.bf16.mxu0 0
        %3172 = vmatpush2.bf16.msra.mxu0 0
        %3173 = vmatprep.subr.bf16.mxu0 0
        %3174 = vmatpush2.bf16.msra.mxu0 0
        %3175 = vmatprep.mubr.bf16.mxu0 0
        %3176 = vmatmul.mubr.bf16.gmra.mxu0 %v3141
        %v3177 = vpop.f32.mrf.mxu0
        %v3178 = vadd.f32 0.0, %v3177
        %v3179 = vpop.f32.mrf.mxu0
        %v3180 = vpop.f32.mrf.mxu0
        %v3181 = vadd.f32 0.0, %v3180
        %v3182 = vpop.f32.mrf.mxu0
        %3183 = vdwg.mxu0
        %v3184 = vpack.c.bf16 %v3181, %v3178
        %s3185 = scalar_lea.vmem %s7, 32
        %v3186 = vld [vmem:[%s3185] sm:$0xf]
        %v3187 = vld [vmem:[%s3185 + $0x4] sm:$0xf]
        %v3188 = vld [vmem:[%s3185 + $0x8] sm:$0xf]
        %v3189 = vld [vmem:[%s3185 + $0xc] sm:$0xf]
        %v3194 = vunpack.c.l.b16 %v3186
        %v3195 = vunpack.c.l.b16 %v3187
        %v3196 = vunpack.c.l.b16 %v3188
        %v3197 = vunpack.c.l.b16 %v3189
        %v3198 = vpack.c.b16 %v3195, %v3194
        %v3199 = vpack.c.b16 %v3197, %v3196
        %v3203 = vsel %vm2892, %v3184, 0
        %3205 = vmatprep.subr.bf16.mxu0 0
        %3206 = vmatpush1.bf16.msra.mxu0 0
        %3207 = vmatprep.subr.bf16.mxu0 0
        %3208 = vmatpush1.bf16.msra.mxu0 0
        %3209 = vmatprep.subr.bf16.mxu0 0
        %3210 = vmatpush1.bf16.msra.mxu0 0
        %3211 = vmatprep.subr.bf16.mxu0 0
        %3212 = vmatpush1.bf16.msra.mxu0 0
        %3213 = vmatprep.subr.bf16.mxu0 0
        %3214 = vmatpush1.bf16.msra.mxu0 0
        %3215 = vmatprep.subr.bf16.mxu0 0
        %3216 = vmatpush1.bf16.msra.mxu0 0
        %3217 = vmatprep.subr.bf16.mxu0 0
        %3218 = vmatpush1.bf16.msra.mxu0 %v3199
        %3219 = vmatprep.subr.bf16.mxu0 0
        %3220 = vmatpush1.bf16.msra.mxu0 %v3198
        %3221 = vmatprep.subr.bf16.mxu0 0
        %3222 = vmatpush2.bf16.msra.mxu0 0
        %3223 = vmatprep.subr.bf16.mxu0 0
        %3224 = vmatpush2.bf16.msra.mxu0 0
        %3225 = vmatprep.subr.bf16.mxu0 0
        %3226 = vmatpush2.bf16.msra.mxu0 0
        %3227 = vmatprep.subr.bf16.mxu0 0
        %3228 = vmatpush2.bf16.msra.mxu0 0
        %3229 = vmatprep.subr.bf16.mxu0 0
        %3230 = vmatpush2.bf16.msra.mxu0 0
        %3231 = vmatprep.subr.bf16.mxu0 0
        %3232 = vmatpush2.bf16.msra.mxu0 0
        %3233 = vmatprep.subr.bf16.mxu0 0
        %3234 = vmatpush2.bf16.msra.mxu0 0
        %3235 = vmatprep.subr.bf16.mxu0 0
        %3236 = vmatpush2.bf16.msra.mxu0 0
        %3237 = vmatprep.mubr.bf16.mxu0 0
        %3238 = vmatmul.mubr.bf16.gmra.mxu0 %v3203
        %v3239 = vpop.f32.mrf.mxu0
        %v3240 = vadd.f32 0.0, %v3239
        %v3241 = vpop.f32.mrf.mxu0
        %v3242 = vpop.f32.mrf.mxu0
        %v3243 = vadd.f32 0.0, %v3242
        %v3244 = vpop.f32.mrf.mxu0
        %3245 = vdwg.mxu0
        %v3246 = vadd.f32 %v3126, %v3240
        %v3247 = vadd.f32 %v3129, %v3243
        %s3248 = scalar_lea.vmem %s6, 24
        %v3249 = vld [vmem:[%s3248] sm:$0xf]
        %v3250 = vld [vmem:[%s3248 + $0x4] sm:$0xf]
        %v3253 = vunpack.c.l.b16 %v3249
        %v3254 = vunpack.c.l.b16 %v3250
        %v3255 = vpack.c.b16 %v3254, %v3253
        %v3257 = vsel %vm2912, %v3255, 0
        %3259 = vmatprep.subr.bf16.mxu0 0
        %3260 = vmatpush1.bf16.msra.mxu0 0
        %3261 = vmatprep.subr.bf16.mxu0 0
        %3262 = vmatpush1.bf16.msra.mxu0 0
        %3263 = vmatprep.subr.bf16.mxu0 0
        %3264 = vmatpush1.bf16.msra.mxu0 0
        %3265 = vmatprep.subr.bf16.mxu0 0
        %3266 = vmatpush1.bf16.msra.mxu0 0
        %3267 = vmatprep.subr.bf16.mxu0 0
        %3268 = vmatpush1.bf16.msra.mxu0 %v2904
        %3269 = vmatprep.subr.bf16.mxu0 0
        %3270 = vmatpush1.bf16.msra.mxu0 %v2903
        %3271 = vmatprep.subr.bf16.mxu0 0
        %3272 = vmatpush1.bf16.msra.mxu0 %v2902
        %3273 = vmatprep.subr.bf16.mxu0 0
        %3274 = vmatpush1.bf16.msra.mxu0 %v2901
        %3275 = vmatprep.subr.bf16.mxu0 0
        %3276 = vmatpush2.bf16.msra.mxu0 0
        %3277 = vmatprep.subr.bf16.mxu0 0
        %3278 = vmatpush2.bf16.msra.mxu0 0
        %3279 = vmatprep.subr.bf16.mxu0 0
        %3280 = vmatpush2.bf16.msra.mxu0 0
        %3281 = vmatprep.subr.bf16.mxu0 0
        %3282 = vmatpush2.bf16.msra.mxu0 0
        %3283 = vmatprep.subr.bf16.mxu0 0
        %3284 = vmatpush2.bf16.msra.mxu0 0
        %3285 = vmatprep.subr.bf16.mxu0 0
        %3286 = vmatpush2.bf16.msra.mxu0 0
        %3287 = vmatprep.subr.bf16.mxu0 0
        %3288 = vmatpush2.bf16.msra.mxu0 0
        %3289 = vmatprep.subr.bf16.mxu0 0
        %3290 = vmatpush2.bf16.msra.mxu0 0
        %3291 = vmatprep.mubr.bf16.mxu0 0
        %3292 = vmatmul.mubr.bf16.gmra.mxu0 %v3257
        %v3293 = vpop.f32.mrf.mxu0
        %v3294 = vadd.f32 0.0, %v3293
        %v3295 = vpop.f32.mrf.mxu0
        %v3296 = vpop.f32.mrf.mxu0
        %v3297 = vadd.f32 0.0, %v3296
        %v3298 = vpop.f32.mrf.mxu0
        %3299 = vdwg.mxu0
        %v3300 = vpack.c.bf16 %v3297, %v3294
        %s3301 = scalar_lea.vmem %s7, 48
        %v3302 = vld [vmem:[%s3301] sm:$0xf]
        %v3303 = vld [vmem:[%s3301 + $0x4] sm:$0xf]
        %v3304 = vld [vmem:[%s3301 + $0x8] sm:$0xf]
        %v3305 = vld [vmem:[%s3301 + $0xc] sm:$0xf]
        %v3310 = vunpack.c.l.b16 %v3302
        %v3311 = vunpack.c.l.b16 %v3303
        %v3312 = vunpack.c.l.b16 %v3304
        %v3313 = vunpack.c.l.b16 %v3305
        %v3314 = vpack.c.b16 %v3311, %v3310
        %v3315 = vpack.c.b16 %v3313, %v3312
        %v3319 = vsel %vm2892, %v3300, 0
        %3321 = vmatprep.subr.bf16.mxu0 0
        %3322 = vmatpush1.bf16.msra.mxu0 0
        %3323 = vmatprep.subr.bf16.mxu0 0
        %3324 = vmatpush1.bf16.msra.mxu0 0
        %3325 = vmatprep.subr.bf16.mxu0 0
        %3326 = vmatpush1.bf16.msra.mxu0 0
        %3327 = vmatprep.subr.bf16.mxu0 0
        %3328 = vmatpush1.bf16.msra.mxu0 0
        %3329 = vmatprep.subr.bf16.mxu0 0
        %3330 = vmatpush1.bf16.msra.mxu0 0
        %3331 = vmatprep.subr.bf16.mxu0 0
        %3332 = vmatpush1.bf16.msra.mxu0 0
        %3333 = vmatprep.subr.bf16.mxu0 0
        %3334 = vmatpush1.bf16.msra.mxu0 %v3315
        %3335 = vmatprep.subr.bf16.mxu0 0
        %3336 = vmatpush1.bf16.msra.mxu0 %v3314
        %3337 = vmatprep.subr.bf16.mxu0 0
        %3338 = vmatpush2.bf16.msra.mxu0 0
        %3339 = vmatprep.subr.bf16.mxu0 0
        %3340 = vmatpush2.bf16.msra.mxu0 0
        %3341 = vmatprep.subr.bf16.mxu0 0
        %3342 = vmatpush2.bf16.msra.mxu0 0
        %3343 = vmatprep.subr.bf16.mxu0 0
        %3344 = vmatpush2.bf16.msra.mxu0 0
        %3345 = vmatprep.subr.bf16.mxu0 0
        %3346 = vmatpush2.bf16.msra.mxu0 0
        %3347 = vmatprep.subr.bf16.mxu0 0
        %3348 = vmatpush2.bf16.msra.mxu0 0
        %3349 = vmatprep.subr.bf16.mxu0 0
        %3350 = vmatpush2.bf16.msra.mxu0 0
        %3351 = vmatprep.subr.bf16.mxu0 0
        %3352 = vmatpush2.bf16.msra.mxu0 0
        %3353 = vmatprep.mubr.bf16.mxu0 0
        %3354 = vmatmul.mubr.bf16.gmra.mxu0 %v3319
        %v3355 = vpop.f32.mrf.mxu0
        %v3356 = vadd.f32 0.0, %v3355
        %v3357 = vpop.f32.mrf.mxu0
        %v3358 = vpop.f32.mrf.mxu0
        %v3359 = vadd.f32 0.0, %v3358
        %v3360 = vpop.f32.mrf.mxu0
        %3361 = vdwg.mxu0
        %v3362 = vadd.f32 %v3246, %v3356
        %v3363 = vadd.f32 %v3247, %v3359
        %s3364 = scalar_lea.vmem %s6, 32
        %v3365 = vld [vmem:[%s3364] sm:$0xf]
        %v3366 = vld [vmem:[%s3364 + $0x4] sm:$0xf]
        %v3369 = vunpack.c.l.b16 %v3365
        %v3370 = vunpack.c.l.b16 %v3366
        %v3371 = vpack.c.b16 %v3370, %v3369
        %v3373 = vsel %vm2912, %v3371, 0
        %3375 = vmatprep.subr.bf16.mxu0 0
        %3376 = vmatpush1.bf16.msra.mxu0 0
        %3377 = vmatprep.subr.bf16.mxu0 0
        %3378 = vmatpush1.bf16.msra.mxu0 0
        %3379 = vmatprep.subr.bf16.mxu0 0
        %3380 = vmatpush1.bf16.msra.mxu0 0
        %3381 = vmatprep.subr.bf16.mxu0 0
        %3382 = vmatpush1.bf16.msra.mxu0 0
        %3383 = vmatprep.subr.bf16.mxu0 0
        %3384 = vmatpush1.bf16.msra.mxu0 %v2904
        %3385 = vmatprep.subr.bf16.mxu0 0
        %3386 = vmatpush1.bf16.msra.mxu0 %v2903
        %3387 = vmatprep.subr.bf16.mxu0 0
        %3388 = vmatpush1.bf16.msra.mxu0 %v2902
        %3389 = vmatprep.subr.bf16.mxu0 0
        %3390 = vmatpush1.bf16.msra.mxu0 %v2901
        %3391 = vmatprep.subr.bf16.mxu0 0
        %3392 = vmatpush2.bf16.msra.mxu0 0
        %3393 = vmatprep.subr.bf16.mxu0 0
        %3394 = vmatpush2.bf16.msra.mxu0 0
        %3395 = vmatprep.subr.bf16.mxu0 0
        %3396 = vmatpush2.bf16.msra.mxu0 0
        %3397 = vmatprep.subr.bf16.mxu0 0
        %3398 = vmatpush2.bf16.msra.mxu0 0
        %3399 = vmatprep.subr.bf16.mxu0 0
        %3400 = vmatpush2.bf16.msra.mxu0 0
        %3401 = vmatprep.subr.bf16.mxu0 0
        %3402 = vmatpush2.bf16.msra.mxu0 0
        %3403 = vmatprep.subr.bf16.mxu0 0
        %3404 = vmatpush2.bf16.msra.mxu0 0
        %3405 = vmatprep.subr.bf16.mxu0 0
        %3406 = vmatpush2.bf16.msra.mxu0 0
        %3407 = vmatprep.mubr.bf16.mxu0 0
        %3408 = vmatmul.mubr.bf16.gmra.mxu0 %v3373
        %v3409 = vpop.f32.mrf.mxu0
        %v3410 = vadd.f32 0.0, %v3409
        %v3411 = vpop.f32.mrf.mxu0
        %v3412 = vpop.f32.mrf.mxu0
        %v3413 = vadd.f32 0.0, %v3412
        %v3414 = vpop.f32.mrf.mxu0
        %3415 = vdwg.mxu0
        %v3416 = vpack.c.bf16 %v3413, %v3410
        %s3417 = scalar_lea.vmem %s7, 64
        %v3418 = vld [vmem:[%s3417] sm:$0xf]
        %v3419 = vld [vmem:[%s3417 + $0x4] sm:$0xf]
        %v3420 = vld [vmem:[%s3417 + $0x8] sm:$0xf]
        %v3421 = vld [vmem:[%s3417 + $0xc] sm:$0xf]
        %v3426 = vunpack.c.l.b16 %v3418
        %v3427 = vunpack.c.l.b16 %v3419
        %v3428 = vunpack.c.l.b16 %v3420
        %v3429 = vunpack.c.l.b16 %v3421
        %v3430 = vpack.c.b16 %v3427, %v3426
        %v3431 = vpack.c.b16 %v3429, %v3428
        %v3435 = vsel %vm2892, %v3416, 0
        %3437 = vmatprep.subr.bf16.mxu0 0
        %3438 = vmatpush1.bf16.msra.mxu0 0
        %3439 = vmatprep.subr.bf16.mxu0 0
        %3440 = vmatpush1.bf16.msra.mxu0 0
        %3441 = vmatprep.subr.bf16.mxu0 0
        %3442 = vmatpush1.bf16.msra.mxu0 0
        %3443 = vmatprep.subr.bf16.mxu0 0
        %3444 = vmatpush1.bf16.msra.mxu0 0
        %3445 = vmatprep.subr.bf16.mxu0 0
        %3446 = vmatpush1.bf16.msra.mxu0 0
        %3447 = vmatprep.subr.bf16.mxu0 0
        %3448 = vmatpush1.bf16.msra.mxu0 0
        %3449 = vmatprep.subr.bf16.mxu0 0
        %3450 = vmatpush1.bf16.msra.mxu0 %v3431
        %3451 = vmatprep.subr.bf16.mxu0 0
        %3452 = vmatpush1.bf16.msra.mxu0 %v3430
        %3453 = vmatprep.subr.bf16.mxu0 0
        %3454 = vmatpush2.bf16.msra.mxu0 0
        %3455 = vmatprep.subr.bf16.mxu0 0
        %3456 = vmatpush2.bf16.msra.mxu0 0
        %3457 = vmatprep.subr.bf16.mxu0 0
        %3458 = vmatpush2.bf16.msra.mxu0 0
        %3459 = vmatprep.subr.bf16.mxu0 0
        %3460 = vmatpush2.bf16.msra.mxu0 0
        %3461 = vmatprep.subr.bf16.mxu0 0
        %3462 = vmatpush2.bf16.msra.mxu0 0
        %3463 = vmatprep.subr.bf16.mxu0 0
        %3464 = vmatpush2.bf16.msra.mxu0 0
        %3465 = vmatprep.subr.bf16.mxu0 0
        %3466 = vmatpush2.bf16.msra.mxu0 0
        %3467 = vmatprep.subr.bf16.mxu0 0
        %3468 = vmatpush2.bf16.msra.mxu0 0
        %3469 = vmatprep.mubr.bf16.mxu0 0
        %3470 = vmatmul.mubr.bf16.gmra.mxu0 %v3435
        %v3471 = vpop.f32.mrf.mxu0
        %v3472 = vadd.f32 0.0, %v3471
        %v3473 = vpop.f32.mrf.mxu0
        %v3474 = vpop.f32.mrf.mxu0
        %v3475 = vadd.f32 0.0, %v3474
        %v3476 = vpop.f32.mrf.mxu0
        %3477 = vdwg.mxu0
        %v3478 = vadd.f32 %v3362, %v3472
        %v3479 = vadd.f32 %v3363, %v3475
        %s3480 = scalar_lea.vmem %s6, 40
        %v3481 = vld [vmem:[%s3480] sm:$0xf]
        %v3482 = vld [vmem:[%s3480 + $0x4] sm:$0xf]
        %v3485 = vunpack.c.l.b16 %v3481
        %v3486 = vunpack.c.l.b16 %v3482
        %v3487 = vpack.c.b16 %v3486, %v3485
        %v3489 = vsel %vm2912, %v3487, 0
        %3491 = vmatprep.subr.bf16.mxu0 0
        %3492 = vmatpush1.bf16.msra.mxu0 0
        %3493 = vmatprep.subr.bf16.mxu0 0
        %3494 = vmatpush1.bf16.msra.mxu0 0
        %3495 = vmatprep.subr.bf16.mxu0 0
        %3496 = vmatpush1.bf16.msra.mxu0 0
        %3497 = vmatprep.subr.bf16.mxu0 0
        %3498 = vmatpush1.bf16.msra.mxu0 0
        %3499 = vmatprep.subr.bf16.mxu0 0
        %3500 = vmatpush1.bf16.msra.mxu0 %v2904
        %3501 = vmatprep.subr.bf16.mxu0 0
        %3502 = vmatpush1.bf16.msra.mxu0 %v2903
        %3503 = vmatprep.subr.bf16.mxu0 0
        %3504 = vmatpush1.bf16.msra.mxu0 %v2902
        %3505 = vmatprep.subr.bf16.mxu0 0
        %3506 = vmatpush1.bf16.msra.mxu0 %v2901
        %3507 = vmatprep.subr.bf16.mxu0 0
        %3508 = vmatpush2.bf16.msra.mxu0 0
        %3509 = vmatprep.subr.bf16.mxu0 0
        %3510 = vmatpush2.bf16.msra.mxu0 0
        %3511 = vmatprep.subr.bf16.mxu0 0
        %3512 = vmatpush2.bf16.msra.mxu0 0
        %3513 = vmatprep.subr.bf16.mxu0 0
        %3514 = vmatpush2.bf16.msra.mxu0 0
        %3515 = vmatprep.subr.bf16.mxu0 0
        %3516 = vmatpush2.bf16.msra.mxu0 0
        %3517 = vmatprep.subr.bf16.mxu0 0
        %3518 = vmatpush2.bf16.msra.mxu0 0
        %3519 = vmatprep.subr.bf16.mxu0 0
        %3520 = vmatpush2.bf16.msra.mxu0 0
        %3521 = vmatprep.subr.bf16.mxu0 0
        %3522 = vmatpush2.bf16.msra.mxu0 0
        %3523 = vmatprep.mubr.bf16.mxu0 0
        %3524 = vmatmul.mubr.bf16.gmra.mxu0 %v3489
        %v3525 = vpop.f32.mrf.mxu0
        %v3526 = vadd.f32 0.0, %v3525
        %v3527 = vpop.f32.mrf.mxu0
        %v3528 = vpop.f32.mrf.mxu0
        %v3529 = vadd.f32 0.0, %v3528
        %v3530 = vpop.f32.mrf.mxu0
        %3531 = vdwg.mxu0
        %v3532 = vpack.c.bf16 %v3529, %v3526
        %s3533 = scalar_lea.vmem %s7, 80
        %v3534 = vld [vmem:[%s3533] sm:$0xf]
        %v3535 = vld [vmem:[%s3533 + $0x4] sm:$0xf]
        %v3536 = vld [vmem:[%s3533 + $0x8] sm:$0xf]
        %v3537 = vld [vmem:[%s3533 + $0xc] sm:$0xf]
        %v3542 = vunpack.c.l.b16 %v3534
        %v3543 = vunpack.c.l.b16 %v3535
        %v3544 = vunpack.c.l.b16 %v3536
        %v3545 = vunpack.c.l.b16 %v3537
        %v3546 = vpack.c.b16 %v3543, %v3542
        %v3547 = vpack.c.b16 %v3545, %v3544
        %v3551 = vsel %vm2892, %v3532, 0
        %3553 = vmatprep.subr.bf16.mxu0 0
        %3554 = vmatpush1.bf16.msra.mxu0 0
        %3555 = vmatprep.subr.bf16.mxu0 0
        %3556 = vmatpush1.bf16.msra.mxu0 0
        %3557 = vmatprep.subr.bf16.mxu0 0
        %3558 = vmatpush1.bf16.msra.mxu0 0
        %3559 = vmatprep.subr.bf16.mxu0 0
        %3560 = vmatpush1.bf16.msra.mxu0 0
        %3561 = vmatprep.subr.bf16.mxu0 0
        %3562 = vmatpush1.bf16.msra.mxu0 0
        %3563 = vmatprep.subr.bf16.mxu0 0
        %3564 = vmatpush1.bf16.msra.mxu0 0
        %3565 = vmatprep.subr.bf16.mxu0 0
        %3566 = vmatpush1.bf16.msra.mxu0 %v3547
        %3567 = vmatprep.subr.bf16.mxu0 0
        %3568 = vmatpush1.bf16.msra.mxu0 %v3546
        %3569 = vmatprep.subr.bf16.mxu0 0
        %3570 = vmatpush2.bf16.msra.mxu0 0
        %3571 = vmatprep.subr.bf16.mxu0 0
        %3572 = vmatpush2.bf16.msra.mxu0 0
        %3573 = vmatprep.subr.bf16.mxu0 0
        %3574 = vmatpush2.bf16.msra.mxu0 0
        %3575 = vmatprep.subr.bf16.mxu0 0
        %3576 = vmatpush2.bf16.msra.mxu0 0
        %3577 = vmatprep.subr.bf16.mxu0 0
        %3578 = vmatpush2.bf16.msra.mxu0 0
        %3579 = vmatprep.subr.bf16.mxu0 0
        %3580 = vmatpush2.bf16.msra.mxu0 0
        %3581 = vmatprep.subr.bf16.mxu0 0
        %3582 = vmatpush2.bf16.msra.mxu0 0
        %3583 = vmatprep.subr.bf16.mxu0 0
        %3584 = vmatpush2.bf16.msra.mxu0 0
        %3585 = vmatprep.mubr.bf16.mxu0 0
        %3586 = vmatmul.mubr.bf16.gmra.mxu0 %v3551
        %v3587 = vpop.f32.mrf.mxu0
        %v3588 = vadd.f32 0.0, %v3587
        %v3589 = vpop.f32.mrf.mxu0
        %v3590 = vpop.f32.mrf.mxu0
        %v3591 = vadd.f32 0.0, %v3590
        %v3592 = vpop.f32.mrf.mxu0
        %3593 = vdwg.mxu0
        %v3594 = vadd.f32 %v3478, %v3588
        %v3595 = vadd.f32 %v3479, %v3591
        %s3596 = scalar_lea.vmem %s6, 48
        %v3597 = vld [vmem:[%s3596] sm:$0xf]
        %v3598 = vld [vmem:[%s3596 + $0x4] sm:$0xf]
        %v3601 = vunpack.c.l.b16 %v3597
        %v3602 = vunpack.c.l.b16 %v3598
        %v3603 = vpack.c.b16 %v3602, %v3601
        %v3605 = vsel %vm2912, %v3603, 0
        %3607 = vmatprep.subr.bf16.mxu0 0
        %3608 = vmatpush1.bf16.msra.mxu0 0
        %3609 = vmatprep.subr.bf16.mxu0 0
        %3610 = vmatpush1.bf16.msra.mxu0 0
        %3611 = vmatprep.subr.bf16.mxu0 0
        %3612 = vmatpush1.bf16.msra.mxu0 0
        %3613 = vmatprep.subr.bf16.mxu0 0
        %3614 = vmatpush1.bf16.msra.mxu0 0
        %3615 = vmatprep.subr.bf16.mxu0 0
        %3616 = vmatpush1.bf16.msra.mxu0 %v2904
        %3617 = vmatprep.subr.bf16.mxu0 0
        %3618 = vmatpush1.bf16.msra.mxu0 %v2903
        %3619 = vmatprep.subr.bf16.mxu0 0
        %3620 = vmatpush1.bf16.msra.mxu0 %v2902
        %3621 = vmatprep.subr.bf16.mxu0 0
        %3622 = vmatpush1.bf16.msra.mxu0 %v2901
        %3623 = vmatprep.subr.bf16.mxu0 0
        %3624 = vmatpush2.bf16.msra.mxu0 0
        %3625 = vmatprep.subr.bf16.mxu0 0
        %3626 = vmatpush2.bf16.msra.mxu0 0
        %3627 = vmatprep.subr.bf16.mxu0 0
        %3628 = vmatpush2.bf16.msra.mxu0 0
        %3629 = vmatprep.subr.bf16.mxu0 0
        %3630 = vmatpush2.bf16.msra.mxu0 0
        %3631 = vmatprep.subr.bf16.mxu0 0
        %3632 = vmatpush2.bf16.msra.mxu0 0
        %3633 = vmatprep.subr.bf16.mxu0 0
        %3634 = vmatpush2.bf16.msra.mxu0 0
        %3635 = vmatprep.subr.bf16.mxu0 0
        %3636 = vmatpush2.bf16.msra.mxu0 0
        %3637 = vmatprep.subr.bf16.mxu0 0
        %3638 = vmatpush2.bf16.msra.mxu0 0
        %3639 = vmatprep.mubr.bf16.mxu0 0
        %3640 = vmatmul.mubr.bf16.gmra.mxu0 %v3605
        %v3641 = vpop.f32.mrf.mxu0
        %v3642 = vadd.f32 0.0, %v3641
        %v3643 = vpop.f32.mrf.mxu0
        %v3644 = vpop.f32.mrf.mxu0
        %v3645 = vadd.f32 0.0, %v3644
        %v3646 = vpop.f32.mrf.mxu0
        %3647 = vdwg.mxu0
        %v3648 = vpack.c.bf16 %v3645, %v3642
        %s3649 = scalar_lea.vmem %s7, 96
        %v3650 = vld [vmem:[%s3649] sm:$0xf]
        %v3651 = vld [vmem:[%s3649 + $0x4] sm:$0xf]
        %v3652 = vld [vmem:[%s3649 + $0x8] sm:$0xf]
        %v3653 = vld [vmem:[%s3649 + $0xc] sm:$0xf]
        %v3658 = vunpack.c.l.b16 %v3650
        %v3659 = vunpack.c.l.b16 %v3651
        %v3660 = vunpack.c.l.b16 %v3652
        %v3661 = vunpack.c.l.b16 %v3653
        %v3662 = vpack.c.b16 %v3659, %v3658
        %v3663 = vpack.c.b16 %v3661, %v3660
        %v3667 = vsel %vm2892, %v3648, 0
        %3669 = vmatprep.subr.bf16.mxu0 0
        %3670 = vmatpush1.bf16.msra.mxu0 0
        %3671 = vmatprep.subr.bf16.mxu0 0
        %3672 = vmatpush1.bf16.msra.mxu0 0
        %3673 = vmatprep.subr.bf16.mxu0 0
        %3674 = vmatpush1.bf16.msra.mxu0 0
        %3675 = vmatprep.subr.bf16.mxu0 0
        %3676 = vmatpush1.bf16.msra.mxu0 0
        %3677 = vmatprep.subr.bf16.mxu0 0
        %3678 = vmatpush1.bf16.msra.mxu0 0
        %3679 = vmatprep.subr.bf16.mxu0 0
        %3680 = vmatpush1.bf16.msra.mxu0 0
        %3681 = vmatprep.subr.bf16.mxu0 0
        %3682 = vmatpush1.bf16.msra.mxu0 %v3663
        %3683 = vmatprep.subr.bf16.mxu0 0
        %3684 = vmatpush1.bf16.msra.mxu0 %v3662
        %3685 = vmatprep.subr.bf16.mxu0 0
        %3686 = vmatpush2.bf16.msra.mxu0 0
        %3687 = vmatprep.subr.bf16.mxu0 0
        %3688 = vmatpush2.bf16.msra.mxu0 0
        %3689 = vmatprep.subr.bf16.mxu0 0
        %3690 = vmatpush2.bf16.msra.mxu0 0
        %3691 = vmatprep.subr.bf16.mxu0 0
        %3692 = vmatpush2.bf16.msra.mxu0 0
        %3693 = vmatprep.subr.bf16.mxu0 0
        %3694 = vmatpush2.bf16.msra.mxu0 0
        %3695 = vmatprep.subr.bf16.mxu0 0
        %3696 = vmatpush2.bf16.msra.mxu0 0
        %3697 = vmatprep.subr.bf16.mxu0 0
        %3698 = vmatpush2.bf16.msra.mxu0 0
        %3699 = vmatprep.subr.bf16.mxu0 0
        %3700 = vmatpush2.bf16.msra.mxu0 0
        %3701 = vmatprep.mubr.bf16.mxu0 0
        %3702 = vmatmul.mubr.bf16.gmra.mxu0 %v3667
        %v3703 = vpop.f32.mrf.mxu0
        %v3704 = vadd.f32 0.0, %v3703
        %v3705 = vpop.f32.mrf.mxu0
        %v3706 = vpop.f32.mrf.mxu0
        %v3707 = vadd.f32 0.0, %v3706
        %v3708 = vpop.f32.mrf.mxu0
        %3709 = vdwg.mxu0
        %v3710 = vadd.f32 %v3594, %v3704
        %v3711 = vadd.f32 %v3595, %v3707
        %s3712 = scalar_lea.vmem %s6, 56
        %v3713 = vld [vmem:[%s3712] sm:$0xf]
        %v3714 = vld [vmem:[%s3712 + $0x4] sm:$0xf]
        %v3717 = vunpack.c.l.b16 %v3713
        %v3718 = vunpack.c.l.b16 %v3714
        %v3719 = vpack.c.b16 %v3718, %v3717
        %v3721 = vsel %vm2912, %v3719, 0
        %3723 = vmatprep.subr.bf16.mxu0 0
        %3724 = vmatpush1.bf16.msra.mxu0 0
        %3725 = vmatprep.subr.bf16.mxu0 0
        %3726 = vmatpush1.bf16.msra.mxu0 0
        %3727 = vmatprep.subr.bf16.mxu0 0
        %3728 = vmatpush1.bf16.msra.mxu0 0
        %3729 = vmatprep.subr.bf16.mxu0 0
        %3730 = vmatpush1.bf16.msra.mxu0 0
        %3731 = vmatprep.subr.bf16.mxu0 0
        %3732 = vmatpush1.bf16.msra.mxu0 %v2904
        %3733 = vmatprep.subr.bf16.mxu0 0
        %3734 = vmatpush1.bf16.msra.mxu0 %v2903
        %3735 = vmatprep.subr.bf16.mxu0 0
        %3736 = vmatpush1.bf16.msra.mxu0 %v2902
        %3737 = vmatprep.subr.bf16.mxu0 0
        %3738 = vmatpush1.bf16.msra.mxu0 %v2901
        %3739 = vmatprep.subr.bf16.mxu0 0
        %3740 = vmatpush2.bf16.msra.mxu0 0
        %3741 = vmatprep.subr.bf16.mxu0 0
        %3742 = vmatpush2.bf16.msra.mxu0 0
        %3743 = vmatprep.subr.bf16.mxu0 0
        %3744 = vmatpush2.bf16.msra.mxu0 0
        %3745 = vmatprep.subr.bf16.mxu0 0
        %3746 = vmatpush2.bf16.msra.mxu0 0
        %3747 = vmatprep.subr.bf16.mxu0 0
        %3748 = vmatpush2.bf16.msra.mxu0 0
        %3749 = vmatprep.subr.bf16.mxu0 0
        %3750 = vmatpush2.bf16.msra.mxu0 0
        %3751 = vmatprep.subr.bf16.mxu0 0
        %3752 = vmatpush2.bf16.msra.mxu0 0
        %3753 = vmatprep.subr.bf16.mxu0 0
        %3754 = vmatpush2.bf16.msra.mxu0 0
        %3755 = vmatprep.mubr.bf16.mxu0 0
        %3756 = vmatmul.mubr.bf16.gmra.mxu0 %v3721
        %v3757 = vpop.f32.mrf.mxu0
        %v3758 = vadd.f32 0.0, %v3757
        %v3759 = vpop.f32.mrf.mxu0
        %v3760 = vpop.f32.mrf.mxu0
        %v3761 = vadd.f32 0.0, %v3760
        %v3762 = vpop.f32.mrf.mxu0
        %3763 = vdwg.mxu0
        %v3764 = vpack.c.bf16 %v3761, %v3758
        %s3765 = scalar_lea.vmem %s7, 112
        %v3766 = vld [vmem:[%s3765] sm:$0xf]
        %v3767 = vld [vmem:[%s3765 + $0x4] sm:$0xf]
        %v3768 = vld [vmem:[%s3765 + $0x8] sm:$0xf]
        %v3769 = vld [vmem:[%s3765 + $0xc] sm:$0xf]
        %v3774 = vunpack.c.l.b16 %v3766
        %v3775 = vunpack.c.l.b16 %v3767
        %v3776 = vunpack.c.l.b16 %v3768
        %v3777 = vunpack.c.l.b16 %v3769
        %v3778 = vpack.c.b16 %v3775, %v3774
        %v3779 = vpack.c.b16 %v3777, %v3776
        %v3783 = vsel %vm2892, %v3764, 0
        %3785 = vmatprep.subr.bf16.mxu0 0
        %3786 = vmatpush1.bf16.msra.mxu0 0
        %3787 = vmatprep.subr.bf16.mxu0 0
        %3788 = vmatpush1.bf16.msra.mxu0 0
        %3789 = vmatprep.subr.bf16.mxu0 0
        %3790 = vmatpush1.bf16.msra.mxu0 0
        %3791 = vmatprep.subr.bf16.mxu0 0
        %3792 = vmatpush1.bf16.msra.mxu0 0
        %3793 = vmatprep.subr.bf16.mxu0 0
        %3794 = vmatpush1.bf16.msra.mxu0 0
        %3795 = vmatprep.subr.bf16.mxu0 0
        %3796 = vmatpush1.bf16.msra.mxu0 0
        %3797 = vmatprep.subr.bf16.mxu0 0
        %3798 = vmatpush1.bf16.msra.mxu0 %v3779
        %3799 = vmatprep.subr.bf16.mxu0 0
        %3800 = vmatpush1.bf16.msra.mxu0 %v3778
        %3801 = vmatprep.subr.bf16.mxu0 0
        %3802 = vmatpush2.bf16.msra.mxu0 0
        %3803 = vmatprep.subr.bf16.mxu0 0
        %3804 = vmatpush2.bf16.msra.mxu0 0
        %3805 = vmatprep.subr.bf16.mxu0 0
        %3806 = vmatpush2.bf16.msra.mxu0 0
        %3807 = vmatprep.subr.bf16.mxu0 0
        %3808 = vmatpush2.bf16.msra.mxu0 0
        %3809 = vmatprep.subr.bf16.mxu0 0
        %3810 = vmatpush2.bf16.msra.mxu0 0
        %3811 = vmatprep.subr.bf16.mxu0 0
        %3812 = vmatpush2.bf16.msra.mxu0 0
        %3813 = vmatprep.subr.bf16.mxu0 0
        %3814 = vmatpush2.bf16.msra.mxu0 0
        %3815 = vmatprep.subr.bf16.mxu0 0
        %3816 = vmatpush2.bf16.msra.mxu0 0
        %3817 = vmatprep.mubr.bf16.mxu0 0
        %3818 = vmatmul.mubr.bf16.gmra.mxu0 %v3783
        %v3819 = vpop.f32.mrf.mxu0
        %v3820 = vadd.f32 0.0, %v3819
        %v3821 = vpop.f32.mrf.mxu0
        %v3822 = vpop.f32.mrf.mxu0
        %v3823 = vadd.f32 0.0, %v3822
        %v3824 = vpop.f32.mrf.mxu0
        %3825 = vdwg.mxu0
        %v3826 = vadd.f32 %v3710, %v3820
        %v3827 = vadd.f32 %v3711, %v3823
        %s3828 = scalar_lea.vmem %s6, 64
        %v3829 = vld [vmem:[%s3828] sm:$0xf]
        %v3830 = vld [vmem:[%s3828 + $0x4] sm:$0xf]
        %v3833 = vunpack.c.l.b16 %v3829
        %v3834 = vunpack.c.l.b16 %v3830
        %v3835 = vpack.c.b16 %v3834, %v3833
        %v3837 = vsel %vm2912, %v3835, 0
        %3839 = vmatprep.subr.bf16.mxu0 0
        %3840 = vmatpush1.bf16.msra.mxu0 0
        %3841 = vmatprep.subr.bf16.mxu0 0
        %3842 = vmatpush1.bf16.msra.mxu0 0
        %3843 = vmatprep.subr.bf16.mxu0 0
        %3844 = vmatpush1.bf16.msra.mxu0 0
        %3845 = vmatprep.subr.bf16.mxu0 0
        %3846 = vmatpush1.bf16.msra.mxu0 0
        %3847 = vmatprep.subr.bf16.mxu0 0
        %3848 = vmatpush1.bf16.msra.mxu0 %v2904
        %3849 = vmatprep.subr.bf16.mxu0 0
        %3850 = vmatpush1.bf16.msra.mxu0 %v2903
        %3851 = vmatprep.subr.bf16.mxu0 0
        %3852 = vmatpush1.bf16.msra.mxu0 %v2902
        %3853 = vmatprep.subr.bf16.mxu0 0
        %3854 = vmatpush1.bf16.msra.mxu0 %v2901
        %3855 = vmatprep.subr.bf16.mxu0 0
        %3856 = vmatpush2.bf16.msra.mxu0 0
        %3857 = vmatprep.subr.bf16.mxu0 0
        %3858 = vmatpush2.bf16.msra.mxu0 0
        %3859 = vmatprep.subr.bf16.mxu0 0
        %3860 = vmatpush2.bf16.msra.mxu0 0
        %3861 = vmatprep.subr.bf16.mxu0 0
        %3862 = vmatpush2.bf16.msra.mxu0 0
        %3863 = vmatprep.subr.bf16.mxu0 0
        %3864 = vmatpush2.bf16.msra.mxu0 0
        %3865 = vmatprep.subr.bf16.mxu0 0
        %3866 = vmatpush2.bf16.msra.mxu0 0
        %3867 = vmatprep.subr.bf16.mxu0 0
        %3868 = vmatpush2.bf16.msra.mxu0 0
        %3869 = vmatprep.subr.bf16.mxu0 0
        %3870 = vmatpush2.bf16.msra.mxu0 0
        %3871 = vmatprep.mubr.bf16.mxu0 0
        %3872 = vmatmul.mubr.bf16.gmra.mxu0 %v3837
        %v3873 = vpop.f32.mrf.mxu0
        %v3874 = vadd.f32 0.0, %v3873
        %v3875 = vpop.f32.mrf.mxu0
        %v3876 = vpop.f32.mrf.mxu0
        %v3877 = vadd.f32 0.0, %v3876
        %v3878 = vpop.f32.mrf.mxu0
        %3879 = vdwg.mxu0
        %v3880 = vpack.c.bf16 %v3877, %v3874
        %s3881 = scalar_lea.vmem %s7, 128
        %v3882 = vld [vmem:[%s3881] sm:$0xf]
        %v3883 = vld [vmem:[%s3881 + $0x4] sm:$0xf]
        %v3884 = vld [vmem:[%s3881 + $0x8] sm:$0xf]
        %v3885 = vld [vmem:[%s3881 + $0xc] sm:$0xf]
        %v3890 = vunpack.c.l.b16 %v3882
        %v3891 = vunpack.c.l.b16 %v3883
        %v3892 = vunpack.c.l.b16 %v3884
        %v3893 = vunpack.c.l.b16 %v3885
        %v3894 = vpack.c.b16 %v3891, %v3890
        %v3895 = vpack.c.b16 %v3893, %v3892
        %v3899 = vsel %vm2892, %v3880, 0
        %3901 = vmatprep.subr.bf16.mxu0 0
        %3902 = vmatpush1.bf16.msra.mxu0 0
        %3903 = vmatprep.subr.bf16.mxu0 0
        %3904 = vmatpush1.bf16.msra.mxu0 0
        %3905 = vmatprep.subr.bf16.mxu0 0
        %3906 = vmatpush1.bf16.msra.mxu0 0
        %3907 = vmatprep.subr.bf16.mxu0 0
        %3908 = vmatpush1.bf16.msra.mxu0 0
        %3909 = vmatprep.subr.bf16.mxu0 0
        %3910 = vmatpush1.bf16.msra.mxu0 0
        %3911 = vmatprep.subr.bf16.mxu0 0
        %3912 = vmatpush1.bf16.msra.mxu0 0
        %3913 = vmatprep.subr.bf16.mxu0 0
        %3914 = vmatpush1.bf16.msra.mxu0 %v3895
        %3915 = vmatprep.subr.bf16.mxu0 0
        %3916 = vmatpush1.bf16.msra.mxu0 %v3894
        %3917 = vmatprep.subr.bf16.mxu0 0
        %3918 = vmatpush2.bf16.msra.mxu0 0
        %3919 = vmatprep.subr.bf16.mxu0 0
        %3920 = vmatpush2.bf16.msra.mxu0 0
        %3921 = vmatprep.subr.bf16.mxu0 0
        %3922 = vmatpush2.bf16.msra.mxu0 0
        %3923 = vmatprep.subr.bf16.mxu0 0
        %3924 = vmatpush2.bf16.msra.mxu0 0
        %3925 = vmatprep.subr.bf16.mxu0 0
        %3926 = vmatpush2.bf16.msra.mxu0 0
        %3927 = vmatprep.subr.bf16.mxu0 0
        %3928 = vmatpush2.bf16.msra.mxu0 0
        %3929 = vmatprep.subr.bf16.mxu0 0
        %3930 = vmatpush2.bf16.msra.mxu0 0
        %3931 = vmatprep.subr.bf16.mxu0 0
        %3932 = vmatpush2.bf16.msra.mxu0 0
        %3933 = vmatprep.mubr.bf16.mxu0 0
        %3934 = vmatmul.mubr.bf16.gmra.mxu0 %v3899
        %v3935 = vpop.f32.mrf.mxu0
        %v3936 = vadd.f32 0.0, %v3935
        %v3937 = vpop.f32.mrf.mxu0
        %v3938 = vpop.f32.mrf.mxu0
        %v3939 = vadd.f32 0.0, %v3938
        %v3940 = vpop.f32.mrf.mxu0
        %3941 = vdwg.mxu0
        %v3942 = vadd.f32 %v3826, %v3936
        %v3943 = vadd.f32 %v3827, %v3939
        %v3944 = vld [vmem:[%s8] sm:$0x1]
        %v3946 = vlaneseq
        %v3947 = vshrl.u32 %v3946, 7
        %v3948 = vsub.s32 0, %v3947
        %v3949 = vrot.slane %v3944, %v3948
        %v3951 = vadd.f32 %v3942, %v3949
        %v3952 = vadd.f32 %v3943, %v3949
        %v3953 = vmax.f32 %v3951, 0.0
        %v3954 = vmax.f32 %v3952, 0.0
        %3955 = vst.msk [vmem:[%s505] sm:$0xff] %vm2912, %v3953
        %3956 = vst.msk [vmem:[%s505 + $0x8] sm:$0xff] %vm2912, %v3954
        %v3957 = vpack.c.bf16 %v3954, %v3953
        %v3958 = vld [vmem:[%s9] sm:$0x3]
        %v3960 = vsel %vm930, %v3958, 0
        %3962 = vmatprep.subr.bf16.mxu0 0
        %3963 = vmatpush1.bf16.msra.mxu0 0
        %3964 = vmatprep.subr.bf16.mxu0 0
        %3965 = vmatpush1.bf16.msra.mxu0 0
        %3966 = vmatprep.subr.bf16.mxu0 0
        %3967 = vmatpush1.bf16.msra.mxu0 0
        %3968 = vmatprep.subr.bf16.mxu0 0
        %3969 = vmatpush1.bf16.msra.mxu0 0
        %3970 = vmatprep.subr.bf16.mxu0 0
        %3971 = vmatpush1.bf16.msra.mxu0 0
        %3972 = vmatprep.subr.bf16.mxu0 0
        %3973 = vmatpush1.bf16.msra.mxu0 0
        %3974 = vmatprep.subr.bf16.mxu0 0
        %3975 = vmatpush1.bf16.msra.mxu0 0
        %3976 = vmatprep.subr.bf16.mxu0 0
        %3977 = vmatpush1.bf16.msra.mxu0 %v3957
        %3978 = vmatprep.subr.bf16.mxu0 0
        %3979 = vmatpush2.bf16.msra.mxu0 0
        %3980 = vmatprep.subr.bf16.mxu0 0
        %3981 = vmatpush2.bf16.msra.mxu0 0
        %3982 = vmatprep.subr.bf16.mxu0 0
        %3983 = vmatpush2.bf16.msra.mxu0 0
        %3984 = vmatprep.subr.bf16.mxu0 0
        %3985 = vmatpush2.bf16.msra.mxu0 0
        %3986 = vmatprep.subr.bf16.mxu0 0
        %3987 = vmatpush2.bf16.msra.mxu0 0
        %3988 = vmatprep.subr.bf16.mxu0 0
        %3989 = vmatpush2.bf16.msra.mxu0 0
        %3990 = vmatprep.subr.bf16.mxu0 0
        %3991 = vmatpush2.bf16.msra.mxu0 0
        %3992 = vmatprep.subr.bf16.mxu0 0
        %3993 = vmatpush2.bf16.msra.mxu0 0
        %3994 = vmatprep.mubr.bf16.mxu0 0
        %3995 = vmatmul.mubr.bf16.gmra.mxu0 %v3960
        %v3996 = vpop.f32.mrf.mxu0
        %v3997 = vadd.f32 0.0, %v3996
        %v3998 = vpop.f32.mrf.mxu0
        %v3999 = vpop.f32.mrf.mxu0
        %v4000 = vpop.f32.mrf.mxu0
        %4001 = vdwg.mxu0
        %v4002 = vpack.c.bf16 %v3997, %v3997
        %v4003 = vld [vmem:[%s10] sm:$0xf]
        %v4004 = vld [vmem:[%s10 + $0x4] sm:$0xf]
        %v4005 = vld [vmem:[%s10 + $0x8] sm:$0xf]
        %v4006 = vld [vmem:[%s10 + $0xc] sm:$0xf]
        %v4007 = vld [vmem:[%s10 + $0x10] sm:$0xf]
        %v4008 = vld [vmem:[%s10 + $0x14] sm:$0xf]
        %v4009 = vld [vmem:[%s10 + $0x18] sm:$0xf]
        %v4010 = vld [vmem:[%s10 + $0x1c] sm:$0xf]
        %s4011 = scalar_lea.vmem %s9, 2
        %v4012 = vld [vmem:[%s4011] sm:$0x3]
        %v4014 = vsel %vm930, %v4012, 0
        %4016 = vmatprep.subr.bf16.mxu0 0
        %4017 = vmatpush1.bf16.msra.mxu0 0
        %4018 = vmatprep.subr.bf16.mxu0 0
        %4019 = vmatpush1.bf16.msra.mxu0 0
        %4020 = vmatprep.subr.bf16.mxu0 0
        %4021 = vmatpush1.bf16.msra.mxu0 0
        %4022 = vmatprep.subr.bf16.mxu0 0
        %4023 = vmatpush1.bf16.msra.mxu0 0
        %4024 = vmatprep.subr.bf16.mxu0 0
        %4025 = vmatpush1.bf16.msra.mxu0 0
        %4026 = vmatprep.subr.bf16.mxu0 0
        %4027 = vmatpush1.bf16.msra.mxu0 0
        %4028 = vmatprep.subr.bf16.mxu0 0
        %4029 = vmatpush1.bf16.msra.mxu0 0
        %4030 = vmatprep.subr.bf16.mxu0 0
        %4031 = vmatpush1.bf16.msra.mxu0 %v3957
        %4032 = vmatprep.subr.bf16.mxu0 0
        %4033 = vmatpush2.bf16.msra.mxu0 0
        %4034 = vmatprep.subr.bf16.mxu0 0
        %4035 = vmatpush2.bf16.msra.mxu0 0
        %4036 = vmatprep.subr.bf16.mxu0 0
        %4037 = vmatpush2.bf16.msra.mxu0 0
        %4038 = vmatprep.subr.bf16.mxu0 0
        %4039 = vmatpush2.bf16.msra.mxu0 0
        %4040 = vmatprep.subr.bf16.mxu0 0
        %4041 = vmatpush2.bf16.msra.mxu0 0
        %4042 = vmatprep.subr.bf16.mxu0 0
        %4043 = vmatpush2.bf16.msra.mxu0 0
        %4044 = vmatprep.subr.bf16.mxu0 0
        %4045 = vmatpush2.bf16.msra.mxu0 0
        %4046 = vmatprep.subr.bf16.mxu0 0
        %4047 = vmatpush2.bf16.msra.mxu0 0
        %4048 = vmatprep.mubr.bf16.mxu0 0
        %4049 = vmatmul.mubr.bf16.gmra.mxu0 %v4014
        %v4050 = vpop.f32.mrf.mxu0
        %v4051 = vadd.f32 0.0, %v4050
        %v4052 = vpop.f32.mrf.mxu0
        %v4053 = vpop.f32.mrf.mxu0
        %v4054 = vpop.f32.mrf.mxu0
        %4055 = vdwg.mxu0
        %v4056 = vpack.c.bf16 %v4051, %v4051
        %s4057 = scalar_lea.vmem %s10, 32
        %v4058 = vld [vmem:[%s4057] sm:$0xf]
        %v4059 = vld [vmem:[%s4057 + $0x4] sm:$0xf]
        %v4060 = vld [vmem:[%s4057 + $0x8] sm:$0xf]
        %v4061 = vld [vmem:[%s4057 + $0xc] sm:$0xf]
        %v4062 = vld [vmem:[%s4057 + $0x10] sm:$0xf]
        %v4063 = vld [vmem:[%s4057 + $0x14] sm:$0xf]
        %v4064 = vld [vmem:[%s4057 + $0x18] sm:$0xf]
        %v4065 = vld [vmem:[%s4057 + $0x1c] sm:$0xf]
        %v4074 = vunpack.c.l.b16 %v4058
        %v4075 = vunpack.c.l.b16 %v4059
        %v4076 = vunpack.c.l.b16 %v4060
        %v4077 = vunpack.c.l.b16 %v4061
        %v4078 = vunpack.c.l.b16 %v4062
        %v4079 = vunpack.c.l.b16 %v4063
        %v4080 = vunpack.c.l.b16 %v4064
        %v4081 = vunpack.c.l.b16 %v4065
        %v4082 = vpack.c.b16 %v4075, %v4074
        %v4083 = vpack.c.b16 %v4077, %v4076
        %v4084 = vpack.c.b16 %v4079, %v4078
        %v4085 = vpack.c.b16 %v4081, %v4080
        %v4091 = vsel %vm2912, %v4056, 0
        %4093 = vmatprep.subr.bf16.mxu0 0
        %4094 = vmatpush1.bf16.msra.mxu0 0
        %4095 = vmatprep.subr.bf16.mxu0 0
        %4096 = vmatpush1.bf16.msra.mxu0 0
        %4097 = vmatprep.subr.bf16.mxu0 0
        %4098 = vmatpush1.bf16.msra.mxu0 0
        %4099 = vmatprep.subr.bf16.mxu0 0
        %4100 = vmatpush1.bf16.msra.mxu0 0
        %4101 = vmatprep.subr.bf16.mxu0 0
        %4102 = vmatpush1.bf16.msra.mxu0 %v4085
        %4103 = vmatprep.subr.bf16.mxu0 0
        %4104 = vmatpush1.bf16.msra.mxu0 %v4084
        %4105 = vmatprep.subr.bf16.mxu0 0
        %4106 = vmatpush1.bf16.msra.mxu0 %v4083
        %4107 = vmatprep.subr.bf16.mxu0 0
        %4108 = vmatpush1.bf16.msra.mxu0 %v4082
        %4109 = vmatprep.subr.bf16.mxu0 0
        %4110 = vmatpush2.bf16.msra.mxu0 0
        %4111 = vmatprep.subr.bf16.mxu0 0
        %4112 = vmatpush2.bf16.msra.mxu0 0
        %4113 = vmatprep.subr.bf16.mxu0 0
        %4114 = vmatpush2.bf16.msra.mxu0 0
        %4115 = vmatprep.subr.bf16.mxu0 0
        %4116 = vmatpush2.bf16.msra.mxu0 0
        %4117 = vmatprep.subr.bf16.mxu0 0
        %4118 = vmatpush2.bf16.msra.mxu0 0
        %4119 = vmatprep.subr.bf16.mxu0 0
        %4120 = vmatpush2.bf16.msra.mxu0 0
        %4121 = vmatprep.subr.bf16.mxu0 0
        %4122 = vmatpush2.bf16.msra.mxu0 0
        %4123 = vmatprep.subr.bf16.mxu0 0
        %4124 = vmatpush2.bf16.msra.mxu0 0
        %4125 = vmatprep.mubr.bf16.mxu0 0
        %4126 = vmatmul.mubr.bf16.gmra.mxu0 %v4091
        %v4127 = vpop.f32.mrf.mxu0
        %v4128 = vadd.f32 0.0, %v4127
        %v4129 = vpop.f32.mrf.mxu0
        %v4130 = vpop.f32.mrf.mxu0
        %v4131 = vpop.f32.mrf.mxu0
        %4132 = vdwg.mxu0
        %v4141 = vunpack.c.l.b16 %v4003
        %v4142 = vunpack.c.l.b16 %v4004
        %v4143 = vunpack.c.l.b16 %v4005
        %v4144 = vunpack.c.l.b16 %v4006
        %v4145 = vunpack.c.l.b16 %v4007
        %v4146 = vunpack.c.l.b16 %v4008
        %v4147 = vunpack.c.l.b16 %v4009
        %v4148 = vunpack.c.l.b16 %v4010
        %v4149 = vpack.c.b16 %v4142, %v4141
        %v4150 = vpack.c.b16 %v4144, %v4143
        %v4151 = vpack.c.b16 %v4146, %v4145
        %v4152 = vpack.c.b16 %v4148, %v4147
        %v4158 = vsel %vm2912, %v4002, 0
        %4160 = vmatprep.subr.bf16.mxu0 0
        %4161 = vmatpush1.bf16.msra.mxu0 0
        %4162 = vmatprep.subr.bf16.mxu0 0
        %4163 = vmatpush1.bf16.msra.mxu0 0
        %4164 = vmatprep.subr.bf16.mxu0 0
        %4165 = vmatpush1.bf16.msra.mxu0 0
        %4166 = vmatprep.subr.bf16.mxu0 0
        %4167 = vmatpush1.bf16.msra.mxu0 0
        %4168 = vmatprep.subr.bf16.mxu0 0
        %4169 = vmatpush1.bf16.msra.mxu0 %v4152
        %4170 = vmatprep.subr.bf16.mxu0 0
        %4171 = vmatpush1.bf16.msra.mxu0 %v4151
        %4172 = vmatprep.subr.bf16.mxu0 0
        %4173 = vmatpush1.bf16.msra.mxu0 %v4150
        %4174 = vmatprep.subr.bf16.mxu0 0
        %4175 = vmatpush1.bf16.msra.mxu0 %v4149
        %4176 = vmatprep.subr.bf16.mxu0 0
        %4177 = vmatpush2.bf16.msra.mxu0 0
        %4178 = vmatprep.subr.bf16.mxu0 0
        %4179 = vmatpush2.bf16.msra.mxu0 0
        %4180 = vmatprep.subr.bf16.mxu0 0
        %4181 = vmatpush2.bf16.msra.mxu0 0
        %4182 = vmatprep.subr.bf16.mxu0 0
        %4183 = vmatpush2.bf16.msra.mxu0 0
        %4184 = vmatprep.subr.bf16.mxu0 0
        %4185 = vmatpush2.bf16.msra.mxu0 0
        %4186 = vmatprep.subr.bf16.mxu0 0
        %4187 = vmatpush2.bf16.msra.mxu0 0
        %4188 = vmatprep.subr.bf16.mxu0 0
        %4189 = vmatpush2.bf16.msra.mxu0 0
        %4190 = vmatprep.subr.bf16.mxu0 0
        %4191 = vmatpush2.bf16.msra.mxu0 0
        %4192 = vmatprep.mubr.bf16.mxu0 0
        %4193 = vmatmul.mubr.bf16.gmra.mxu0 %v4158
        %v4194 = vpop.f32.mrf.mxu0
        %v4195 = vadd.f32 %v4128, %v4194
        %v4196 = vpop.f32.mrf.mxu0
        %v4197 = vpop.f32.mrf.mxu0
        %v4198 = vpop.f32.mrf.mxu0
        %4199 = vdwg.mxu0
        %s4200 = scalar_lea.vmem %s9, 4
        %v4201 = vld [vmem:[%s4200] sm:$0x3]
        %v4203 = vsel %vm930, %v4201, 0
        %4205 = vmatprep.subr.bf16.mxu0 0
        %4206 = vmatpush1.bf16.msra.mxu0 0
        %4207 = vmatprep.subr.bf16.mxu0 0
        %4208 = vmatpush1.bf16.msra.mxu0 0
        %4209 = vmatprep.subr.bf16.mxu0 0
        %4210 = vmatpush1.bf16.msra.mxu0 0
        %4211 = vmatprep.subr.bf16.mxu0 0
        %4212 = vmatpush1.bf16.msra.mxu0 0
        %4213 = vmatprep.subr.bf16.mxu0 0
        %4214 = vmatpush1.bf16.msra.mxu0 0
        %4215 = vmatprep.subr.bf16.mxu0 0
        %4216 = vmatpush1.bf16.msra.mxu0 0
        %4217 = vmatprep.subr.bf16.mxu0 0
        %4218 = vmatpush1.bf16.msra.mxu0 0
        %4219 = vmatprep.subr.bf16.mxu0 0
        %4220 = vmatpush1.bf16.msra.mxu0 %v3957
        %4221 = vmatprep.subr.bf16.mxu0 0
        %4222 = vmatpush2.bf16.msra.mxu0 0
        %4223 = vmatprep.subr.bf16.mxu0 0
        %4224 = vmatpush2.bf16.msra.mxu0 0
        %4225 = vmatprep.subr.bf16.mxu0 0
        %4226 = vmatpush2.bf16.msra.mxu0 0
        %4227 = vmatprep.subr.bf16.mxu0 0
        %4228 = vmatpush2.bf16.msra.mxu0 0
        %4229 = vmatprep.subr.bf16.mxu0 0
        %4230 = vmatpush2.bf16.msra.mxu0 0
        %4231 = vmatprep.subr.bf16.mxu0 0
        %4232 = vmatpush2.bf16.msra.mxu0 0
        %4233 = vmatprep.subr.bf16.mxu0 0
        %4234 = vmatpush2.bf16.msra.mxu0 0
        %4235 = vmatprep.subr.bf16.mxu0 0
        %4236 = vmatpush2.bf16.msra.mxu0 0
        %4237 = vmatprep.mubr.bf16.mxu0 0
        %4238 = vmatmul.mubr.bf16.gmra.mxu0 %v4203
        %v4239 = vpop.f32.mrf.mxu0
        %v4240 = vadd.f32 0.0, %v4239
        %v4241 = vpop.f32.mrf.mxu0
        %v4242 = vpop.f32.mrf.mxu0
        %v4243 = vpop.f32.mrf.mxu0
        %4244 = vdwg.mxu0
        %v4245 = vpack.c.bf16 %v4240, %v4240
        %s4246 = scalar_lea.vmem %s10, 64
        %v4247 = vld [vmem:[%s4246] sm:$0xf]
        %v4248 = vld [vmem:[%s4246 + $0x4] sm:$0xf]
        %v4249 = vld [vmem:[%s4246 + $0x8] sm:$0xf]
        %v4250 = vld [vmem:[%s4246 + $0xc] sm:$0xf]
        %v4251 = vld [vmem:[%s4246 + $0x10] sm:$0xf]
        %v4252 = vld [vmem:[%s4246 + $0x14] sm:$0xf]
        %v4253 = vld [vmem:[%s4246 + $0x18] sm:$0xf]
        %v4254 = vld [vmem:[%s4246 + $0x1c] sm:$0xf]
        %v4263 = vunpack.c.l.b16 %v4247
        %v4264 = vunpack.c.l.b16 %v4248
        %v4265 = vunpack.c.l.b16 %v4249
        %v4266 = vunpack.c.l.b16 %v4250
        %v4267 = vunpack.c.l.b16 %v4251
        %v4268 = vunpack.c.l.b16 %v4252
        %v4269 = vunpack.c.l.b16 %v4253
        %v4270 = vunpack.c.l.b16 %v4254
        %v4271 = vpack.c.b16 %v4264, %v4263
        %v4272 = vpack.c.b16 %v4266, %v4265
        %v4273 = vpack.c.b16 %v4268, %v4267
        %v4274 = vpack.c.b16 %v4270, %v4269
        %v4280 = vsel %vm2912, %v4245, 0
        %4282 = vmatprep.subr.bf16.mxu0 0
        %4283 = vmatpush1.bf16.msra.mxu0 0
        %4284 = vmatprep.subr.bf16.mxu0 0
        %4285 = vmatpush1.bf16.msra.mxu0 0
        %4286 = vmatprep.subr.bf16.mxu0 0
        %4287 = vmatpush1.bf16.msra.mxu0 0
        %4288 = vmatprep.subr.bf16.mxu0 0
        %4289 = vmatpush1.bf16.msra.mxu0 0
        %4290 = vmatprep.subr.bf16.mxu0 0
        %4291 = vmatpush1.bf16.msra.mxu0 %v4274
        %4292 = vmatprep.subr.bf16.mxu0 0
        %4293 = vmatpush1.bf16.msra.mxu0 %v4273
        %4294 = vmatprep.subr.bf16.mxu0 0
        %4295 = vmatpush1.bf16.msra.mxu0 %v4272
        %4296 = vmatprep.subr.bf16.mxu0 0
        %4297 = vmatpush1.bf16.msra.mxu0 %v4271
        %4298 = vmatprep.subr.bf16.mxu0 0
        %4299 = vmatpush2.bf16.msra.mxu0 0
        %4300 = vmatprep.subr.bf16.mxu0 0
        %4301 = vmatpush2.bf16.msra.mxu0 0
        %4302 = vmatprep.subr.bf16.mxu0 0
        %4303 = vmatpush2.bf16.msra.mxu0 0
        %4304 = vmatprep.subr.bf16.mxu0 0
        %4305 = vmatpush2.bf16.msra.mxu0 0
        %4306 = vmatprep.subr.bf16.mxu0 0
        %4307 = vmatpush2.bf16.msra.mxu0 0
        %4308 = vmatprep.subr.bf16.mxu0 0
        %4309 = vmatpush2.bf16.msra.mxu0 0
        %4310 = vmatprep.subr.bf16.mxu0 0
        %4311 = vmatpush2.bf16.msra.mxu0 0
        %4312 = vmatprep.subr.bf16.mxu0 0
        %4313 = vmatpush2.bf16.msra.mxu0 0
        %4314 = vmatprep.mubr.bf16.mxu0 0
        %4315 = vmatmul.mubr.bf16.gmra.mxu0 %v4280
        %v4316 = vpop.f32.mrf.mxu0
        %v4317 = vadd.f32 0.0, %v4316
        %v4318 = vpop.f32.mrf.mxu0
        %v4319 = vpop.f32.mrf.mxu0
        %v4320 = vpop.f32.mrf.mxu0
        %4321 = vdwg.mxu0
        %v4322 = vadd.f32 %v4195, %v4317
        %s4323 = scalar_lea.vmem %s9, 6
        %v4324 = vld [vmem:[%s4323] sm:$0x3]
        %v4326 = vsel %vm930, %v4324, 0
        %4328 = vmatprep.subr.bf16.mxu0 0
        %4329 = vmatpush1.bf16.msra.mxu0 0
        %4330 = vmatprep.subr.bf16.mxu0 0
        %4331 = vmatpush1.bf16.msra.mxu0 0
        %4332 = vmatprep.subr.bf16.mxu0 0
        %4333 = vmatpush1.bf16.msra.mxu0 0
        %4334 = vmatprep.subr.bf16.mxu0 0
        %4335 = vmatpush1.bf16.msra.mxu0 0
        %4336 = vmatprep.subr.bf16.mxu0 0
        %4337 = vmatpush1.bf16.msra.mxu0 0
        %4338 = vmatprep.subr.bf16.mxu0 0
        %4339 = vmatpush1.bf16.msra.mxu0 0
        %4340 = vmatprep.subr.bf16.mxu0 0
        %4341 = vmatpush1.bf16.msra.mxu0 0
        %4342 = vmatprep.subr.bf16.mxu0 0
        %4343 = vmatpush1.bf16.msra.mxu0 %v3957
        %4344 = vmatprep.subr.bf16.mxu0 0
        %4345 = vmatpush2.bf16.msra.mxu0 0
        %4346 = vmatprep.subr.bf16.mxu0 0
        %4347 = vmatpush2.bf16.msra.mxu0 0
        %4348 = vmatprep.subr.bf16.mxu0 0
        %4349 = vmatpush2.bf16.msra.mxu0 0
        %4350 = vmatprep.subr.bf16.mxu0 0
        %4351 = vmatpush2.bf16.msra.mxu0 0
        %4352 = vmatprep.subr.bf16.mxu0 0
        %4353 = vmatpush2.bf16.msra.mxu0 0
        %4354 = vmatprep.subr.bf16.mxu0 0
        %4355 = vmatpush2.bf16.msra.mxu0 0
        %4356 = vmatprep.subr.bf16.mxu0 0
        %4357 = vmatpush2.bf16.msra.mxu0 0
        %4358 = vmatprep.subr.bf16.mxu0 0
        %4359 = vmatpush2.bf16.msra.mxu0 0
        %4360 = vmatprep.mubr.bf16.mxu0 0
        %4361 = vmatmul.mubr.bf16.gmra.mxu0 %v4326
        %v4362 = vpop.f32.mrf.mxu0
        %v4363 = vadd.f32 0.0, %v4362
        %v4364 = vpop.f32.mrf.mxu0
        %v4365 = vpop.f32.mrf.mxu0
        %v4366 = vpop.f32.mrf.mxu0
        %4367 = vdwg.mxu0
        %v4368 = vpack.c.bf16 %v4363, %v4363
        %s4369 = scalar_lea.vmem %s10, 96
        %v4370 = vld [vmem:[%s4369] sm:$0xf]
        %v4371 = vld [vmem:[%s4369 + $0x4] sm:$0xf]
        %v4372 = vld [vmem:[%s4369 + $0x8] sm:$0xf]
        %v4373 = vld [vmem:[%s4369 + $0xc] sm:$0xf]
        %v4374 = vld [vmem:[%s4369 + $0x10] sm:$0xf]
        %v4375 = vld [vmem:[%s4369 + $0x14] sm:$0xf]
        %v4376 = vld [vmem:[%s4369 + $0x18] sm:$0xf]
        %v4377 = vld [vmem:[%s4369 + $0x1c] sm:$0xf]
        %v4386 = vunpack.c.l.b16 %v4370
        %v4387 = vunpack.c.l.b16 %v4371
        %v4388 = vunpack.c.l.b16 %v4372
        %v4389 = vunpack.c.l.b16 %v4373
        %v4390 = vunpack.c.l.b16 %v4374
        %v4391 = vunpack.c.l.b16 %v4375
        %v4392 = vunpack.c.l.b16 %v4376
        %v4393 = vunpack.c.l.b16 %v4377
        %v4394 = vpack.c.b16 %v4387, %v4386
        %v4395 = vpack.c.b16 %v4389, %v4388
        %v4396 = vpack.c.b16 %v4391, %v4390
        %v4397 = vpack.c.b16 %v4393, %v4392
        %v4403 = vsel %vm2912, %v4368, 0
        %4405 = vmatprep.subr.bf16.mxu0 0
        %4406 = vmatpush1.bf16.msra.mxu0 0
        %4407 = vmatprep.subr.bf16.mxu0 0
        %4408 = vmatpush1.bf16.msra.mxu0 0
        %4409 = vmatprep.subr.bf16.mxu0 0
        %4410 = vmatpush1.bf16.msra.mxu0 0
        %4411 = vmatprep.subr.bf16.mxu0 0
        %4412 = vmatpush1.bf16.msra.mxu0 0
        %4413 = vmatprep.subr.bf16.mxu0 0
        %4414 = vmatpush1.bf16.msra.mxu0 %v4397
        %4415 = vmatprep.subr.bf16.mxu0 0
        %4416 = vmatpush1.bf16.msra.mxu0 %v4396
        %4417 = vmatprep.subr.bf16.mxu0 0
        %4418 = vmatpush1.bf16.msra.mxu0 %v4395
        %4419 = vmatprep.subr.bf16.mxu0 0
        %4420 = vmatpush1.bf16.msra.mxu0 %v4394
        %4421 = vmatprep.subr.bf16.mxu0 0
        %4422 = vmatpush2.bf16.msra.mxu0 0
        %4423 = vmatprep.subr.bf16.mxu0 0
        %4424 = vmatpush2.bf16.msra.mxu0 0
        %4425 = vmatprep.subr.bf16.mxu0 0
        %4426 = vmatpush2.bf16.msra.mxu0 0
        %4427 = vmatprep.subr.bf16.mxu0 0
        %4428 = vmatpush2.bf16.msra.mxu0 0
        %4429 = vmatprep.subr.bf16.mxu0 0
        %4430 = vmatpush2.bf16.msra.mxu0 0
        %4431 = vmatprep.subr.bf16.mxu0 0
        %4432 = vmatpush2.bf16.msra.mxu0 0
        %4433 = vmatprep.subr.bf16.mxu0 0
        %4434 = vmatpush2.bf16.msra.mxu0 0
        %4435 = vmatprep.subr.bf16.mxu0 0
        %4436 = vmatpush2.bf16.msra.mxu0 0
        %4437 = vmatprep.mubr.bf16.mxu0 0
        %4438 = vmatmul.mubr.bf16.gmra.mxu0 %v4403
        %v4439 = vpop.f32.mrf.mxu0
        %v4440 = vadd.f32 0.0, %v4439
        %v4441 = vpop.f32.mrf.mxu0
        %v4442 = vpop.f32.mrf.mxu0
        %v4443 = vpop.f32.mrf.mxu0
        %4444 = vdwg.mxu0
        %v4445 = vadd.f32 %v4322, %v4440
        %s4446 = scalar_lea.vmem %s9, 8
        %v4447 = vld [vmem:[%s4446] sm:$0x3]
        %v4449 = vsel %vm930, %v4447, 0
        %4451 = vmatprep.subr.bf16.mxu0 0
        %4452 = vmatpush1.bf16.msra.mxu0 0
        %4453 = vmatprep.subr.bf16.mxu0 0
        %4454 = vmatpush1.bf16.msra.mxu0 0
        %4455 = vmatprep.subr.bf16.mxu0 0
        %4456 = vmatpush1.bf16.msra.mxu0 0
        %4457 = vmatprep.subr.bf16.mxu0 0
        %4458 = vmatpush1.bf16.msra.mxu0 0
        %4459 = vmatprep.subr.bf16.mxu0 0
        %4460 = vmatpush1.bf16.msra.mxu0 0
        %4461 = vmatprep.subr.bf16.mxu0 0
        %4462 = vmatpush1.bf16.msra.mxu0 0
        %4463 = vmatprep.subr.bf16.mxu0 0
        %4464 = vmatpush1.bf16.msra.mxu0 0
        %4465 = vmatprep.subr.bf16.mxu0 0
        %4466 = vmatpush1.bf16.msra.mxu0 %v3957
        %4467 = vmatprep.subr.bf16.mxu0 0
        %4468 = vmatpush2.bf16.msra.mxu0 0
        %4469 = vmatprep.subr.bf16.mxu0 0
        %4470 = vmatpush2.bf16.msra.mxu0 0
        %4471 = vmatprep.subr.bf16.mxu0 0
        %4472 = vmatpush2.bf16.msra.mxu0 0
        %4473 = vmatprep.subr.bf16.mxu0 0
        %4474 = vmatpush2.bf16.msra.mxu0 0
        %4475 = vmatprep.subr.bf16.mxu0 0
        %4476 = vmatpush2.bf16.msra.mxu0 0
        %4477 = vmatprep.subr.bf16.mxu0 0
        %4478 = vmatpush2.bf16.msra.mxu0 0
        %4479 = vmatprep.subr.bf16.mxu0 0
        %4480 = vmatpush2.bf16.msra.mxu0 0
        %4481 = vmatprep.subr.bf16.mxu0 0
        %4482 = vmatpush2.bf16.msra.mxu0 0
        %4483 = vmatprep.mubr.bf16.mxu0 0
        %4484 = vmatmul.mubr.bf16.gmra.mxu0 %v4449
        %v4485 = vpop.f32.mrf.mxu0
        %v4486 = vadd.f32 0.0, %v4485
        %v4487 = vpop.f32.mrf.mxu0
        %v4488 = vpop.f32.mrf.mxu0
        %v4489 = vpop.f32.mrf.mxu0
        %4490 = vdwg.mxu0
        %v4491 = vpack.c.bf16 %v4486, %v4486
        %s4492 = scalar_lea.vmem %s10, 128
        %v4493 = vld [vmem:[%s4492] sm:$0xf]
        %v4494 = vld [vmem:[%s4492 + $0x4] sm:$0xf]
        %v4495 = vld [vmem:[%s4492 + $0x8] sm:$0xf]
        %v4496 = vld [vmem:[%s4492 + $0xc] sm:$0xf]
        %v4497 = vld [vmem:[%s4492 + $0x10] sm:$0xf]
        %v4498 = vld [vmem:[%s4492 + $0x14] sm:$0xf]
        %v4499 = vld [vmem:[%s4492 + $0x18] sm:$0xf]
        %v4500 = vld [vmem:[%s4492 + $0x1c] sm:$0xf]
        %v4509 = vunpack.c.l.b16 %v4493
        %v4510 = vunpack.c.l.b16 %v4494
        %v4511 = vunpack.c.l.b16 %v4495
        %v4512 = vunpack.c.l.b16 %v4496
        %v4513 = vunpack.c.l.b16 %v4497
        %v4514 = vunpack.c.l.b16 %v4498
        %v4515 = vunpack.c.l.b16 %v4499
        %v4516 = vunpack.c.l.b16 %v4500
        %v4517 = vpack.c.b16 %v4510, %v4509
        %v4518 = vpack.c.b16 %v4512, %v4511
        %v4519 = vpack.c.b16 %v4514, %v4513
        %v4520 = vpack.c.b16 %v4516, %v4515
        %v4526 = vsel %vm2912, %v4491, 0
        %4528 = vmatprep.subr.bf16.mxu0 0
        %4529 = vmatpush1.bf16.msra.mxu0 0
        %4530 = vmatprep.subr.bf16.mxu0 0
        %4531 = vmatpush1.bf16.msra.mxu0 0
        %4532 = vmatprep.subr.bf16.mxu0 0
        %4533 = vmatpush1.bf16.msra.mxu0 0
        %4534 = vmatprep.subr.bf16.mxu0 0
        %4535 = vmatpush1.bf16.msra.mxu0 0
        %4536 = vmatprep.subr.bf16.mxu0 0
        %4537 = vmatpush1.bf16.msra.mxu0 %v4520
        %4538 = vmatprep.subr.bf16.mxu0 0
        %4539 = vmatpush1.bf16.msra.mxu0 %v4519
        %4540 = vmatprep.subr.bf16.mxu0 0
        %4541 = vmatpush1.bf16.msra.mxu0 %v4518
        %4542 = vmatprep.subr.bf16.mxu0 0
        %4543 = vmatpush1.bf16.msra.mxu0 %v4517
        %4544 = vmatprep.subr.bf16.mxu0 0
        %4545 = vmatpush2.bf16.msra.mxu0 0
        %4546 = vmatprep.subr.bf16.mxu0 0
        %4547 = vmatpush2.bf16.msra.mxu0 0
        %4548 = vmatprep.subr.bf16.mxu0 0
        %4549 = vmatpush2.bf16.msra.mxu0 0
        %4550 = vmatprep.subr.bf16.mxu0 0
        %4551 = vmatpush2.bf16.msra.mxu0 0
        %4552 = vmatprep.subr.bf16.mxu0 0
        %4553 = vmatpush2.bf16.msra.mxu0 0
        %4554 = vmatprep.subr.bf16.mxu0 0
        %4555 = vmatpush2.bf16.msra.mxu0 0
        %4556 = vmatprep.subr.bf16.mxu0 0
        %4557 = vmatpush2.bf16.msra.mxu0 0
        %4558 = vmatprep.subr.bf16.mxu0 0
        %4559 = vmatpush2.bf16.msra.mxu0 0
        %4560 = vmatprep.mubr.bf16.mxu0 0
        %4561 = vmatmul.mubr.bf16.gmra.mxu0 %v4526
        %v4562 = vpop.f32.mrf.mxu0
        %v4563 = vadd.f32 0.0, %v4562
        %v4564 = vpop.f32.mrf.mxu0
        %v4565 = vpop.f32.mrf.mxu0
        %v4566 = vpop.f32.mrf.mxu0
        %4567 = vdwg.mxu0
        %v4568 = vadd.f32 %v4445, %v4563
        %s4569 = scalar_lea.vmem %s9, 10
        %v4570 = vld [vmem:[%s4569] sm:$0x3]
        %v4572 = vsel %vm930, %v4570, 0
        %4574 = vmatprep.subr.bf16.mxu0 0
        %4575 = vmatpush1.bf16.msra.mxu0 0
        %4576 = vmatprep.subr.bf16.mxu0 0
        %4577 = vmatpush1.bf16.msra.mxu0 0
        %4578 = vmatprep.subr.bf16.mxu0 0
        %4579 = vmatpush1.bf16.msra.mxu0 0
        %4580 = vmatprep.subr.bf16.mxu0 0
        %4581 = vmatpush1.bf16.msra.mxu0 0
        %4582 = vmatprep.subr.bf16.mxu0 0
        %4583 = vmatpush1.bf16.msra.mxu0 0
        %4584 = vmatprep.subr.bf16.mxu0 0
        %4585 = vmatpush1.bf16.msra.mxu0 0
        %4586 = vmatprep.subr.bf16.mxu0 0
        %4587 = vmatpush1.bf16.msra.mxu0 0
        %4588 = vmatprep.subr.bf16.mxu0 0
        %4589 = vmatpush1.bf16.msra.mxu0 %v3957
        %4590 = vmatprep.subr.bf16.mxu0 0
        %4591 = vmatpush2.bf16.msra.mxu0 0
        %4592 = vmatprep.subr.bf16.mxu0 0
        %4593 = vmatpush2.bf16.msra.mxu0 0
        %4594 = vmatprep.subr.bf16.mxu0 0
        %4595 = vmatpush2.bf16.msra.mxu0 0
        %4596 = vmatprep.subr.bf16.mxu0 0
        %4597 = vmatpush2.bf16.msra.mxu0 0
        %4598 = vmatprep.subr.bf16.mxu0 0
        %4599 = vmatpush2.bf16.msra.mxu0 0
        %4600 = vmatprep.subr.bf16.mxu0 0
        %4601 = vmatpush2.bf16.msra.mxu0 0
        %4602 = vmatprep.subr.bf16.mxu0 0
        %4603 = vmatpush2.bf16.msra.mxu0 0
        %4604 = vmatprep.subr.bf16.mxu0 0
        %4605 = vmatpush2.bf16.msra.mxu0 0
        %4606 = vmatprep.mubr.bf16.mxu0 0
        %4607 = vmatmul.mubr.bf16.gmra.mxu0 %v4572
        %v4608 = vpop.f32.mrf.mxu0
        %v4609 = vadd.f32 0.0, %v4608
        %v4610 = vpop.f32.mrf.mxu0
        %v4611 = vpop.f32.mrf.mxu0
        %v4612 = vpop.f32.mrf.mxu0
        %4613 = vdwg.mxu0
        %v4614 = vpack.c.bf16 %v4609, %v4609
        %s4615 = scalar_lea.vmem %s10, 160
        %v4616 = vld [vmem:[%s4615] sm:$0xf]
        %v4617 = vld [vmem:[%s4615 + $0x4] sm:$0xf]
        %v4618 = vld [vmem:[%s4615 + $0x8] sm:$0xf]
        %v4619 = vld [vmem:[%s4615 + $0xc] sm:$0xf]
        %v4620 = vld [vmem:[%s4615 + $0x10] sm:$0xf]
        %v4621 = vld [vmem:[%s4615 + $0x14] sm:$0xf]
        %v4622 = vld [vmem:[%s4615 + $0x18] sm:$0xf]
        %v4623 = vld [vmem:[%s4615 + $0x1c] sm:$0xf]
        %v4632 = vunpack.c.l.b16 %v4616
        %v4633 = vunpack.c.l.b16 %v4617
        %v4634 = vunpack.c.l.b16 %v4618
        %v4635 = vunpack.c.l.b16 %v4619
        %v4636 = vunpack.c.l.b16 %v4620
        %v4637 = vunpack.c.l.b16 %v4621
        %v4638 = vunpack.c.l.b16 %v4622
        %v4639 = vunpack.c.l.b16 %v4623
        %v4640 = vpack.c.b16 %v4633, %v4632
        %v4641 = vpack.c.b16 %v4635, %v4634
        %v4642 = vpack.c.b16 %v4637, %v4636
        %v4643 = vpack.c.b16 %v4639, %v4638
        %v4649 = vsel %vm2912, %v4614, 0
        %4651 = vmatprep.subr.bf16.mxu0 0
        %4652 = vmatpush1.bf16.msra.mxu0 0
        %4653 = vmatprep.subr.bf16.mxu0 0
        %4654 = vmatpush1.bf16.msra.mxu0 0
        %4655 = vmatprep.subr.bf16.mxu0 0
        %4656 = vmatpush1.bf16.msra.mxu0 0
        %4657 = vmatprep.subr.bf16.mxu0 0
        %4658 = vmatpush1.bf16.msra.mxu0 0
        %4659 = vmatprep.subr.bf16.mxu0 0
        %4660 = vmatpush1.bf16.msra.mxu0 %v4643
        %4661 = vmatprep.subr.bf16.mxu0 0
        %4662 = vmatpush1.bf16.msra.mxu0 %v4642
        %4663 = vmatprep.subr.bf16.mxu0 0
        %4664 = vmatpush1.bf16.msra.mxu0 %v4641
        %4665 = vmatprep.subr.bf16.mxu0 0
        %4666 = vmatpush1.bf16.msra.mxu0 %v4640
        %4667 = vmatprep.subr.bf16.mxu0 0
        %4668 = vmatpush2.bf16.msra.mxu0 0
        %4669 = vmatprep.subr.bf16.mxu0 0
        %4670 = vmatpush2.bf16.msra.mxu0 0
        %4671 = vmatprep.subr.bf16.mxu0 0
        %4672 = vmatpush2.bf16.msra.mxu0 0
        %4673 = vmatprep.subr.bf16.mxu0 0
        %4674 = vmatpush2.bf16.msra.mxu0 0
        %4675 = vmatprep.subr.bf16.mxu0 0
        %4676 = vmatpush2.bf16.msra.mxu0 0
        %4677 = vmatprep.subr.bf16.mxu0 0
        %4678 = vmatpush2.bf16.msra.mxu0 0
        %4679 = vmatprep.subr.bf16.mxu0 0
        %4680 = vmatpush2.bf16.msra.mxu0 0
        %4681 = vmatprep.subr.bf16.mxu0 0
        %4682 = vmatpush2.bf16.msra.mxu0 0
        %4683 = vmatprep.mubr.bf16.mxu0 0
        %4684 = vmatmul.mubr.bf16.gmra.mxu0 %v4649
        %v4685 = vpop.f32.mrf.mxu0
        %v4686 = vadd.f32 0.0, %v4685
        %v4687 = vpop.f32.mrf.mxu0
        %v4688 = vpop.f32.mrf.mxu0
        %v4689 = vpop.f32.mrf.mxu0
        %4690 = vdwg.mxu0
        %v4691 = vadd.f32 %v4568, %v4686
        %s4692 = scalar_lea.vmem %s9, 12
        %v4693 = vld [vmem:[%s4692] sm:$0x3]
        %v4695 = vsel %vm930, %v4693, 0
        %4697 = vmatprep.subr.bf16.mxu0 0
        %4698 = vmatpush1.bf16.msra.mxu0 0
        %4699 = vmatprep.subr.bf16.mxu0 0
        %4700 = vmatpush1.bf16.msra.mxu0 0
        %4701 = vmatprep.subr.bf16.mxu0 0
        %4702 = vmatpush1.bf16.msra.mxu0 0
        %4703 = vmatprep.subr.bf16.mxu0 0
        %4704 = vmatpush1.bf16.msra.mxu0 0
        %4705 = vmatprep.subr.bf16.mxu0 0
        %4706 = vmatpush1.bf16.msra.mxu0 0
        %4707 = vmatprep.subr.bf16.mxu0 0
        %4708 = vmatpush1.bf16.msra.mxu0 0
        %4709 = vmatprep.subr.bf16.mxu0 0
        %4710 = vmatpush1.bf16.msra.mxu0 0
        %4711 = vmatprep.subr.bf16.mxu0 0
        %4712 = vmatpush1.bf16.msra.mxu0 %v3957
        %4713 = vmatprep.subr.bf16.mxu0 0
        %4714 = vmatpush2.bf16.msra.mxu0 0
        %4715 = vmatprep.subr.bf16.mxu0 0
        %4716 = vmatpush2.bf16.msra.mxu0 0
        %4717 = vmatprep.subr.bf16.mxu0 0
        %4718 = vmatpush2.bf16.msra.mxu0 0
        %4719 = vmatprep.subr.bf16.mxu0 0
        %4720 = vmatpush2.bf16.msra.mxu0 0
        %4721 = vmatprep.subr.bf16.mxu0 0
        %4722 = vmatpush2.bf16.msra.mxu0 0
        %4723 = vmatprep.subr.bf16.mxu0 0
        %4724 = vmatpush2.bf16.msra.mxu0 0
        %4725 = vmatprep.subr.bf16.mxu0 0
        %4726 = vmatpush2.bf16.msra.mxu0 0
        %4727 = vmatprep.subr.bf16.mxu0 0
        %4728 = vmatpush2.bf16.msra.mxu0 0
        %4729 = vmatprep.mubr.bf16.mxu0 0
        %4730 = vmatmul.mubr.bf16.gmra.mxu0 %v4695
        %v4731 = vpop.f32.mrf.mxu0
        %v4732 = vadd.f32 0.0, %v4731
        %v4733 = vpop.f32.mrf.mxu0
        %v4734 = vpop.f32.mrf.mxu0
        %v4735 = vpop.f32.mrf.mxu0
        %4736 = vdwg.mxu0
        %v4737 = vpack.c.bf16 %v4732, %v4732
        %s4738 = scalar_lea.vmem %s10, 192
        %v4739 = vld [vmem:[%s4738] sm:$0xf]
        %v4740 = vld [vmem:[%s4738 + $0x4] sm:$0xf]
        %v4741 = vld [vmem:[%s4738 + $0x8] sm:$0xf]
        %v4742 = vld [vmem:[%s4738 + $0xc] sm:$0xf]
        %v4743 = vld [vmem:[%s4738 + $0x10] sm:$0xf]
        %v4744 = vld [vmem:[%s4738 + $0x14] sm:$0xf]
        %v4745 = vld [vmem:[%s4738 + $0x18] sm:$0xf]
        %v4746 = vld [vmem:[%s4738 + $0x1c] sm:$0xf]
        %v4755 = vunpack.c.l.b16 %v4739
        %v4756 = vunpack.c.l.b16 %v4740
        %v4757 = vunpack.c.l.b16 %v4741
        %v4758 = vunpack.c.l.b16 %v4742
        %v4759 = vunpack.c.l.b16 %v4743
        %v4760 = vunpack.c.l.b16 %v4744
        %v4761 = vunpack.c.l.b16 %v4745
        %v4762 = vunpack.c.l.b16 %v4746
        %v4763 = vpack.c.b16 %v4756, %v4755
        %v4764 = vpack.c.b16 %v4758, %v4757
        %v4765 = vpack.c.b16 %v4760, %v4759
        %v4766 = vpack.c.b16 %v4762, %v4761
        %v4772 = vsel %vm2912, %v4737, 0
        %4774 = vmatprep.subr.bf16.mxu0 0
        %4775 = vmatpush1.bf16.msra.mxu0 0
        %4776 = vmatprep.subr.bf16.mxu0 0
        %4777 = vmatpush1.bf16.msra.mxu0 0
        %4778 = vmatprep.subr.bf16.mxu0 0
        %4779 = vmatpush1.bf16.msra.mxu0 0
        %4780 = vmatprep.subr.bf16.mxu0 0
        %4781 = vmatpush1.bf16.msra.mxu0 0
        %4782 = vmatprep.subr.bf16.mxu0 0
        %4783 = vmatpush1.bf16.msra.mxu0 %v4766
        %4784 = vmatprep.subr.bf16.mxu0 0
        %4785 = vmatpush1.bf16.msra.mxu0 %v4765
        %4786 = vmatprep.subr.bf16.mxu0 0
        %4787 = vmatpush1.bf16.msra.mxu0 %v4764
        %4788 = vmatprep.subr.bf16.mxu0 0
        %4789 = vmatpush1.bf16.msra.mxu0 %v4763
        %4790 = vmatprep.subr.bf16.mxu0 0
        %4791 = vmatpush2.bf16.msra.mxu0 0
        %4792 = vmatprep.subr.bf16.mxu0 0
        %4793 = vmatpush2.bf16.msra.mxu0 0
        %4794 = vmatprep.subr.bf16.mxu0 0
        %4795 = vmatpush2.bf16.msra.mxu0 0
        %4796 = vmatprep.subr.bf16.mxu0 0
        %4797 = vmatpush2.bf16.msra.mxu0 0
        %4798 = vmatprep.subr.bf16.mxu0 0
        %4799 = vmatpush2.bf16.msra.mxu0 0
        %4800 = vmatprep.subr.bf16.mxu0 0
        %4801 = vmatpush2.bf16.msra.mxu0 0
        %4802 = vmatprep.subr.bf16.mxu0 0
        %4803 = vmatpush2.bf16.msra.mxu0 0
        %4804 = vmatprep.subr.bf16.mxu0 0
        %4805 = vmatpush2.bf16.msra.mxu0 0
        %4806 = vmatprep.mubr.bf16.mxu0 0
        %4807 = vmatmul.mubr.bf16.gmra.mxu0 %v4772
        %v4808 = vpop.f32.mrf.mxu0
        %v4809 = vadd.f32 0.0, %v4808
        %v4810 = vpop.f32.mrf.mxu0
        %v4811 = vpop.f32.mrf.mxu0
        %v4812 = vpop.f32.mrf.mxu0
        %4813 = vdwg.mxu0
        %v4814 = vadd.f32 %v4691, %v4809
        %s4815 = scalar_lea.vmem %s9, 14
        %v4816 = vld [vmem:[%s4815] sm:$0x3]
        %v4818 = vsel %vm930, %v4816, 0
        %4820 = vmatprep.subr.bf16.mxu0 0
        %4821 = vmatpush1.bf16.msra.mxu0 0
        %4822 = vmatprep.subr.bf16.mxu0 0
        %4823 = vmatpush1.bf16.msra.mxu0 0
        %4824 = vmatprep.subr.bf16.mxu0 0
        %4825 = vmatpush1.bf16.msra.mxu0 0
        %4826 = vmatprep.subr.bf16.mxu0 0
        %4827 = vmatpush1.bf16.msra.mxu0 0
        %4828 = vmatprep.subr.bf16.mxu0 0
        %4829 = vmatpush1.bf16.msra.mxu0 0
        %4830 = vmatprep.subr.bf16.mxu0 0
        %4831 = vmatpush1.bf16.msra.mxu0 0
        %4832 = vmatprep.subr.bf16.mxu0 0
        %4833 = vmatpush1.bf16.msra.mxu0 0
        %4834 = vmatprep.subr.bf16.mxu0 0
        %4835 = vmatpush1.bf16.msra.mxu0 %v3957
        %4836 = vmatprep.subr.bf16.mxu0 0
        %4837 = vmatpush2.bf16.msra.mxu0 0
        %4838 = vmatprep.subr.bf16.mxu0 0
        %4839 = vmatpush2.bf16.msra.mxu0 0
        %4840 = vmatprep.subr.bf16.mxu0 0
        %4841 = vmatpush2.bf16.msra.mxu0 0
        %4842 = vmatprep.subr.bf16.mxu0 0
        %4843 = vmatpush2.bf16.msra.mxu0 0
        %4844 = vmatprep.subr.bf16.mxu0 0
        %4845 = vmatpush2.bf16.msra.mxu0 0
        %4846 = vmatprep.subr.bf16.mxu0 0
        %4847 = vmatpush2.bf16.msra.mxu0 0
        %4848 = vmatprep.subr.bf16.mxu0 0
        %4849 = vmatpush2.bf16.msra.mxu0 0
        %4850 = vmatprep.subr.bf16.mxu0 0
        %4851 = vmatpush2.bf16.msra.mxu0 0
        %4852 = vmatprep.mubr.bf16.mxu0 0
        %4853 = vmatmul.mubr.bf16.gmra.mxu0 %v4818
        %v4854 = vpop.f32.mrf.mxu0
        %v4855 = vadd.f32 0.0, %v4854
        %v4856 = vpop.f32.mrf.mxu0
        %v4857 = vpop.f32.mrf.mxu0
        %v4858 = vpop.f32.mrf.mxu0
        %4859 = vdwg.mxu0
        %v4860 = vpack.c.bf16 %v4855, %v4855
        %s4861 = scalar_lea.vmem %s10, 224
        %v4862 = vld [vmem:[%s4861] sm:$0xf]
        %v4863 = vld [vmem:[%s4861 + $0x4] sm:$0xf]
        %v4864 = vld [vmem:[%s4861 + $0x8] sm:$0xf]
        %v4865 = vld [vmem:[%s4861 + $0xc] sm:$0xf]
        %v4866 = vld [vmem:[%s4861 + $0x10] sm:$0xf]
        %v4867 = vld [vmem:[%s4861 + $0x14] sm:$0xf]
        %v4868 = vld [vmem:[%s4861 + $0x18] sm:$0xf]
        %v4869 = vld [vmem:[%s4861 + $0x1c] sm:$0xf]
        %v4878 = vunpack.c.l.b16 %v4862
        %v4879 = vunpack.c.l.b16 %v4863
        %v4880 = vunpack.c.l.b16 %v4864
        %v4881 = vunpack.c.l.b16 %v4865
        %v4882 = vunpack.c.l.b16 %v4866
        %v4883 = vunpack.c.l.b16 %v4867
        %v4884 = vunpack.c.l.b16 %v4868
        %v4885 = vunpack.c.l.b16 %v4869
        %v4886 = vpack.c.b16 %v4879, %v4878
        %v4887 = vpack.c.b16 %v4881, %v4880
        %v4888 = vpack.c.b16 %v4883, %v4882
        %v4889 = vpack.c.b16 %v4885, %v4884
        %v4895 = vsel %vm2912, %v4860, 0
        %4897 = vmatprep.subr.bf16.mxu0 0
        %4898 = vmatpush1.bf16.msra.mxu0 0
        %4899 = vmatprep.subr.bf16.mxu0 0
        %4900 = vmatpush1.bf16.msra.mxu0 0
        %4901 = vmatprep.subr.bf16.mxu0 0
        %4902 = vmatpush1.bf16.msra.mxu0 0
        %4903 = vmatprep.subr.bf16.mxu0 0
        %4904 = vmatpush1.bf16.msra.mxu0 0
        %4905 = vmatprep.subr.bf16.mxu0 0
        %4906 = vmatpush1.bf16.msra.mxu0 %v4889
        %4907 = vmatprep.subr.bf16.mxu0 0
        %4908 = vmatpush1.bf16.msra.mxu0 %v4888
        %4909 = vmatprep.subr.bf16.mxu0 0
        %4910 = vmatpush1.bf16.msra.mxu0 %v4887
        %4911 = vmatprep.subr.bf16.mxu0 0
        %4912 = vmatpush1.bf16.msra.mxu0 %v4886
        %4913 = vmatprep.subr.bf16.mxu0 0
        %4914 = vmatpush2.bf16.msra.mxu0 0
        %4915 = vmatprep.subr.bf16.mxu0 0
        %4916 = vmatpush2.bf16.msra.mxu0 0
        %4917 = vmatprep.subr.bf16.mxu0 0
        %4918 = vmatpush2.bf16.msra.mxu0 0
        %4919 = vmatprep.subr.bf16.mxu0 0
        %4920 = vmatpush2.bf16.msra.mxu0 0
        %4921 = vmatprep.subr.bf16.mxu0 0
        %4922 = vmatpush2.bf16.msra.mxu0 0
        %4923 = vmatprep.subr.bf16.mxu0 0
        %4924 = vmatpush2.bf16.msra.mxu0 0
        %4925 = vmatprep.subr.bf16.mxu0 0
        %4926 = vmatpush2.bf16.msra.mxu0 0
        %4927 = vmatprep.subr.bf16.mxu0 0
        %4928 = vmatpush2.bf16.msra.mxu0 0
        %4929 = vmatprep.mubr.bf16.mxu0 0
        %4930 = vmatmul.mubr.bf16.gmra.mxu0 %v4895
        %v4931 = vpop.f32.mrf.mxu0
        %v4932 = vadd.f32 0.0, %v4931
        %v4933 = vpop.f32.mrf.mxu0
        %v4934 = vpop.f32.mrf.mxu0
        %v4935 = vpop.f32.mrf.mxu0
        %4936 = vdwg.mxu0
        %v4937 = vadd.f32 %v4814, %v4932
        %s4938 = scalar_lea.vmem %s9, 16
        %v4939 = vld [vmem:[%s4938] sm:$0x3]
        %v4941 = vsel %vm930, %v4939, 0
        %4943 = vmatprep.subr.bf16.mxu0 0
        %4944 = vmatpush1.bf16.msra.mxu0 0
        %4945 = vmatprep.subr.bf16.mxu0 0
        %4946 = vmatpush1.bf16.msra.mxu0 0
        %4947 = vmatprep.subr.bf16.mxu0 0
        %4948 = vmatpush1.bf16.msra.mxu0 0
        %4949 = vmatprep.subr.bf16.mxu0 0
        %4950 = vmatpush1.bf16.msra.mxu0 0
        %4951 = vmatprep.subr.bf16.mxu0 0
        %4952 = vmatpush1.bf16.msra.mxu0 0
        %4953 = vmatprep.subr.bf16.mxu0 0
        %4954 = vmatpush1.bf16.msra.mxu0 0
        %4955 = vmatprep.subr.bf16.mxu0 0
        %4956 = vmatpush1.bf16.msra.mxu0 0
        %4957 = vmatprep.subr.bf16.mxu0 0
        %4958 = vmatpush1.bf16.msra.mxu0 %v3957
        %4959 = vmatprep.subr.bf16.mxu0 0
        %4960 = vmatpush2.bf16.msra.mxu0 0
        %4961 = vmatprep.subr.bf16.mxu0 0
        %4962 = vmatpush2.bf16.msra.mxu0 0
        %4963 = vmatprep.subr.bf16.mxu0 0
        %4964 = vmatpush2.bf16.msra.mxu0 0
        %4965 = vmatprep.subr.bf16.mxu0 0
        %4966 = vmatpush2.bf16.msra.mxu0 0
        %4967 = vmatprep.subr.bf16.mxu0 0
        %4968 = vmatpush2.bf16.msra.mxu0 0
        %4969 = vmatprep.subr.bf16.mxu0 0
        %4970 = vmatpush2.bf16.msra.mxu0 0
        %4971 = vmatprep.subr.bf16.mxu0 0
        %4972 = vmatpush2.bf16.msra.mxu0 0
        %4973 = vmatprep.subr.bf16.mxu0 0
        %4974 = vmatpush2.bf16.msra.mxu0 0
        %4975 = vmatprep.mubr.bf16.mxu0 0
        %4976 = vmatmul.mubr.bf16.gmra.mxu0 %v4941
        %v4977 = vpop.f32.mrf.mxu0
        %v4978 = vadd.f32 0.0, %v4977
        %v4979 = vpop.f32.mrf.mxu0
        %v4980 = vpop.f32.mrf.mxu0
        %v4981 = vpop.f32.mrf.mxu0
        %4982 = vdwg.mxu0
        %v4983 = vpack.c.bf16 %v4978, %v4978
        %s4984 = scalar_lea.vmem %s10, 256
        %v4985 = vld [vmem:[%s4984] sm:$0xf]
        %v4986 = vld [vmem:[%s4984 + $0x4] sm:$0xf]
        %v4987 = vld [vmem:[%s4984 + $0x8] sm:$0xf]
        %v4988 = vld [vmem:[%s4984 + $0xc] sm:$0xf]
        %v4989 = vld [vmem:[%s4984 + $0x10] sm:$0xf]
        %v4990 = vld [vmem:[%s4984 + $0x14] sm:$0xf]
        %v4991 = vld [vmem:[%s4984 + $0x18] sm:$0xf]
        %v4992 = vld [vmem:[%s4984 + $0x1c] sm:$0xf]
        %v5001 = vunpack.c.l.b16 %v4985
        %v5002 = vunpack.c.l.b16 %v4986
        %v5003 = vunpack.c.l.b16 %v4987
        %v5004 = vunpack.c.l.b16 %v4988
        %v5005 = vunpack.c.l.b16 %v4989
        %v5006 = vunpack.c.l.b16 %v4990
        %v5007 = vunpack.c.l.b16 %v4991
        %v5008 = vunpack.c.l.b16 %v4992
        %v5009 = vpack.c.b16 %v5002, %v5001
        %v5010 = vpack.c.b16 %v5004, %v5003
        %v5011 = vpack.c.b16 %v5006, %v5005
        %v5012 = vpack.c.b16 %v5008, %v5007
        %v5018 = vsel %vm2912, %v4983, 0
        %5020 = vmatprep.subr.bf16.mxu0 0
        %5021 = vmatpush1.bf16.msra.mxu0 0
        %5022 = vmatprep.subr.bf16.mxu0 0
        %5023 = vmatpush1.bf16.msra.mxu0 0
        %5024 = vmatprep.subr.bf16.mxu0 0
        %5025 = vmatpush1.bf16.msra.mxu0 0
        %5026 = vmatprep.subr.bf16.mxu0 0
        %5027 = vmatpush1.bf16.msra.mxu0 0
        %5028 = vmatprep.subr.bf16.mxu0 0
        %5029 = vmatpush1.bf16.msra.mxu0 %v5012
        %5030 = vmatprep.subr.bf16.mxu0 0
        %5031 = vmatpush1.bf16.msra.mxu0 %v5011
        %5032 = vmatprep.subr.bf16.mxu0 0
        %5033 = vmatpush1.bf16.msra.mxu0 %v5010
        %5034 = vmatprep.subr.bf16.mxu0 0
        %5035 = vmatpush1.bf16.msra.mxu0 %v5009
        %5036 = vmatprep.subr.bf16.mxu0 0
        %5037 = vmatpush2.bf16.msra.mxu0 0
        %5038 = vmatprep.subr.bf16.mxu0 0
        %5039 = vmatpush2.bf16.msra.mxu0 0
        %5040 = vmatprep.subr.bf16.mxu0 0
        %5041 = vmatpush2.bf16.msra.mxu0 0
        %5042 = vmatprep.subr.bf16.mxu0 0
        %5043 = vmatpush2.bf16.msra.mxu0 0
        %5044 = vmatprep.subr.bf16.mxu0 0
        %5045 = vmatpush2.bf16.msra.mxu0 0
        %5046 = vmatprep.subr.bf16.mxu0 0
        %5047 = vmatpush2.bf16.msra.mxu0 0
        %5048 = vmatprep.subr.bf16.mxu0 0
        %5049 = vmatpush2.bf16.msra.mxu0 0
        %5050 = vmatprep.subr.bf16.mxu0 0
        %5051 = vmatpush2.bf16.msra.mxu0 0
        %5052 = vmatprep.mubr.bf16.mxu0 0
        %5053 = vmatmul.mubr.bf16.gmra.mxu0 %v5018
        %v5054 = vpop.f32.mrf.mxu0
        %v5055 = vadd.f32 0.0, %v5054
        %v5056 = vpop.f32.mrf.mxu0
        %v5057 = vpop.f32.mrf.mxu0
        %v5058 = vpop.f32.mrf.mxu0
        %5059 = vdwg.mxu0
        %v5060 = vadd.f32 %v4937, %v5055
        %v5061 = vld [vmem:[%s11] sm:$0x1]
        %v5063 = vlaneseq
        %v5064 = vshrl.u32 %v5063, 7
        %v5065 = vsub.s32 0, %v5064
        %v5066 = vrot.slane %v5061, %v5065
        %v5068 = vadd.f32 %v5060, %v5066
        %v5069 = vmax.f32 %v5068, 0.0
        %5070 = vst [vmem:[%s512] sm:$0xf] %v5069
        %p5071 = scmp.lt.s32.totalorder %s33, 1
        %s5072 = scalar_select %p5071, %s33, 1
        %s5073 = smul.addr %s5072, 32
        %s5074 = smul.addr %s5073, 8
        %s5075 = scalar_lea.vmem %s12, %s5074
        %p5076 = scmp.lt.s32.totalorder %s33, 1
        %s5077 = scalar_select %p5076, %s33, 1
        %s5078 = smul.addr %s5077, 8
        %s5079 = smul.addr %s5078, 8
        %s5080 = scalar_lea.vmem %s13, %s5079
        %s5081 = sand.u32 %s350, 1
        %s5082 = scalar_lea.sflag [#allocation3], %s5081
        %s5083 = sand.u32 %s350, 1
        %s5084 = smul.addr %s5083, 16
        %s5085 = scalar_lea.vmem [#allocation2], %s5084
        %s5086 = sand.u32 %s376, 1
        %s5087 = scalar_lea.sflag [#allocation5], %s5086
        %s5088 = sand.u32 %s376, 1
        %s5089 = smul.addr %s5088, 4
        %s5090 = scalar_lea.vmem [#allocation4], %s5089
        // Predicated region
        $region69: #{cnn_encoder_forward.3} parent=67 // pred_check
          %p5091 = pneg %p308
        $region70: #{cnn_encoder_forward.3} parent=67 // pred_check_branch
          %5093 = sbr.rel (%p5091) target = $region72
        $region71: #{cnn_encoder_forward.3} parent=67 // pred_region
          _
        $region72: #{cnn_encoder_forward.3} parent=67 // pred_fallthru
          _
        // Predicated region
        $region73: #{cnn_encoder_forward.3} parent=67 // pred_check
          %p5094 = pneg %p334
        $region74: #{cnn_encoder_forward.3} parent=67 // pred_check_branch
          %5096 = sbr.rel (%p5094) target = $region76
        $region75: #{cnn_encoder_forward.3} parent=67 // pred_region
          _
        $region76: #{cnn_encoder_forward.3} parent=67 // pred_fallthru
          _
        // Predicated region
        $region77: #{cnn_encoder_forward.3} parent=67 // pred_check
          %p5097 = pneg %p360
        $region78: #{cnn_encoder_forward.3} parent=67 // pred_check_branch
          %5099 = sbr.rel (%p5097) target = $region80
        $region79: #{cnn_encoder_forward.3} parent=67 // pred_region
          %s5101 = ssub.s32 256, 256
          %5102 = vsyncadd %s5082, %s5101
          %s5103 = smul.addr %s33, 2
          %s5104 = smul.addr %s5103, 128
          %s5105 = scalar_lea.hbm %s14, %s5104
          %s5106 = sshll.u32 %s5085, 4
          %s5107 = int_to_ptr.vmem [resolvable:$true] %s5106
          %5112 = dma.vmem_to_hbm [thread:$0]  %s5107, 256, %s5105, %s5082, 128, 128, 8
        $region80: #{cnn_encoder_forward.3} parent=67 // pred_fallthru
          _
        // Predicated region
        $region81: #{cnn_encoder_forward.3} parent=67 // pred_check
          %p5113 = pneg %p386
        $region82: #{cnn_encoder_forward.3} parent=67 // pred_check_branch
          %5115 = sbr.rel (%p5113) target = $region84
        $region83: #{cnn_encoder_forward.3} parent=67 // pred_region
          %s5117 = ssub.s32 64, 64
          %5118 = vsyncadd %s5087, %s5117
          %s5119 = smul.addr %s33, 64
          %s5120 = scalar_lea.hbm %s15, %s5119
          %s5122 = sshll.u32 %s5090, 4
          %s5123 = int_to_ptr.vmem [resolvable:$true] %s5122
          %5125 = dma.vmem_to_hbm [thread:$0]  %s5123, 64, %s5120, %s5087
        $region84: #{cnn_encoder_forward.3} parent=67 // pred_fallthru
          _
      $region68: #{cnn_encoder_forward.3} parent=5 // pred_fallthru
        _
      %p5126 = scmp.le.s32.totalorder 2, %s28
      // Predicated region
      $region85: #{cnn_encoder_forward.3} parent=5 // pred_check
        %p5127 = pneg %p5126
      $region86: #{cnn_encoder_forward.3} parent=5 // pred_check_branch
        %5129 = sbr.rel (%p5127) target = $region88
      $region87: #{cnn_encoder_forward.3} parent=5 // pred_region
        %s5130 = ssub.s32 %s28, 2
        // Predicated region
        $region89: #{cnn_encoder_forward.3} parent=87 // pred_check
          %p5131 = pneg %p314
        $region90: #{cnn_encoder_forward.3} parent=87 // pred_check_branch
          %5133 = sbr.rel (%p5131) target = $region92
        $region91: #{cnn_encoder_forward.3} parent=87 // pred_region
          %p5134 = scmp.lt.s32.totalorder %s34, 1
          %s5135 = scalar_select %p5134, %s34, 1
          %s5136 = smul.addr %s5135, 32
          %s5137 = smul.addr %s5136, 8
          %s5138 = scalar_lea.vmem %s12, %s5137
        $region92: #{cnn_encoder_forward.3} parent=87 // pred_fallthru
          _
        // Predicated region
        $region93: #{cnn_encoder_forward.3} parent=87 // pred_check
          %p5139 = pneg %p340
        $region94: #{cnn_encoder_forward.3} parent=87 // pred_check_branch
          %5141 = sbr.rel (%p5139) target = $region96
        $region95: #{cnn_encoder_forward.3} parent=87 // pred_region
          %p5142 = scmp.lt.s32.totalorder %s34, 1
          %s5143 = scalar_select %p5142, %s34, 1
          %s5144 = smul.addr %s5143, 8
          %s5145 = smul.addr %s5144, 8
          %s5146 = scalar_lea.vmem %s13, %s5145
        $region96: #{cnn_encoder_forward.3} parent=87 // pred_fallthru
          _
        // Predicated region
        $region97: #{cnn_encoder_forward.3} parent=87 // pred_check
          %p5147 = pneg %p366
        $region98: #{cnn_encoder_forward.3} parent=87 // pred_check_branch
          %5149 = sbr.rel (%p5147) target = $region100
        $region99: #{cnn_encoder_forward.3} parent=87 // pred_region
          %s5150 = sand.u32 %s351, 1
          %s5151 = scalar_lea.sflag [#allocation3], %s5150
          %s5152 = sand.u32 %s351, 1
          %s5153 = smul.addr %s5152, 16
          %s5154 = scalar_lea.vmem [#allocation2], %s5153
          %5155 = dma.done %s5151, 256
        $region100: #{cnn_encoder_forward.3} parent=87 // pred_fallthru
          _
        // Predicated region
        $region101: #{cnn_encoder_forward.3} parent=87 // pred_check
          %p5156 = pneg %p392
        $region102: #{cnn_encoder_forward.3} parent=87 // pred_check_branch
          %5158 = sbr.rel (%p5156) target = $region104
        $region103: #{cnn_encoder_forward.3} parent=87 // pred_region
          %s5159 = sand.u32 %s377, 1
          %s5160 = scalar_lea.sflag [#allocation5], %s5159
          %s5161 = sand.u32 %s377, 1
          %s5162 = smul.addr %s5161, 4
          %s5163 = scalar_lea.vmem [#allocation4], %s5162
          %5164 = dma.done %s5160, 64
        $region104: #{cnn_encoder_forward.3} parent=87 // pred_fallthru
          _
      $region88: #{cnn_encoder_forward.3} parent=5 // pred_fallthru
        _
    $region6: #{cnn_encoder_forward.3} parent=1 // loop_footer
      %s32 = sadd.s32 1, %s28
    $region7: #{cnn_encoder_forward.3} parent=1 // loop_footer_branch
      %27 = sbr.rel target = $region3
    $region8: #{cnn_encoder_forward.3} parent=1 // loop_exit
      _
    %5165 = vsyncpa [#allocation3], 1
    %s5166 = scalar_lea.sflag [#allocation3], 1
    %5167 = vsyncpa %s5166, 1
    %5168 = vsyncpa [#allocation5], 1
    %s5169 = scalar_lea.sflag [#allocation5], 1
    %5170 = vsyncpa %s5169, 1

</llo_original>
